<compile_context>
chip_gen: v6e
topology: v6e:2x2x1
jax: 0.10.0
libtpu: 0.0.40
codegen_flags: <defaults>
</compile_context>

<pallas_src>
import functools

import jax
import jax.numpy as jnp
from jax import lax
from jax.experimental import pallas as pl
from jax.experimental.pallas import tpu as pltpu


# ---------------------------------------------------------------------------
# Pass A kernel: conv-transpose row tile (9 accumulating MXU dots) + BN stats
# ---------------------------------------------------------------------------
def _convT_stats_kernel(xp_ref, w_ref, y_ref, stats_ref):
    # xp_ref   : (1, H+2, W+2, Cin)    bf16  spatially pre-padded image
    # w_ref    : (3, 3, Cin, Cout)     bf16  conv-equivalent (flipped/swapped) weight
    # y_ref    : (1, Cout, h_tile*W)   bf16  conv output row tile, spatial-minor
    # stats_ref: (1, 2, Cout)          f32   [sum, sumsq] accumulated across tiles
    r = pl.program_id(1)
    _, _, wp2, cin = xp_ref.shape
    w_out = wp2 - 2
    _, cout, rows = y_ref.shape
    h_tile = rows // w_out

    row0 = pl.multiple_of(r * h_tile, h_tile)

    # 9 accumulating K=Cin dots — the (rows, 9*Cin) im2col is never materialized.
    acc = jnp.zeros((rows, cout), jnp.float32)
    for kh in range(3):
        for kw in range(3):
            tap = xp_ref[0, pl.ds(row0 + kh, h_tile), kw:kw + w_out, :]
            acc = acc + jnp.dot(tap.reshape(rows, cin), w_ref[kh, kw],
                                preferred_element_type=jnp.float32)

    # BN partial statistics, accumulated in the resident stats output block.
    @pl.when(r == 0)
    def _():
        stats_ref[...] = jnp.zeros_like(stats_ref)

    s1 = jnp.sum(acc, axis=0, keepdims=True)          # (1, Cout)
    s2 = jnp.sum(acc * acc, axis=0, keepdims=True)    # (1, Cout)
    stats_ref[...] += jnp.concatenate([s1, s2], axis=0).reshape(1, 2, cout)

    # Transpose (XLU, hidden under the MXU) so the flattened spatial dim is the
    # lane-dense minor axis; store bf16 to halve the intermediate's HBM traffic.
    y_ref[...] = acc.T.astype(y_ref.dtype).reshape(1, cout, rows)


# ---------------------------------------------------------------------------
# Pass B kernel: fused BatchNorm affine (y*scale + shift) + ReLU
# ---------------------------------------------------------------------------
def _bn_relu_kernel(y_ref, scale_ref, shift_ref, o_ref):
    # y_ref: (1, Cout, sp_tile) bf16 ; scale/shift: (Cout, 1) f32 ; o_ref: f32
    y = y_ref[...].astype(jnp.float32)
    o_ref[...] = jnp.maximum(y * scale_ref[...] + shift_ref[...], 0.0)


# ---------------------------------------------------------------------------
# Tiling heuristics
# ---------------------------------------------------------------------------
def _pick_h_tile(h, w):
    # Largest divisor of h with h_tile*w <= 1024 (MXU M target), prefer >= 256
    # rows; keep h_tile == h or h_tile*w a multiple of 128 so the flattened
    # spatial output block stays lane-aligned.
    divisors = [d for d in range(1, h + 1) if h % d == 0]
    h_tile = 1
    for d in divisors:
        if d * w <= 1024:
            h_tile = d
    if h_tile * w < 256:
        for d in divisors:
            if d * w >= 256:
                h_tile = d
                break
    if h_tile != h and (h_tile * w) % 128 != 0:
        h_tile = h
    return h_tile


def _pick_sp_tile(hw, cout):
    # Largest divisor of H*W (multiple of 128, or the whole thing) keeping the
    # per-step read+write footprint of pass B at roughly <= 4 MiB.
    budget = 4 * 2**20
    if cout * hw * 6 <= budget or hw % 128 != 0:
        return hw
    best = None
    for d in range(128, hw, 128):
        if hw % d == 0 and cout * d * 6 <= budget:
            best = d
    return best if best is not None else hw


# ---------------------------------------------------------------------------
# Wrapper
# ---------------------------------------------------------------------------
@functools.partial(jax.jit, static_argnames=("eps",))
def norm_act_conv_transpose(x_nchw, wt, bias, gamma, beta, *, eps=1e-5):
    """x_nchw: (N, Cin, H, W); wt: ConvTranspose2d weight (Cin, Cout, 3, 3).

    Returns (N, Cout, H, W) f32, matching
    ConvTranspose2d(k=3, s=1, p=1) -> BatchNorm2d (training) -> ReLU.
    """
    del bias  # exactly cancelled by training-mode BatchNorm mean subtraction
    n, cin, h, w = x_nchw.shape
    cout = wt.shape[1]
    hw = h * w

    h_tile = _pick_h_tile(h, w)
    n_rt = h // h_tile
    rows = h_tile * w
    sp_tile = _pick_sp_tile(hw, cout)

    # ---- layout glue (plain JAX): NHWC, 1-px halo pad, bf16; NO channel pad ----
    xp = jnp.pad(jnp.transpose(x_nchw, (0, 2, 3, 1)),
                 ((0, 0), (1, 1), (1, 1), (0, 0))).astype(jnp.bfloat16)
    # ConvT(k3,s1,p1) == Conv(k3,p1) with spatially flipped, channel-swapped kernel
    wk = jnp.transpose(wt[:, :, ::-1, ::-1], (2, 3, 0, 1)).astype(jnp.bfloat16)

    # ---- VMEM budget / cost hints (un-padded K, bf16 intermediate) -------------
    in_blk = (h + 2) * (w + 2) * cin * 2
    w_blk = 9 * cin * cout * 2
    y_blk = cout * rows * 2
    st_blk = 2 * cout * 4
    tmp = rows * cout * 4 + 2 * rows * cin * 2
    vmem_a = int(min(48 * 2**20,                       # <= 48 MiB (v7x headroom)
                     max(8 * 2**20,
                         4 * (in_blk + w_blk + y_blk + st_blk) + 4 * tmp)))
    flops_a = 2 * n * hw * 9 * cin * cout
    bytes_a = n * (in_blk + cout * hw * 2 + 2 * cout * 4) + 9 * cin * cout * 2

    # ---- pass A: conv + per-image BN partial statistics ------------------------
    y_conv, stats = pl.pallas_call(
        _convT_stats_kernel,
        grid=(n, n_rt),
        in_specs=[
            pl.BlockSpec((1, h + 2, w + 2, cin), lambda i, r: (i, 0, 0, 0)),
            pl.BlockSpec((3, 3, cin, cout), lambda i, r: (0, 0, 0, 0)),
        ],
        out_specs=(
            pl.BlockSpec((1, cout, rows), lambda i, r: (i, 0, r)),
            pl.BlockSpec((1, 2, cout), lambda i, r: (i, 0, 0)),
        ),
        out_shape=(
            jax.ShapeDtypeStruct((n, cout, hw), jnp.bfloat16),
            jax.ShapeDtypeStruct((n, 2, cout), jnp.float32),
        ),
        compiler_params=pltpu.CompilerParams(
            dimension_semantics=("parallel", "arbitrary"),
            vmem_limit_bytes=vmem_a),
        cost_estimate=pl.CostEstimate(
            flops=flops_a, transcendentals=0, bytes_accessed=bytes_a),
    )(xp, wk)

    # ---- tiny cross-batch reduction + BN affine folding (plain JAX) ------------
    count = jnp.float32(n * hw)
    tot = jnp.sum(stats, axis=0)                                  # (2, Cout)
    mean = tot[0] / count
    var = jnp.maximum(tot[1] / count - mean * mean, 0.0)
    inv_std = lax.rsqrt(var + eps)
    g32 = gamma.astype(jnp.float32)
    scale = (g32 * inv_std).reshape(cout, 1)
    shift = (beta.astype(jnp.float32) - mean * g32 * inv_std).reshape(cout, 1)

    # ---- pass B: fused normalize + ReLU, final layout, no channel padding ------
    out_flat = pl.pallas_call(
        _bn_relu_kernel,
        grid=(n, hw // sp_tile),
        in_specs=[
            pl.BlockSpec((1, cout, sp_tile), lambda i, s: (i, 0, s)),
            pl.BlockSpec((cout, 1), lambda i, s: (0, 0)),
            pl.BlockSpec((cout, 1), lambda i, s: (0, 0)),
        ],
        out_specs=pl.BlockSpec((1, cout, sp_tile), lambda i, s: (i, 0, s)),
        out_shape=jax.ShapeDtypeStruct((n, cout, hw), jnp.float32),
        compiler_params=pltpu.CompilerParams(
            dimension_semantics=("parallel", "parallel")),
        cost_estimate=pl.CostEstimate(
            flops=2 * n * cout * hw, transcendentals=0,
            bytes_accessed=n * cout * hw * 6 + 2 * cout * 4),
    )(y_conv, scale, shift)

    # free metadata reshape: (N, Cout, H*W) -> (N, Cout, H, W)  (already NCHW)
    return out_flat.reshape(n, cout, h, w)


# ---------------------------------------------------------------------------
# Independent pure-f32 reference (lax conv, full BN math, includes the bias).
# ---------------------------------------------------------------------------
def _reference(x_nchw, wt, bias, gamma, beta, eps=1e-5):
    cout = wt.shape[1]
    w_conv = jnp.transpose(wt[:, :, ::-1, ::-1], (1, 0, 2, 3))    # OIHW
    y = lax.conv_general_dilated(
        x_nchw, w_conv, window_strides=(1, 1), padding=((1, 1), (1, 1)),
        dimension_numbers=("NCHW", "OIHW", "NCHW"))
    y = y + bias.reshape(1, cout, 1, 1)
    mean = jnp.mean(y, axis=(0, 2, 3), keepdims=True)
    var = jnp.mean((y - mean) ** 2, axis=(0, 2, 3), keepdims=True)
    y = (y - mean) * lax.rsqrt(var + eps)
    y = y * gamma.reshape(1, cout, 1, 1) + beta.reshape(1, cout, 1, 1)
    return jnp.maximum(y, 0.0)


if __name__ == "__main__":
    key = jax.random.PRNGKey(0)
    k_x, k_w, k_b, k_g, k_be = jax.random.split(key, 5)

    N, CIN, COUT, H, W = 2, 4, 8, 16, 16

    x = jax.random.normal(k_x, (N, CIN, H, W), dtype=jnp.float32)
    # ConvTranspose2d weight shape: (in_channels, out_channels, kH, kW)
    wt = 0.1 * jax.random.normal(k_w, (CIN, COUT, 3, 3), dtype=jnp.float32)
    bias = 0.1 * jax.random.normal(k_b, (COUT,), dtype=jnp.float32)
    gamma = 1.0 + 0.1 * jax.random.normal(k_g, (COUT,), dtype=jnp.float32)
    beta = 0.1 * jax.random.normal(k_be, (COUT,), dtype=jnp.float32)

    out = jax.block_until_ready(norm_act_conv_transpose(x, wt, bias, gamma, beta))
    ref = jax.block_until_ready(_reference(x, wt, bias, gamma, beta))

    assert out.shape == (N, COUT, H, W)
    assert out.dtype == jnp.float32
    # Kernel uses bf16 MXU operands and a bf16 intermediate; reference is pure f32.
    max_err = float(jnp.max(jnp.abs(out - ref)))
    assert max_err < 5e-2, max_err

    print("KERNEL_OK")
</pallas_src>

<mosaic_0001>
module attributes {stable_mosaic.version = 11 : i64} {
  func.func @_convT_stats_kernel(%arg0: i32, %arg1: i32, %arg2: memref<1x18x18x4xbf16, #tpu.memory_space<vmem>>, %arg3: memref<3x3x4x8xbf16, #tpu.memory_space<vmem>>, %arg4: memref<1x8x256xbf16, #tpu.memory_space<vmem>>, %arg5: memref<1x2x8xf32, #tpu.memory_space<vmem>>) attributes {dimension_semantics = [#tpu.dimension_semantics<parallel>, #tpu.dimension_semantics<arbitrary>], iteration_bounds = array<i64: 2, 1>, scalar_prefetch = 0 : i64, scratch_operands = 0 : i64, tpu.core_type = #tpu.core_type<tc>, window_params = [{transform_indices = @transform_0, window_bounds = array<i64: 1, 18, 18, 4>}, {pipeline_mode = #tpu.pipeline_mode<synchronous>, transform_indices = @transform_1, window_bounds = array<i64: 3, 3, 4, 8>}, {transform_indices = @transform_2, window_bounds = array<i64: 1, 8, 256>}, {transform_indices = @transform_3, window_bounds = array<i64: 1, 2, 8>}]} {
    %c16_i32 = arith.constant 16 : i32
    %0 = arith.muli %arg1, %c16_i32 : i32
    %1 = tpu.assume_multiple %0, 16 : i32
    %cst = arith.constant 0.000000e+00 : f32
    %2 = vector.broadcast %cst : f32 to vector<256x8xf32>
    %c0_i32 = arith.constant 0 : i32
    %3 = arith.addi %1, %c0_i32 : i32
    %c0 = arith.constant 0 : index
    %4 = arith.index_cast %3 : i32 to index
    %c0_0 = arith.constant 0 : index
    %c0_1 = arith.constant 0 : index
    %5 = vector.load %arg2[%c0, %4, %c0_0, %c0_1] : memref<1x18x18x4xbf16, #tpu.memory_space<vmem>>, vector<1x16x16x4xbf16>
    %6 = vector.shape_cast %5 : vector<1x16x16x4xbf16> to vector<16x16x4xbf16>
    %7 = vector.shape_cast %6 : vector<16x16x4xbf16> to vector<256x4xbf16>
    %c0_2 = arith.constant 0 : index
    %c0_3 = arith.constant 0 : index
    %c0_4 = arith.constant 0 : index
    %c0_5 = arith.constant 0 : index
    %8 = vector.load %arg3[%c0_2, %c0_3, %c0_4, %c0_5] : memref<3x3x4x8xbf16, #tpu.memory_space<vmem>>, vector<1x1x4x8xbf16>
    %9 = vector.shape_cast %8 : vector<1x1x4x8xbf16> to vector<4x8xbf16>
    %cst_6 = arith.constant dense<0.000000e+00> : vector<256x8xf32>
    %10 = tpu.matmul %7, %9, %cst_6 {dimension_numbers = #tpu.dot_dimension_numbers<[1], [0], [0], [1], [0, 0, 1, 1], [], []>} : vector<256x4xbf16>, vector<4x8xbf16>, vector<256x8xf32> -> vector<256x8xf32>
    %11 = arith.addf %2, %10 : vector<256x8xf32>
    %c0_i32_7 = arith.constant 0 : i32
    %12 = arith.addi %1, %c0_i32_7 : i32
    %c0_8 = arith.constant 0 : index
    %13 = arith.index_cast %12 : i32 to index
    %c1 = arith.constant 1 : index
    %c0_9 = arith.constant 0 : index
    %14 = vector.load %arg2[%c0_8, %13, %c1, %c0_9] : memref<1x18x18x4xbf16, #tpu.memory_space<vmem>>, vector<1x16x16x4xbf16>
    %15 = vector.shape_cast %14 : vector<1x16x16x4xbf16> to vector<16x16x4xbf16>
    %16 = vector.shape_cast %15 : vector<16x16x4xbf16> to vector<256x4xbf16>
    %c0_10 = arith.constant 0 : index
    %c1_11 = arith.constant 1 : index
    %c0_12 = arith.constant 0 : index
    %c0_13 = arith.constant 0 : index
    %17 = vector.load %arg3[%c0_10, %c1_11, %c0_12, %c0_13] : memref<3x3x4x8xbf16, #tpu.memory_space<vmem>>, vector<1x1x4x8xbf16>
    %18 = vector.shape_cast %17 : vector<1x1x4x8xbf16> to vector<4x8xbf16>
    %cst_14 = arith.constant dense<0.000000e+00> : vector<256x8xf32>
    %19 = tpu.matmul %16, %18, %cst_14 {dimension_numbers = #tpu.dot_dimension_numbers<[1], [0], [0], [1], [0, 0, 1, 1], [], []>} : vector<256x4xbf16>, vector<4x8xbf16>, vector<256x8xf32> -> vector<256x8xf32>
    %20 = arith.addf %11, %19 : vector<256x8xf32>
    %c0_i32_15 = arith.constant 0 : i32
    %21 = arith.addi %1, %c0_i32_15 : i32
    %c0_16 = arith.constant 0 : index
    %22 = arith.index_cast %21 : i32 to index
    %c2 = arith.constant 2 : index
    %c0_17 = arith.constant 0 : index
    %23 = vector.load %arg2[%c0_16, %22, %c2, %c0_17] : memref<1x18x18x4xbf16, #tpu.memory_space<vmem>>, vector<1x16x16x4xbf16>
    %24 = vector.shape_cast %23 : vector<1x16x16x4xbf16> to vector<16x16x4xbf16>
    %25 = vector.shape_cast %24 : vector<16x16x4xbf16> to vector<256x4xbf16>
    %c0_18 = arith.constant 0 : index
    %c2_19 = arith.constant 2 : index
    %c0_20 = arith.constant 0 : index
    %c0_21 = arith.constant 0 : index
    %26 = vector.load %arg3[%c0_18, %c2_19, %c0_20, %c0_21] : memref<3x3x4x8xbf16, #tpu.memory_space<vmem>>, vector<1x1x4x8xbf16>
    %27 = vector.shape_cast %26 : vector<1x1x4x8xbf16> to vector<4x8xbf16>
    %cst_22 = arith.constant dense<0.000000e+00> : vector<256x8xf32>
    %28 = tpu.matmul %25, %27, %cst_22 {dimension_numbers = #tpu.dot_dimension_numbers<[1], [0], [0], [1], [0, 0, 1, 1], [], []>} : vector<256x4xbf16>, vector<4x8xbf16>, vector<256x8xf32> -> vector<256x8xf32>
    %29 = arith.addf %20, %28 : vector<256x8xf32>
    %c1_i32 = arith.constant 1 : i32
    %30 = arith.addi %1, %c1_i32 : i32
    %c0_23 = arith.constant 0 : index
    %31 = arith.index_cast %30 : i32 to index
    %c0_24 = arith.constant 0 : index
    %c0_25 = arith.constant 0 : index
    %32 = vector.load %arg2[%c0_23, %31, %c0_24, %c0_25] : memref<1x18x18x4xbf16, #tpu.memory_space<vmem>>, vector<1x16x16x4xbf16>
    %33 = vector.shape_cast %32 : vector<1x16x16x4xbf16> to vector<16x16x4xbf16>
    %34 = vector.shape_cast %33 : vector<16x16x4xbf16> to vector<256x4xbf16>
    %c1_26 = arith.constant 1 : index
    %c0_27 = arith.constant 0 : index
    %c0_28 = arith.constant 0 : index
    %c0_29 = arith.constant 0 : index
    %35 = vector.load %arg3[%c1_26, %c0_27, %c0_28, %c0_29] : memref<3x3x4x8xbf16, #tpu.memory_space<vmem>>, vector<1x1x4x8xbf16>
    %36 = vector.shape_cast %35 : vector<1x1x4x8xbf16> to vector<4x8xbf16>
    %cst_30 = arith.constant dense<0.000000e+00> : vector<256x8xf32>
    %37 = tpu.matmul %34, %36, %cst_30 {dimension_numbers = #tpu.dot_dimension_numbers<[1], [0], [0], [1], [0, 0, 1, 1], [], []>} : vector<256x4xbf16>, vector<4x8xbf16>, vector<256x8xf32> -> vector<256x8xf32>
    %38 = arith.addf %29, %37 : vector<256x8xf32>
    %c1_i32_31 = arith.constant 1 : i32
    %39 = arith.addi %1, %c1_i32_31 : i32
    %c0_32 = arith.constant 0 : index
    %40 = arith.index_cast %39 : i32 to index
    %c1_33 = arith.constant 1 : index
    %c0_34 = arith.constant 0 : index
    %41 = vector.load %arg2[%c0_32, %40, %c1_33, %c0_34] : memref<1x18x18x4xbf16, #tpu.memory_space<vmem>>, vector<1x16x16x4xbf16>
    %42 = vector.shape_cast %41 : vector<1x16x16x4xbf16> to vector<16x16x4xbf16>
    %43 = vector.shape_cast %42 : vector<16x16x4xbf16> to vector<256x4xbf16>
    %c1_35 = arith.constant 1 : index
    %c1_36 = arith.constant 1 : index
    %c0_37 = arith.constant 0 : index
    %c0_38 = arith.constant 0 : index
    %44 = vector.load %arg3[%c1_35, %c1_36, %c0_37, %c0_38] : memref<3x3x4x8xbf16, #tpu.memory_space<vmem>>, vector<1x1x4x8xbf16>
    %45 = vector.shape_cast %44 : vector<1x1x4x8xbf16> to vector<4x8xbf16>
    %cst_39 = arith.constant dense<0.000000e+00> : vector<256x8xf32>
    %46 = tpu.matmul %43, %45, %cst_39 {dimension_numbers = #tpu.dot_dimension_numbers<[1], [0], [0], [1], [0, 0, 1, 1], [], []>} : vector<256x4xbf16>, vector<4x8xbf16>, vector<256x8xf32> -> vector<256x8xf32>
    %47 = arith.addf %38, %46 : vector<256x8xf32>
    %c1_i32_40 = arith.constant 1 : i32
    %48 = arith.addi %1, %c1_i32_40 : i32
    %c0_41 = arith.constant 0 : index
    %49 = arith.index_cast %48 : i32 to index
    %c2_42 = arith.constant 2 : index
    %c0_43 = arith.constant 0 : index
    %50 = vector.load %arg2[%c0_41, %49, %c2_42, %c0_43] : memref<1x18x18x4xbf16, #tpu.memory_space<vmem>>, vector<1x16x16x4xbf16>
    %51 = vector.shape_cast %50 : vector<1x16x16x4xbf16> to vector<16x16x4xbf16>
    %52 = vector.shape_cast %51 : vector<16x16x4xbf16> to vector<256x4xbf16>
    %c1_44 = arith.constant 1 : index
    %c2_45 = arith.constant 2 : index
    %c0_46 = arith.constant 0 : index
    %c0_47 = arith.constant 0 : index
    %53 = vector.load %arg3[%c1_44, %c2_45, %c0_46, %c0_47] : memref<3x3x4x8xbf16, #tpu.memory_space<vmem>>, vector<1x1x4x8xbf16>
    %54 = vector.shape_cast %53 : vector<1x1x4x8xbf16> to vector<4x8xbf16>
    %cst_48 = arith.constant dense<0.000000e+00> : vector<256x8xf32>
    %55 = tpu.matmul %52, %54, %cst_48 {dimension_numbers = #tpu.dot_dimension_numbers<[1], [0], [0], [1], [0, 0, 1, 1], [], []>} : vector<256x4xbf16>, vector<4x8xbf16>, vector<256x8xf32> -> vector<256x8xf32>
    %56 = arith.addf %47, %55 : vector<256x8xf32>
    %c2_i32 = arith.constant 2 : i32
    %57 = arith.addi %1, %c2_i32 : i32
    %c0_49 = arith.constant 0 : index
    %58 = arith.index_cast %57 : i32 to index
    %c0_50 = arith.constant 0 : index
    %c0_51 = arith.constant 0 : index
    %59 = vector.load %arg2[%c0_49, %58, %c0_50, %c0_51] : memref<1x18x18x4xbf16, #tpu.memory_space<vmem>>, vector<1x16x16x4xbf16>
    %60 = vector.shape_cast %59 : vector<1x16x16x4xbf16> to vector<16x16x4xbf16>
    %61 = vector.shape_cast %60 : vector<16x16x4xbf16> to vector<256x4xbf16>
    %c2_52 = arith.constant 2 : index
    %c0_53 = arith.constant 0 : index
    %c0_54 = arith.constant 0 : index
    %c0_55 = arith.constant 0 : index
    %62 = vector.load %arg3[%c2_52, %c0_53, %c0_54, %c0_55] : memref<3x3x4x8xbf16, #tpu.memory_space<vmem>>, vector<1x1x4x8xbf16>
    %63 = vector.shape_cast %62 : vector<1x1x4x8xbf16> to vector<4x8xbf16>
    %cst_56 = arith.constant dense<0.000000e+00> : vector<256x8xf32>
    %64 = tpu.matmul %61, %63, %cst_56 {dimension_numbers = #tpu.dot_dimension_numbers<[1], [0], [0], [1], [0, 0, 1, 1], [], []>} : vector<256x4xbf16>, vector<4x8xbf16>, vector<256x8xf32> -> vector<256x8xf32>
    %65 = arith.addf %56, %64 : vector<256x8xf32>
    %c2_i32_57 = arith.constant 2 : i32
    %66 = arith.addi %1, %c2_i32_57 : i32
    %c0_58 = arith.constant 0 : index
    %67 = arith.index_cast %66 : i32 to index
    %c1_59 = arith.constant 1 : index
    %c0_60 = arith.constant 0 : index
    %68 = vector.load %arg2[%c0_58, %67, %c1_59, %c0_60] : memref<1x18x18x4xbf16, #tpu.memory_space<vmem>>, vector<1x16x16x4xbf16>
    %69 = vector.shape_cast %68 : vector<1x16x16x4xbf16> to vector<16x16x4xbf16>
    %70 = vector.shape_cast %69 : vector<16x16x4xbf16> to vector<256x4xbf16>
    %c2_61 = arith.constant 2 : index
    %c1_62 = arith.constant 1 : index
    %c0_63 = arith.constant 0 : index
    %c0_64 = arith.constant 0 : index
    %71 = vector.load %arg3[%c2_61, %c1_62, %c0_63, %c0_64] : memref<3x3x4x8xbf16, #tpu.memory_space<vmem>>, vector<1x1x4x8xbf16>
    %72 = vector.shape_cast %71 : vector<1x1x4x8xbf16> to vector<4x8xbf16>
    %cst_65 = arith.constant dense<0.000000e+00> : vector<256x8xf32>
    %73 = tpu.matmul %70, %72, %cst_65 {dimension_numbers = #tpu.dot_dimension_numbers<[1], [0], [0], [1], [0, 0, 1, 1], [], []>} : vector<256x4xbf16>, vector<4x8xbf16>, vector<256x8xf32> -> vector<256x8xf32>
    %74 = arith.addf %65, %73 : vector<256x8xf32>
    %c2_i32_66 = arith.constant 2 : i32
    %75 = arith.addi %1, %c2_i32_66 : i32
    %c0_67 = arith.constant 0 : index
    %76 = arith.index_cast %75 : i32 to index
    %c2_68 = arith.constant 2 : index
    %c0_69 = arith.constant 0 : index
    %77 = vector.load %arg2[%c0_67, %76, %c2_68, %c0_69] : memref<1x18x18x4xbf16, #tpu.memory_space<vmem>>, vector<1x16x16x4xbf16>
    %78 = vector.shape_cast %77 : vector<1x16x16x4xbf16> to vector<16x16x4xbf16>
    %79 = vector.shape_cast %78 : vector<16x16x4xbf16> to vector<256x4xbf16>
    %c2_70 = arith.constant 2 : index
    %c2_71 = arith.constant 2 : index
    %c0_72 = arith.constant 0 : index
    %c0_73 = arith.constant 0 : index
    %80 = vector.load %arg3[%c2_70, %c2_71, %c0_72, %c0_73] : memref<3x3x4x8xbf16, #tpu.memory_space<vmem>>, vector<1x1x4x8xbf16>
    %81 = vector.shape_cast %80 : vector<1x1x4x8xbf16> to vector<4x8xbf16>
    %cst_74 = arith.constant dense<0.000000e+00> : vector<256x8xf32>
    %82 = tpu.matmul %79, %81, %cst_74 {dimension_numbers = #tpu.dot_dimension_numbers<[1], [0], [0], [1], [0, 0, 1, 1], [], []>} : vector<256x4xbf16>, vector<4x8xbf16>, vector<256x8xf32> -> vector<256x8xf32>
    %83 = arith.addf %74, %82 : vector<256x8xf32>
    %c0_i32_75 = arith.constant 0 : i32
    %84 = arith.cmpi eq, %arg1, %c0_i32_75 : i32
    %85 = arith.extui %84 : i1 to i32
    %c0_i32_76 = arith.constant 0 : i32
    %86 = arith.cmpi ne, %85, %c0_i32_76 : i32
    scf.if %86 {
      %cst_88 = arith.constant 0.000000e+00 : f32
      %101 = vector.broadcast %cst_88 : f32 to vector<1x2x8xf32>
      %c0_89 = arith.constant 0 : index
      %c0_90 = arith.constant 0 : index
      %c0_91 = arith.constant 0 : index
      %102 = vector.load %arg5[%c0_89, %c0_90, %c0_91] : memref<1x2x8xf32, #tpu.memory_space<vmem>>, vector<1x2x8xf32>
      tpu.vector_store %arg5[%c0_89, %c0_90, %c0_91], %101 {strides = array<i32>} : memref<1x2x8xf32, #tpu.memory_space<vmem>>, vector<1x2x8xf32>,
    } else {
    }
    %cst_77 = arith.constant dense<0.000000e+00> : vector<8xf32>
    %87 = vector.multi_reduction <add>, %83, %cst_77 [0] : vector<256x8xf32> to vector<8xf32>
    %88 = vector.shape_cast %87 : vector<8xf32> to vector<1x8xf32>
    %89 = arith.mulf %83, %83 : vector<256x8xf32>
    %cst_78 = arith.constant dense<0.000000e+00> : vector<8xf32>
    %90 = vector.multi_reduction <add>, %89, %cst_78 [0] : vector<256x8xf32> to vector<8xf32>
    %91 = vector.shape_cast %90 : vector<8xf32> to vector<1x8xf32>
    %c0_79 = arith.constant 0 : index
    %c0_80 = arith.constant 0 : index
    %c0_81 = arith.constant 0 : index
    %92 = vector.load %arg5[%c0_79, %c0_80, %c0_81] : memref<1x2x8xf32, #tpu.memory_space<vmem>>, vector<1x2x8xf32>
    %93 = tpu.concatenate %88, %91 in 0 : vector<1x8xf32>, vector<1x8xf32> -> vector<2x8xf32>
    %94 = vector.shape_cast %93 : vector<2x8xf32> to vector<1x2x8xf32>
    %95 = arith.addf %92, %94 : vector<1x2x8xf32>
    %c0_82 = arith.constant 0 : index
    %c0_83 = arith.constant 0 : index
    %c0_84 = arith.constant 0 : index
    %96 = vector.load %arg5[%c0_82, %c0_83, %c0_84] : memref<1x2x8xf32, #tpu.memory_space<vmem>>, vector<1x2x8xf32>
    tpu.vector_store %arg5[%c0_82, %c0_83, %c0_84], %95 {strides = array<i32>} : memref<1x2x8xf32, #tpu.memory_space<vmem>>, vector<1x2x8xf32>,
    %97 = tpu.transpose %83, [1, 0] : vector<256x8xf32> -> vector<8x256xf32>
    %98 = arith.truncf %97 : vector<8x256xf32> to vector<8x256xbf16>
    %99 = vector.shape_cast %98 : vector<8x256xbf16> to vector<1x8x256xbf16>
    %c0_85 = arith.constant 0 : index
    %c0_86 = arith.constant 0 : index
    %c0_87 = arith.constant 0 : index
    %100 = vector.load %arg4[%c0_85, %c0_86, %c0_87] : memref<1x8x256xbf16, #tpu.memory_space<vmem>>, vector<1x8x256xbf16>
    tpu.vector_store %arg4[%c0_85, %c0_86, %c0_87], %99 {strides = array<i32>} : memref<1x8x256xbf16, #tpu.memory_space<vmem>>, vector<1x8x256xbf16>,
    return
  }
  func.func @transform_0(%arg0: i32, %arg1: i32) -> (i32, i32, i32, i32) {
    %c0_i32 = arith.constant 0 : i32
    %c0_i32_0 = arith.constant 0 : i32
    %c0_i32_1 = arith.constant 0 : i32
    %c0_i32_2 = arith.constant 0 : i32
    return %arg0, %c0_i32, %c0_i32_0, %c0_i32_1 : i32, i32, i32, i32
  }
  func.func @transform_1(%arg0: i32, %arg1: i32) -> (i32, i32, i32, i32) {
    %c0_i32 = arith.constant 0 : i32
    %c0_i32_0 = arith.constant 0 : i32
    %c0_i32_1 = arith.constant 0 : i32
    %c0_i32_2 = arith.constant 0 : i32
    %c0_i32_3 = arith.constant 0 : i32
    return %c0_i32, %c0_i32_0, %c0_i32_1, %c0_i32_2 : i32, i32, i32, i32
  }
  func.func @transform_2(%arg0: i32, %arg1: i32) -> (i32, i32, i32) {
    %c0_i32 = arith.constant 0 : i32
    %c0_i32_0 = arith.constant 0 : i32
    return %arg0, %c0_i32, %arg1 : i32, i32, i32
  }
  func.func @transform_3(%arg0: i32, %arg1: i32) -> (i32, i32, i32) {
    %c0_i32 = arith.constant 0 : i32
    %c0_i32_0 = arith.constant 0 : i32
    %c0_i32_1 = arith.constant 0 : i32
    return %arg0, %c0_i32, %c0_i32_0 : i32, i32, i32
  }
}

module attributes {stable_mosaic.version = 11 : i64} {
  func.func @_bn_relu_kernel(%arg0: i32, %arg1: i32, %arg2: memref<1x8x256xbf16, #tpu.memory_space<vmem>>, %arg3: memref<8x1xf32, #tpu.memory_space<vmem>>, %arg4: memref<8x1xf32, #tpu.memory_space<vmem>>, %arg5: memref<1x8x256xf32, #tpu.memory_space<vmem>>) attributes {dimension_semantics = [#tpu.dimension_semantics<parallel>, #tpu.dimension_semantics<parallel>], iteration_bounds = array<i64: 2, 1>, scalar_prefetch = 0 : i64, scratch_operands = 0 : i64, tpu.core_type = #tpu.core_type<tc>, window_params = [{transform_indices = @transform_0, window_bounds = array<i64: 1, 8, 256>}, {pipeline_mode = #tpu.pipeline_mode<synchronous>, transform_indices = @transform_1, window_bounds = array<i64: 8, 1>}, {pipeline_mode = #tpu.pipeline_mode<synchronous>, transform_indices = @transform_2, window_bounds = array<i64: 8, 1>}, {transform_indices = @transform_3, window_bounds = array<i64: 1, 8, 256>}]} {
    %c0 = arith.constant 0 : index
    %c0_0 = arith.constant 0 : index
    %c0_1 = arith.constant 0 : index
    %0 = vector.load %arg2[%c0, %c0_0, %c0_1] : memref<1x8x256xbf16, #tpu.memory_space<vmem>>, vector<1x8x256xbf16>
    %1 = arith.extf %0 : vector<1x8x256xbf16> to vector<1x8x256xf32>
    %c0_2 = arith.constant 0 : index
    %c0_3 = arith.constant 0 : index
    %2 = vector.load %arg3[%c0_2, %c0_3] : memref<8x1xf32, #tpu.memory_space<vmem>>, vector<8x1xf32>
    %3 = vector.shape_cast %2 : vector<8x1xf32> to vector<1x8x1xf32>
    %4 = vector.broadcast %3 : vector<1x8x1xf32> to vector<1x8x256xf32>
    %5 = arith.mulf %1, %4 : vector<1x8x256xf32>
    %c0_4 = arith.constant 0 : index
    %c0_5 = arith.constant 0 : index
    %6 = vector.load %arg4[%c0_4, %c0_5] : memref<8x1xf32, #tpu.memory_space<vmem>>, vector<8x1xf32>
    %7 = vector.shape_cast %6 : vector<8x1xf32> to vector<1x8x1xf32>
    %8 = vector.broadcast %7 : vector<1x8x1xf32> to vector<1x8x256xf32>
    %9 = arith.addf %5, %8 : vector<1x8x256xf32>
    %cst = arith.constant 0.000000e+00 : f32
    %10 = vector.broadcast %cst : f32 to vector<1x8x256xf32>
    %11 = arith.maximumf %9, %10 : vector<1x8x256xf32>
    %c0_6 = arith.constant 0 : index
    %c0_7 = arith.constant 0 : index
    %c0_8 = arith.constant 0 : index
    %12 = vector.load %arg5[%c0_6, %c0_7, %c0_8] : memref<1x8x256xf32, #tpu.memory_space<vmem>>, vector<1x8x256xf32>
    tpu.vector_store %arg5[%c0_6, %c0_7, %c0_8], %11 {strides = array<i32>} : memref<1x8x256xf32, #tpu.memory_space<vmem>>, vector<1x8x256xf32>,
    return
  }
  func.func @transform_0(%arg0: i32, %arg1: i32) -> (i32, i32, i32) {
    %c0_i32 = arith.constant 0 : i32
    %c0_i32_0 = arith.constant 0 : i32
    return %arg0, %c0_i32, %arg1 : i32, i32, i32
  }
  func.func @transform_1(%arg0: i32, %arg1: i32) -> (i32, i32) {
    %c0_i32 = arith.constant 0 : i32
    %c0_i32_0 = arith.constant 0 : i32
    %c0_i32_1 = arith.constant 0 : i32
    return %c0_i32, %c0_i32_0 : i32, i32
  }
  func.func @transform_2(%arg0: i32, %arg1: i32) -> (i32, i32) {
    %c0_i32 = arith.constant 0 : i32
    %c0_i32_0 = arith.constant 0 : i32
    %c0_i32_1 = arith.constant 0 : i32
    return %c0_i32, %c0_i32_0 : i32, i32
  }
  func.func @transform_3(%arg0: i32, %arg1: i32) -> (i32, i32, i32) {
    %c0_i32 = arith.constant 0 : i32
    %c0_i32_0 = arith.constant 0 : i32
    return %arg0, %c0_i32, %arg1 : i32, i32, i32
  }
}

</mosaic_0001>

<llo_original>
// kernel: norm_act_conv_transpose.3
$region0: #{norm_act_conv_transpose.3}
  #allocation0 [shape = 'u32[]', space=smem, size = 0x4, offset = 0x4, fixed_abs, tag = 'smem constant byte address 0x4 - core index']
  #allocation1 [shape = 'u32[144,128]{1,0:T(1,128)}', space=vmem, size = 0x12000, scoped, tag = 'internal scratch']
  %s0 = inlined_call_operand.vmem [shape: bf16[2,8,256], index: 0, kind: input, shape index: {}]
  %s1 = inlined_call_operand.vmem [shape: f32[8,1], index: 1, kind: input, shape index: {}]
  %s2 = inlined_call_operand.vmem [shape: f32[8,1], index: 2, kind: input, shape index: {}]
  %s3 = inlined_call_operand.vmem [shape: f32[2,8,256], index: 3, kind: output, shape index: {}]
  %s4 = sld [smem:[#allocation0]]
  $region45: #{norm_act_conv_transpose.3} parent=0
    _
  %s6 = ssub.s32 1, %s4
  %s7 = scalar_select 0, %s6, %s4
  loop: start=0, step=1, limit=4
  $region2: #{norm_act_conv_transpose.3} parent=0 // loop_pre_header
    _
  $region3: #{norm_act_conv_transpose.3} parent=0 // loop_header
    %s9 = sphi 0, %s13
    %p10 = scmp.ge.s32.totalorder %s9, 4
    %s16 = sphi 0, %s28
    %s17 = sphi 0, %s24
    %s18 = sphi 0, %s16
    %s19 = sphi 0, %s17
    %s20 = sphi 0, %s18
    %s21 = sphi 0, %s19
    %s33 = sphi 0, %s35
    %s36 = sphi 0, %s33
    %s37 = sphi 0, %s36
    %s53 = sphi 0, %s37
    %s57 = sphi 0, %s57
    %s59 = sphi 0, %s57
    %s60 = sphi 0, %s59
    %s74 = sphi 0, %s60
    %s78 = sphi 0, %s78
    %s80 = sphi 0, %s78
    %s81 = sphi 0, %s80
    %s95 = sphi 0, %s81
    %s103 = sphi 0, %s105
    %s106 = sphi 0, %s103
    %s107 = sphi 0, %s106
    %s123 = sphi 0, %s107
  $region4: #{norm_act_conv_transpose.3} parent=0 // loop_header_branch
    %12 = sbr.rel (%p10) target = $region8
  $region5: #{norm_act_conv_transpose.3} parent=0 // loop_body
    %s14 = ssub.s32 %s9, 1
    %s15 = ssub.s32 %s9, 2
    %s22 = sadd.s32 1, %s17
    %p23 = scmp.ge.s32.totalorder %s22, 1
    %s24 = scalar_select %p23, 0, %s22
    %s25 = sadd.s32 1, %s16
    %s26 = scalar_select %p23, %s25, %s16
    %p27 = scmp.ge.s32.totalorder %s26, 2
    %s28 = scalar_select %p27, 0, %s26
    %s29 = ssub.s32 %s16, %s28
    %s30 = ssub.s32 %s17, %s24
    %s31 = sor.u32 %s29, %s30
    %p32 = scmp.eq.s32.totalorder %s31, 0
    %s34 = sadd.s32 %s33, 1
    %s35 = scalar_select %p32, %s33, %s34
    %p38 = pneg %p32
    %p39 = scmp.eq.s32.totalorder %s9, 1
    %p40 = por %p38, %p39
    %p41 = scmp.ne.s32.totalorder %s33, %s36
    %p42 = scmp.eq.s32.totalorder %s9, 0
    %p43 = por %p41, %p42
    %p44 = scmp.ne.s32.totalorder %s33, %s36
    %p45 = scmp.eq.s32.totalorder %s14, 1
    %p46 = por %p44, %p45
    %p47 = scmp.ne.s32.totalorder %s36, %s37
    %p48 = scmp.eq.s32.totalorder %s14, 0
    %p49 = por %p47, %p48
    %p50 = scmp.ne.s32.totalorder %s36, %s37
    %p51 = scmp.eq.s32.totalorder %s15, 1
    %p52 = por %p50, %p51
    %p54 = scmp.ne.s32.totalorder %s37, %s53
    %p55 = scmp.eq.s32.totalorder %s15, 0
    %p56 = por %p54, %p55
    %s58 = sadd.s32 %s57, 1
    %p61 = scmp.eq.s32.totalorder %s9, 1
    %p62 = scmp.ne.s32.totalorder %s57, %s59
    %p63 = scmp.eq.s32.totalorder %s9, 0
    %p64 = por %p62, %p63
    %p65 = scmp.ne.s32.totalorder %s57, %s59
    %p66 = scmp.eq.s32.totalorder %s14, 1
    %p67 = por %p65, %p66
    %p68 = scmp.ne.s32.totalorder %s59, %s60
    %p69 = scmp.eq.s32.totalorder %s14, 0
    %p70 = por %p68, %p69
    %p71 = scmp.ne.s32.totalorder %s59, %s60
    %p72 = scmp.eq.s32.totalorder %s15, 1
    %p73 = por %p71, %p72
    %p75 = scmp.ne.s32.totalorder %s60, %s74
    %p76 = scmp.eq.s32.totalorder %s15, 0
    %p77 = por %p75, %p76
    %s79 = sadd.s32 %s78, 1
    %p82 = scmp.eq.s32.totalorder %s9, 1
    %p83 = scmp.ne.s32.totalorder %s78, %s80
    %p84 = scmp.eq.s32.totalorder %s9, 0
    %p85 = por %p83, %p84
    %p86 = scmp.ne.s32.totalorder %s78, %s80
    %p87 = scmp.eq.s32.totalorder %s14, 1
    %p88 = por %p86, %p87
    %p89 = scmp.ne.s32.totalorder %s80, %s81
    %p90 = scmp.eq.s32.totalorder %s14, 0
    %p91 = por %p89, %p90
    %p92 = scmp.ne.s32.totalorder %s80, %s81
    %p93 = scmp.eq.s32.totalorder %s15, 1
    %p94 = por %p92, %p93
    %p96 = scmp.ne.s32.totalorder %s81, %s95
    %p97 = scmp.eq.s32.totalorder %s15, 0
    %p98 = por %p96, %p97
    %s99 = ssub.s32 %s16, %s28
    %s100 = ssub.s32 %s17, %s24
    %s101 = sor.u32 %s99, %s100
    %p102 = scmp.eq.s32.totalorder %s101, 0
    %s104 = sadd.s32 %s103, 1
    %s105 = scalar_select %p102, %s103, %s104
    %p108 = pneg %p102
    %p109 = scmp.eq.s32.totalorder %s9, 1
    %p110 = por %p108, %p109
    %p111 = scmp.ne.s32.totalorder %s103, %s106
    %p112 = scmp.eq.s32.totalorder %s9, 0
    %p113 = por %p111, %p112
    %p114 = scmp.ne.s32.totalorder %s103, %s106
    %p115 = scmp.eq.s32.totalorder %s14, 1
    %p116 = por %p114, %p115
    %p117 = scmp.ne.s32.totalorder %s106, %s107
    %p118 = scmp.eq.s32.totalorder %s14, 0
    %p119 = por %p117, %p118
    %p120 = scmp.ne.s32.totalorder %s106, %s107
    %p121 = scmp.eq.s32.totalorder %s15, 1
    %p122 = por %p120, %p121
    %p124 = scmp.ne.s32.totalorder %s107, %s123
    %p125 = scmp.eq.s32.totalorder %s15, 0
    %p126 = por %p124, %p125
    %p127 = scmp.le.s32.totalorder 1, %s9
    %p128 = scmp.lt.s32.totalorder %s9, 3
    %p129 = pnand %p127, %p128
    %p130 = pneg %p129
    // Predicated region
    $region9: #{norm_act_conv_transpose.3} parent=5 // pred_check
      _
    $region10: #{norm_act_conv_transpose.3} parent=5 // pred_check_branch
      %132 = sbr.rel (%p129) target = $region12
    $region11: #{norm_act_conv_transpose.3} parent=5 // pred_region
      %s133 = ssub.s32 %s9, 1
      // Predicated region
      $region13: #{norm_act_conv_transpose.3} parent=11 // pred_check
        %p134 = pneg %p70
      $region14: #{norm_act_conv_transpose.3} parent=11 // pred_check_branch
        %136 = sbr.rel (%p134) target = $region16
      $region15: #{norm_act_conv_transpose.3} parent=11 // pred_region
        _
      $region16: #{norm_act_conv_transpose.3} parent=11 // pred_fallthru
        _
      // Predicated region
      $region17: #{norm_act_conv_transpose.3} parent=11 // pred_check
        %p137 = pneg %p91
      $region18: #{norm_act_conv_transpose.3} parent=11 // pred_check_branch
        %139 = sbr.rel (%p137) target = $region20
      $region19: #{norm_act_conv_transpose.3} parent=11 // pred_region
        _
      $region20: #{norm_act_conv_transpose.3} parent=11 // pred_fallthru
        _
    $region12: #{norm_act_conv_transpose.3} parent=5 // pred_fallthru
      _
    %p140 = scmp.lt.s32.totalorder %s9, 2
    // Predicated region
    $region21: #{norm_act_conv_transpose.3} parent=5 // pred_check
      %p141 = pneg %p140
    $region22: #{norm_act_conv_transpose.3} parent=5 // pred_check_branch
      %143 = sbr.rel (%p141) target = $region24
    $region23: #{norm_act_conv_transpose.3} parent=5 // pred_region
      // Predicated region
      $region25: #{norm_act_conv_transpose.3} parent=23 // pred_check
        %p144 = pneg %p43
      $region26: #{norm_act_conv_transpose.3} parent=23 // pred_check_branch
        %146 = sbr.rel (%p144) target = $region28
      $region27: #{norm_act_conv_transpose.3} parent=23 // pred_region
        %s147 = smul.u32 2, %s17
        %p148 = scmp.lt.s32.totalorder %s16, 1
        %s149 = scalar_select %p148, %s16, 1
        %p150 = scmp.lt.s32.totalorder %s147, 1
        %s151 = scalar_select %p150, %s147, 1
        %s152 = smul.addr %s149, 2
        %s153 = sadd.s32 %s151, %s152
        %s154 = smul.addr %s153, 4
        %s155 = scalar_lea.vmem %s0, %s154
        %s156 = smul.u32 2, %s17
      $region28: #{norm_act_conv_transpose.3} parent=23 // pred_fallthru
        _
    $region24: #{norm_act_conv_transpose.3} parent=5 // pred_fallthru
      _
    %p157 = scmp.le.s32.totalorder 1, %s9
    %p158 = scmp.lt.s32.totalorder %s9, 3
    %p159 = pnand %p157, %p158
    %p160 = pneg %p159
    // Predicated region
    $region29: #{norm_act_conv_transpose.3} parent=5 // pred_check
      _
    $region30: #{norm_act_conv_transpose.3} parent=5 // pred_check_branch
      %162 = sbr.rel (%p159) target = $region32
    $region31: #{norm_act_conv_transpose.3} parent=5 // pred_region
      %s163 = ssub.s32 %s9, 1
      %s164 = smul.u32 2, %s19
      %p165 = scmp.lt.s32.totalorder %s18, 1
      %s166 = scalar_select %p165, %s18, 1
      %p167 = scmp.lt.s32.totalorder %s164, 1
      %s168 = scalar_select %p167, %s164, 1
      %s169 = smul.addr %s166, 2
      %s170 = sadd.s32 %s168, %s169
      %s171 = smul.addr %s170, 4
      %s172 = scalar_lea.vmem %s0, %s171
      %p173 = pneg %p49
      %p174 = pneg %p46
      %p175 = pneg %p70
      %p176 = pneg %p67
      %p177 = pneg %p91
      %p178 = pneg %p88
      %p179 = pneg %p119
      %p180 = pneg %p116
      %s181 = smul.u32 2, %s19
      %p182 = scmp.lt.s32.totalorder %s18, 1
      %s183 = scalar_select %p182, %s18, 1
      %p184 = scmp.lt.s32.totalorder %s181, 1
      %s185 = scalar_select %p184, %s181, 1
      %s186 = smul.addr %s183, 2
      %s187 = sadd.s32 %s185, %s186
      %s188 = smul.addr %s187, 8
      %s189 = scalar_lea.vmem %s3, %s188
      %s190 = smul.u32 2, %s19
      %p191 = scmp.lt.s32.totalorder %s18, 1
      %s192 = scalar_select %p191, %s18, 1
      %p193 = scmp.lt.s32.totalorder %s190, 1
      %s194 = scalar_select %p193, %s190, 1
      %s195 = smul.addr %s192, 2
      %s196 = sadd.s32 %s194, %s195
      %s197 = smul.addr %s196, 4
      %s198 = scalar_lea.vmem %s0, %s197
      %s199 = smul.u32 2, %s19
      %s200 = smul.u32 2, %s19
      %p201 = scmp.lt.s32.totalorder %s18, 1
      %s202 = scalar_select %p201, %s18, 1
      %p203 = scmp.lt.s32.totalorder %s200, 1
      %s204 = scalar_select %p203, %s200, 1
      %s205 = smul.addr %s202, 2
      %s206 = sadd.s32 %s204, %s205
      %s207 = smul.addr %s206, 8
      %s208 = scalar_lea.vmem %s3, %s207
      %s209 = smul.u32 2, %s19
      %v210 = vld [vmem:[%s198] sm:$0xff]
      %v211 = vunpack.c.l.bf16 %v210
      %v212 = vunpack.c.h.bf16 %v210
      %v213 = vld [vmem:[%s1] sm:$0xff]
      %215 = vset.pattern.permute.xlu0 0
      %216 = vperm.xlu0 %215, %v213
      %v217 = vpop.permute.xlu0 %216
      %v219 = vmul.f32 %v211, %v217
      %v220 = vmul.f32 %v212, %v217
      %v221 = vld [vmem:[%s2] sm:$0xff]
      %223 = vset.pattern.permute.xlu0 0
      %224 = vperm.xlu0 %223, %v221
      %v225 = vpop.permute.xlu0 %224
      %v227 = vadd.f32 %v219, %v225
      %v228 = vadd.f32 %v220, %v225
      %v229 = vmax.f32 %v227, 0.0
      %v230 = vmax.f32 %v228, 0.0
      %231 = vst [vmem:[%s208] sm:$0xff] %v229
      %232 = vst [vmem:[%s208 + $0x8] sm:$0xff] %v230
      %s233 = smul.u32 2, %s19
      %p234 = scmp.lt.s32.totalorder %s18, 1
      %s235 = scalar_select %p234, %s18, 1
      %p236 = scmp.lt.s32.totalorder %s233, 1
      %s237 = scalar_select %p236, %s233, 1
      %s238 = smul.addr %s235, 2
      %s239 = sadd.s32 %s237, %s238
      %s240 = smul.addr %s239, 8
      %s241 = scalar_lea.vmem %s3, %s240
      // Predicated region
      $region33: #{norm_act_conv_transpose.3} parent=31 // pred_check
        %p242 = pneg %p116
      $region34: #{norm_act_conv_transpose.3} parent=31 // pred_check_branch
        %244 = sbr.rel (%p242) target = $region36
      $region35: #{norm_act_conv_transpose.3} parent=31 // pred_region
        %s245 = smul.u32 2, %s19
      $region36: #{norm_act_conv_transpose.3} parent=31 // pred_fallthru
        _
    $region32: #{norm_act_conv_transpose.3} parent=5 // pred_fallthru
      _
    %p246 = scmp.le.s32.totalorder 2, %s9
    // Predicated region
    $region37: #{norm_act_conv_transpose.3} parent=5 // pred_check
      %p247 = pneg %p246
    $region38: #{norm_act_conv_transpose.3} parent=5 // pred_check_branch
      %249 = sbr.rel (%p247) target = $region40
    $region39: #{norm_act_conv_transpose.3} parent=5 // pred_region
      %s250 = ssub.s32 %s9, 2
      // Predicated region
      $region41: #{norm_act_conv_transpose.3} parent=39 // pred_check
        %p251 = pneg %p122
      $region42: #{norm_act_conv_transpose.3} parent=39 // pred_check_branch
        %253 = sbr.rel (%p251) target = $region44
      $region43: #{norm_act_conv_transpose.3} parent=39 // pred_region
        %s254 = smul.u32 2, %s21
        %p255 = scmp.lt.s32.totalorder %s20, 1
        %s256 = scalar_select %p255, %s20, 1
        %p257 = scmp.lt.s32.totalorder %s254, 1
        %s258 = scalar_select %p257, %s254, 1
        %s259 = smul.addr %s256, 2
        %s260 = sadd.s32 %s258, %s259
        %s261 = smul.addr %s260, 8
        %s262 = scalar_lea.vmem %s3, %s261
      $region44: #{norm_act_conv_transpose.3} parent=39 // pred_fallthru
        _
    $region40: #{norm_act_conv_transpose.3} parent=5 // pred_fallthru
      _
  $region6: #{norm_act_conv_transpose.3} parent=0 // loop_footer
    %s13 = sadd.s32 1, %s9
  $region7: #{norm_act_conv_transpose.3} parent=0 // loop_footer_branch
    %8 = sbr.rel target = $region3
  $region8: #{norm_act_conv_transpose.3} parent=0 // loop_exit
    _

// kernel: norm_act_conv_transpose.2
$region0: #{norm_act_conv_transpose.2}
  #allocation0 [shape = 'u32[]', space=smem, size = 0x4, offset = 0x4, fixed_abs, tag = 'smem constant byte address 0x4 - core index']
  #allocation1 [shape = 'u32[144,128]{1,0:T(1,128)}', space=vmem, size = 0x12000, scoped, tag = 'internal scratch']
  %s0 = inlined_call_operand.vmem [shape: bf16[2,18,18,4], index: 0, kind: input, shape index: {}]
  %s1 = inlined_call_operand.vmem [shape: bf16[3,3,4,8], index: 1, kind: input, shape index: {}]
  %s2 = inlined_call_operand.vmem [shape: bf16[2,8,256], index: 2, kind: output, shape index: {0}]
  %s3 = inlined_call_operand.vmem [shape: f32[2,2,8], index: 3, kind: output, shape index: {1}]
  %4 = xla_tuple %s2, %s3
  %s5 = sld [smem:[#allocation0]]
  $region53: #{norm_act_conv_transpose.2} parent=0
    _
  %s7 = ssub.s32 1, %s5
  %s8 = scalar_select 0, %s7, %s5
  loop: start=0, step=1, limit=4
  $region2: #{norm_act_conv_transpose.2} parent=0 // loop_pre_header
    _
  $region3: #{norm_act_conv_transpose.2} parent=0 // loop_header
    %s10 = sphi 0, %s14
    %p11 = scmp.ge.s32.totalorder %s10, 4
    %s17 = sphi 0, %s29
    %s18 = sphi 0, %s25
    %s19 = sphi 0, %s17
    %s20 = sphi 0, %s18
    %s21 = sphi 0, %s19
    %s22 = sphi 0, %s20
    %s32 = sphi 0, %s34
    %s35 = sphi 0, %s32
    %s36 = sphi 0, %s35
    %s52 = sphi 0, %s36
    %s56 = sphi 0, %s56
    %s58 = sphi 0, %s56
    %s59 = sphi 0, %s58
    %s73 = sphi 0, %s59
    %s81 = sphi 0, %s83
    %s84 = sphi 0, %s81
    %s85 = sphi 0, %s84
    %s101 = sphi 0, %s85
    %s107 = sphi 0, %s109
    %s110 = sphi 0, %s107
    %s111 = sphi 0, %s110
    %s127 = sphi 0, %s111
  $region4: #{norm_act_conv_transpose.2} parent=0 // loop_header_branch
    %13 = sbr.rel (%p11) target = $region8
  $region5: #{norm_act_conv_transpose.2} parent=0 // loop_body
    %s15 = ssub.s32 %s10, 1
    %s16 = ssub.s32 %s10, 2
    %s23 = sadd.s32 1, %s18
    %p24 = scmp.ge.s32.totalorder %s23, 1
    %s25 = scalar_select %p24, 0, %s23
    %s26 = sadd.s32 1, %s17
    %s27 = scalar_select %p24, %s26, %s17
    %p28 = scmp.ge.s32.totalorder %s27, 2
    %s29 = scalar_select %p28, 0, %s27
    %s30 = ssub.s32 %s17, %s29
    %p31 = scmp.eq.s32.totalorder %s30, 0
    %s33 = sadd.s32 %s32, 1
    %s34 = scalar_select %p31, %s32, %s33
    %p37 = pneg %p31
    %p38 = scmp.eq.s32.totalorder %s10, 1
    %p39 = por %p37, %p38
    %p40 = scmp.ne.s32.totalorder %s32, %s35
    %p41 = scmp.eq.s32.totalorder %s10, 0
    %p42 = por %p40, %p41
    %p43 = scmp.ne.s32.totalorder %s32, %s35
    %p44 = scmp.eq.s32.totalorder %s15, 1
    %p45 = por %p43, %p44
    %p46 = scmp.ne.s32.totalorder %s35, %s36
    %p47 = scmp.eq.s32.totalorder %s15, 0
    %p48 = por %p46, %p47
    %p49 = scmp.ne.s32.totalorder %s35, %s36
    %p50 = scmp.eq.s32.totalorder %s16, 1
    %p51 = por %p49, %p50
    %p53 = scmp.ne.s32.totalorder %s36, %s52
    %p54 = scmp.eq.s32.totalorder %s16, 0
    %p55 = por %p53, %p54
    %s57 = sadd.s32 %s56, 1
    %p60 = scmp.eq.s32.totalorder %s10, 1
    %p61 = scmp.ne.s32.totalorder %s56, %s58
    %p62 = scmp.eq.s32.totalorder %s10, 0
    %p63 = por %p61, %p62
    %p64 = scmp.ne.s32.totalorder %s56, %s58
    %p65 = scmp.eq.s32.totalorder %s15, 1
    %p66 = por %p64, %p65
    %p67 = scmp.ne.s32.totalorder %s58, %s59
    %p68 = scmp.eq.s32.totalorder %s15, 0
    %p69 = por %p67, %p68
    %p70 = scmp.ne.s32.totalorder %s58, %s59
    %p71 = scmp.eq.s32.totalorder %s16, 1
    %p72 = por %p70, %p71
    %p74 = scmp.ne.s32.totalorder %s59, %s73
    %p75 = scmp.eq.s32.totalorder %s16, 0
    %p76 = por %p74, %p75
    %s77 = ssub.s32 %s17, %s29
    %s78 = ssub.s32 %s18, %s25
    %s79 = sor.u32 %s77, %s78
    %p80 = scmp.eq.s32.totalorder %s79, 0
    %s82 = sadd.s32 %s81, 1
    %s83 = scalar_select %p80, %s81, %s82
    %p86 = pneg %p80
    %p87 = scmp.eq.s32.totalorder %s10, 1
    %p88 = por %p86, %p87
    %p89 = scmp.ne.s32.totalorder %s81, %s84
    %p90 = scmp.eq.s32.totalorder %s10, 0
    %p91 = por %p89, %p90
    %p92 = scmp.ne.s32.totalorder %s81, %s84
    %p93 = scmp.eq.s32.totalorder %s15, 1
    %p94 = por %p92, %p93
    %p95 = scmp.ne.s32.totalorder %s84, %s85
    %p96 = scmp.eq.s32.totalorder %s15, 0
    %p97 = por %p95, %p96
    %p98 = scmp.ne.s32.totalorder %s84, %s85
    %p99 = scmp.eq.s32.totalorder %s16, 1
    %p100 = por %p98, %p99
    %p102 = scmp.ne.s32.totalorder %s85, %s101
    %p103 = scmp.eq.s32.totalorder %s16, 0
    %p104 = por %p102, %p103
    %s105 = ssub.s32 %s17, %s29
    %p106 = scmp.eq.s32.totalorder %s105, 0
    %s108 = sadd.s32 %s107, 1
    %s109 = scalar_select %p106, %s107, %s108
    %p112 = pneg %p106
    %p113 = scmp.eq.s32.totalorder %s10, 1
    %p114 = por %p112, %p113
    %p115 = scmp.ne.s32.totalorder %s107, %s110
    %p116 = scmp.eq.s32.totalorder %s10, 0
    %p117 = por %p115, %p116
    %p118 = scmp.ne.s32.totalorder %s107, %s110
    %p119 = scmp.eq.s32.totalorder %s15, 1
    %p120 = por %p118, %p119
    %p121 = scmp.ne.s32.totalorder %s110, %s111
    %p122 = scmp.eq.s32.totalorder %s15, 0
    %p123 = por %p121, %p122
    %p124 = scmp.ne.s32.totalorder %s110, %s111
    %p125 = scmp.eq.s32.totalorder %s16, 1
    %p126 = por %p124, %p125
    %p128 = scmp.ne.s32.totalorder %s111, %s127
    %p129 = scmp.eq.s32.totalorder %s16, 0
    %p130 = por %p128, %p129
    %p131 = scmp.le.s32.totalorder 1, %s10
    %p132 = scmp.lt.s32.totalorder %s10, 3
    %p133 = pnand %p131, %p132
    %p134 = pneg %p133
    // Predicated region
    $region9: #{norm_act_conv_transpose.2} parent=5 // pred_check
      _
    $region10: #{norm_act_conv_transpose.2} parent=5 // pred_check_branch
      %136 = sbr.rel (%p133) target = $region12
    $region11: #{norm_act_conv_transpose.2} parent=5 // pred_region
      %s137 = ssub.s32 %s10, 1
      // Predicated region
      $region13: #{norm_act_conv_transpose.2} parent=11 // pred_check
        %p138 = pneg %p69
      $region14: #{norm_act_conv_transpose.2} parent=11 // pred_check_branch
        %140 = sbr.rel (%p138) target = $region16
      $region15: #{norm_act_conv_transpose.2} parent=11 // pred_region
        _
      $region16: #{norm_act_conv_transpose.2} parent=11 // pred_fallthru
        _
    $region12: #{norm_act_conv_transpose.2} parent=5 // pred_fallthru
      _
    %p141 = scmp.lt.s32.totalorder %s10, 2
    // Predicated region
    $region17: #{norm_act_conv_transpose.2} parent=5 // pred_check
      %p142 = pneg %p141
    $region18: #{norm_act_conv_transpose.2} parent=5 // pred_check_branch
      %144 = sbr.rel (%p142) target = $region20
    $region19: #{norm_act_conv_transpose.2} parent=5 // pred_region
      // Predicated region
      $region21: #{norm_act_conv_transpose.2} parent=19 // pred_check
        %p145 = pneg %p42
      $region22: #{norm_act_conv_transpose.2} parent=19 // pred_check_branch
        %147 = sbr.rel (%p145) target = $region24
      $region23: #{norm_act_conv_transpose.2} parent=19 // pred_region
        %p148 = scmp.lt.s32.totalorder %s17, 1
        %s149 = scalar_select %p148, %s17, 1
        %s150 = smul.addr %s149, 54
        %s151 = smul.addr %s150, 4
        %s152 = scalar_lea.vmem %s0, %s151
      $region24: #{norm_act_conv_transpose.2} parent=19 // pred_fallthru
        _
    $region20: #{norm_act_conv_transpose.2} parent=5 // pred_fallthru
      _
    %p153 = scmp.le.s32.totalorder 1, %s10
    %p154 = scmp.lt.s32.totalorder %s10, 3
    %p155 = pnand %p153, %p154
    %p156 = pneg %p155
    // Predicated region
    $region25: #{norm_act_conv_transpose.2} parent=5 // pred_check
      _
    $region26: #{norm_act_conv_transpose.2} parent=5 // pred_check_branch
      %158 = sbr.rel (%p155) target = $region28
    $region27: #{norm_act_conv_transpose.2} parent=5 // pred_region
      %s159 = ssub.s32 %s10, 1
      %p160 = scmp.lt.s32.totalorder %s19, 1
      %s161 = scalar_select %p160, %s19, 1
      %s162 = smul.addr %s161, 54
      %s163 = smul.addr %s162, 4
      %s164 = scalar_lea.vmem %s0, %s163
      %p165 = pneg %p48
      %p166 = pneg %p45
      %p167 = pneg %p69
      %p168 = pneg %p66
      %p169 = pneg %p97
      %p170 = pneg %p94
      %s171 = smul.u32 2, %s20
      %p172 = scmp.lt.s32.totalorder %s19, 1
      %s173 = scalar_select %p172, %s19, 1
      %p174 = scmp.lt.s32.totalorder %s171, 1
      %s175 = scalar_select %p174, %s171, 1
      %s176 = smul.addr %s173, 2
      %s177 = sadd.s32 %s175, %s176
      %s178 = smul.addr %s177, 4
      %s179 = scalar_lea.vmem %s2, %s178
      %p180 = pneg %p123
      %p181 = pneg %p120
      %p182 = scmp.lt.s32.totalorder %s19, 1
      %s183 = scalar_select %p182, %s19, 1
      %s184 = smul.addr %s183, 2
      %s185 = scalar_lea.vmem %s3, %s184
      %p186 = scmp.lt.s32.totalorder %s19, 1
      %s187 = scalar_select %p186, %s19, 1
      %s188 = smul.addr %s187, 54
      %s189 = smul.addr %s188, 4
      %s190 = scalar_lea.vmem %s0, %s189
      %s191 = smul.u32 2, %s20
      %p192 = scmp.lt.s32.totalorder %s19, 1
      %s193 = scalar_select %p192, %s19, 1
      %p194 = scmp.lt.s32.totalorder %s191, 1
      %s195 = scalar_select %p194, %s191, 1
      %s196 = smul.addr %s193, 2
      %s197 = sadd.s32 %s195, %s196
      %s198 = smul.addr %s197, 4
      %s199 = scalar_lea.vmem %s2, %s198
      %s200 = smul.u32 2, %s20
      %p201 = scmp.lt.s32.totalorder %s19, 1
      %s202 = scalar_select %p201, %s19, 1
      %s203 = smul.addr %s202, 2
      %s204 = scalar_lea.vmem %s3, %s203
      %s206 = smul.u32 %s20, 16
      %s207 = smul.u32 %s206, 3
      %s208 = smul.addr %s207, 4
      %s209 = scalar_lea.vmem %s190, %s208
      %v210 = vld [vmem:[%s209] sm:$0xf]
      %v211 = vld [vmem:[%s209 + $0x4] sm:$0xf]
      %v212 = vld [vmem:[%s209 + $0xc] sm:$0xf]
      %v213 = vld [vmem:[%s209 + $0x10] sm:$0xf]
      %v214 = vld [vmem:[%s209 + $0x18] sm:$0xf]
      %v215 = vld [vmem:[%s209 + $0x1c] sm:$0xf]
      %v216 = vld [vmem:[%s209 + $0x24] sm:$0xf]
      %v217 = vld [vmem:[%s209 + $0x28] sm:$0xf]
      %v218 = vld [vmem:[%s209 + $0x30] sm:$0xf]
      %v219 = vld [vmem:[%s209 + $0x34] sm:$0xf]
      %v220 = vld [vmem:[%s209 + $0x3c] sm:$0xf]
      %v221 = vld [vmem:[%s209 + $0x40] sm:$0xf]
      %v222 = vld [vmem:[%s209 + $0x48] sm:$0xf]
      %v223 = vld [vmem:[%s209 + $0x4c] sm:$0xf]
      %v224 = vld [vmem:[%s209 + $0x54] sm:$0xf]
      %v225 = vld [vmem:[%s209 + $0x58] sm:$0xf]
      %v226 = vld [vmem:[%s209 + $0x60] sm:$0xf]
      %v227 = vld [vmem:[%s209 + $0x64] sm:$0xf]
      %v228 = vld [vmem:[%s209 + $0x6c] sm:$0xf]
      %v229 = vld [vmem:[%s209 + $0x70] sm:$0xf]
      %v230 = vld [vmem:[%s209 + $0x78] sm:$0xf]
      %v231 = vld [vmem:[%s209 + $0x7c] sm:$0xf]
      %v232 = vld [vmem:[%s209 + $0x84] sm:$0xf]
      %v233 = vld [vmem:[%s209 + $0x88] sm:$0xf]
      %v234 = vld [vmem:[%s209 + $0x90] sm:$0xf]
      %v235 = vld [vmem:[%s209 + $0x94] sm:$0xf]
      %v236 = vld [vmem:[%s209 + $0x9c] sm:$0xf]
      %v237 = vld [vmem:[%s209 + $0xa0] sm:$0xf]
      %v238 = vld [vmem:[%s209 + $0xa8] sm:$0xf]
      %v239 = vld [vmem:[%s209 + $0xac] sm:$0xf]
      %v240 = vld [vmem:[%s209 + $0xb4] sm:$0xf]
      %v241 = vld [vmem:[%s209 + $0xb8] sm:$0xf]
      %v242 = vld [vmem:[%s1] sm:$0x3]
      %v243 = vld [vmem:[%s209 + $0x8] sm:$0x1]
      %v244 = vld [vmem:[%s209 + $0x14] sm:$0x1]
      %v245 = vld [vmem:[%s209 + $0x20] sm:$0x1]
      %v246 = vld [vmem:[%s209 + $0x2c] sm:$0x1]
      %v247 = vld [vmem:[%s209 + $0x38] sm:$0x1]
      %v248 = vld [vmem:[%s209 + $0x44] sm:$0x1]
      %v249 = vld [vmem:[%s209 + $0x50] sm:$0x1]
      %v250 = vld [vmem:[%s209 + $0x5c] sm:$0x1]
      %v251 = vld [vmem:[%s209 + $0x68] sm:$0x1]
      %v252 = vld [vmem:[%s209 + $0x74] sm:$0x1]
      %v253 = vld [vmem:[%s209 + $0x80] sm:$0x1]
      %v254 = vld [vmem:[%s209 + $0x8c] sm:$0x1]
      %v255 = vld [vmem:[%s209 + $0x98] sm:$0x1]
      %v256 = vld [vmem:[%s209 + $0xa4] sm:$0x1]
      %v257 = vld [vmem:[%s209 + $0xb0] sm:$0x1]
      %v258 = vld [vmem:[%s209 + $0xbc] sm:$0x1]
      %vm259 = vsmask.f32 3328
      %vm260 = vsmask.f32 7440
      %vm261 = vmor %vm259, %vm260
      %v263 = vshrl.u32 %v210, 16
      %v265 = vrot.slane %v263, 4
      %v266 = vshll.u32 %v210, 16
      %v268 = vrot.slane %v266, 5
      %v269 = vor.u32 %v265, %v268
      %v270 = vrot.slane %v269, 4
      %v272 = vshll.u32 %v211, 16
      %v274 = vrot.slane %v272, 5
      %v275 = vsel %vm261, %v270, %v274
      %v276 = vshrl.u32 %v211, 16
      %v278 = vrot.slane %v276, 4
      %v279 = vor.u32 %v278, %v274
      %v280 = vrot.slane %v279, 4
      %v282 = vshll.u32 %v243, 16
      %v284 = vrot.slane %v282, 5
      %v285 = vsel %vm261, %v280, %v284
      %v287 = vshrl.u32 %v212, 16
      %v289 = vrot.slane %v287, 4
      %v290 = vshll.u32 %v212, 16
      %v292 = vrot.slane %v290, 5
      %v293 = vor.u32 %v289, %v292
      %v294 = vrot.slane %v293, 4
      %v296 = vshll.u32 %v213, 16
      %v298 = vrot.slane %v296, 5
      %v299 = vsel %vm261, %v294, %v298
      %v300 = vshrl.u32 %v213, 16
      %v302 = vrot.slane %v300, 4
      %v303 = vor.u32 %v302, %v298
      %v304 = vrot.slane %v303, 4
      %v306 = vshll.u32 %v244, 16
      %v308 = vrot.slane %v306, 5
      %v309 = vsel %vm261, %v304, %v308
      %v311 = vshrl.u32 %v214, 16
      %v313 = vrot.slane %v311, 4
      %v314 = vshll.u32 %v214, 16
      %v316 = vrot.slane %v314, 5
      %v317 = vor.u32 %v313, %v316
      %v318 = vrot.slane %v317, 4
      %v320 = vshll.u32 %v215, 16
      %v322 = vrot.slane %v320, 5
      %v323 = vsel %vm261, %v318, %v322
      %v324 = vshrl.u32 %v215, 16
      %v326 = vrot.slane %v324, 4
      %v327 = vor.u32 %v326, %v322
      %v328 = vrot.slane %v327, 4
      %v330 = vshll.u32 %v245, 16
      %v332 = vrot.slane %v330, 5
      %v333 = vsel %vm261, %v328, %v332
      %v335 = vshrl.u32 %v216, 16
      %v337 = vrot.slane %v335, 4
      %v338 = vshll.u32 %v216, 16
      %v340 = vrot.slane %v338, 5
      %v341 = vor.u32 %v337, %v340
      %v342 = vrot.slane %v341, 4
      %v344 = vshll.u32 %v217, 16
      %v346 = vrot.slane %v344, 5
      %v347 = vsel %vm261, %v342, %v346
      %v348 = vshrl.u32 %v217, 16
      %v350 = vrot.slane %v348, 4
      %v351 = vor.u32 %v350, %v346
      %v352 = vrot.slane %v351, 4
      %v354 = vshll.u32 %v246, 16
      %v356 = vrot.slane %v354, 5
      %v357 = vsel %vm261, %v352, %v356
      %v359 = vshrl.u32 %v218, 16
      %v361 = vrot.slane %v359, 4
      %v362 = vshll.u32 %v218, 16
      %v364 = vrot.slane %v362, 5
      %v365 = vor.u32 %v361, %v364
      %v366 = vrot.slane %v365, 4
      %v368 = vshll.u32 %v219, 16
      %v370 = vrot.slane %v368, 5
      %v371 = vsel %vm261, %v366, %v370
      %v372 = vshrl.u32 %v219, 16
      %v374 = vrot.slane %v372, 4
      %v375 = vor.u32 %v374, %v370
      %v376 = vrot.slane %v375, 4
      %v378 = vshll.u32 %v247, 16
      %v380 = vrot.slane %v378, 5
      %v381 = vsel %vm261, %v376, %v380
      %v383 = vshrl.u32 %v220, 16
      %v385 = vrot.slane %v383, 4
      %v386 = vshll.u32 %v220, 16
      %v388 = vrot.slane %v386, 5
      %v389 = vor.u32 %v385, %v388
      %v390 = vrot.slane %v389, 4
      %v392 = vshll.u32 %v221, 16
      %v394 = vrot.slane %v392, 5
      %v395 = vsel %vm261, %v390, %v394
      %v396 = vshrl.u32 %v221, 16
      %v398 = vrot.slane %v396, 4
      %v399 = vor.u32 %v398, %v394
      %v400 = vrot.slane %v399, 4
      %v402 = vshll.u32 %v248, 16
      %v404 = vrot.slane %v402, 5
      %v405 = vsel %vm261, %v400, %v404
      %v407 = vshrl.u32 %v222, 16
      %v409 = vrot.slane %v407, 4
      %v410 = vshll.u32 %v222, 16
      %v412 = vrot.slane %v410, 5
      %v413 = vor.u32 %v409, %v412
      %v414 = vrot.slane %v413, 4
      %v416 = vshll.u32 %v223, 16
      %v418 = vrot.slane %v416, 5
      %v419 = vsel %vm261, %v414, %v418
      %v420 = vshrl.u32 %v223, 16
      %v422 = vrot.slane %v420, 4
      %v423 = vor.u32 %v422, %v418
      %v424 = vrot.slane %v423, 4
      %v426 = vshll.u32 %v249, 16
      %v428 = vrot.slane %v426, 5
      %v429 = vsel %vm261, %v424, %v428
      %v431 = vshrl.u32 %v224, 16
      %v433 = vrot.slane %v431, 4
      %v434 = vshll.u32 %v224, 16
      %v436 = vrot.slane %v434, 5
      %v437 = vor.u32 %v433, %v436
      %v438 = vrot.slane %v437, 4
      %v440 = vshll.u32 %v225, 16
      %v442 = vrot.slane %v440, 5
      %v443 = vsel %vm261, %v438, %v442
      %v444 = vshrl.u32 %v225, 16
      %v446 = vrot.slane %v444, 4
      %v447 = vor.u32 %v446, %v442
      %v448 = vrot.slane %v447, 4
      %v450 = vshll.u32 %v250, 16
      %v452 = vrot.slane %v450, 5
      %v453 = vsel %vm261, %v448, %v452
      %v455 = vshrl.u32 %v226, 16
      %v457 = vrot.slane %v455, 4
      %v458 = vshll.u32 %v226, 16
      %v460 = vrot.slane %v458, 5
      %v461 = vor.u32 %v457, %v460
      %v462 = vrot.slane %v461, 4
      %v464 = vshll.u32 %v227, 16
      %v466 = vrot.slane %v464, 5
      %v467 = vsel %vm261, %v462, %v466
      %v468 = vshrl.u32 %v227, 16
      %v470 = vrot.slane %v468, 4
      %v471 = vor.u32 %v470, %v466
      %v472 = vrot.slane %v471, 4
      %v474 = vshll.u32 %v251, 16
      %v476 = vrot.slane %v474, 5
      %v477 = vsel %vm261, %v472, %v476
      %v479 = vshrl.u32 %v228, 16
      %v481 = vrot.slane %v479, 4
      %v482 = vshll.u32 %v228, 16
      %v484 = vrot.slane %v482, 5
      %v485 = vor.u32 %v481, %v484
      %v486 = vrot.slane %v485, 4
      %v488 = vshll.u32 %v229, 16
      %v490 = vrot.slane %v488, 5
      %v491 = vsel %vm261, %v486, %v490
      %v492 = vshrl.u32 %v229, 16
      %v494 = vrot.slane %v492, 4
      %v495 = vor.u32 %v494, %v490
      %v496 = vrot.slane %v495, 4
      %v498 = vshll.u32 %v252, 16
      %v500 = vrot.slane %v498, 5
      %v501 = vsel %vm261, %v496, %v500
      %v503 = vshrl.u32 %v230, 16
      %v505 = vrot.slane %v503, 4
      %v506 = vshll.u32 %v230, 16
      %v508 = vrot.slane %v506, 5
      %v509 = vor.u32 %v505, %v508
      %v510 = vrot.slane %v509, 4
      %v512 = vshll.u32 %v231, 16
      %v514 = vrot.slane %v512, 5
      %v515 = vsel %vm261, %v510, %v514
      %v516 = vshrl.u32 %v231, 16
      %v518 = vrot.slane %v516, 4
      %v519 = vor.u32 %v518, %v514
      %v520 = vrot.slane %v519, 4
      %v522 = vshll.u32 %v253, 16
      %v524 = vrot.slane %v522, 5
      %v525 = vsel %vm261, %v520, %v524
      %v527 = vshrl.u32 %v232, 16
      %v529 = vrot.slane %v527, 4
      %v530 = vshll.u32 %v232, 16
      %v532 = vrot.slane %v530, 5
      %v533 = vor.u32 %v529, %v532
      %v534 = vrot.slane %v533, 4
      %v536 = vshll.u32 %v233, 16
      %v538 = vrot.slane %v536, 5
      %v539 = vsel %vm261, %v534, %v538
      %v540 = vshrl.u32 %v233, 16
      %v542 = vrot.slane %v540, 4
      %v543 = vor.u32 %v542, %v538
      %v544 = vrot.slane %v543, 4
      %v546 = vshll.u32 %v254, 16
      %v548 = vrot.slane %v546, 5
      %v549 = vsel %vm261, %v544, %v548
      %v551 = vshrl.u32 %v234, 16
      %v553 = vrot.slane %v551, 4
      %v554 = vshll.u32 %v234, 16
      %v556 = vrot.slane %v554, 5
      %v557 = vor.u32 %v553, %v556
      %v558 = vrot.slane %v557, 4
      %v560 = vshll.u32 %v235, 16
      %v562 = vrot.slane %v560, 5
      %v563 = vsel %vm261, %v558, %v562
      %v564 = vshrl.u32 %v235, 16
      %v566 = vrot.slane %v564, 4
      %v567 = vor.u32 %v566, %v562
      %v568 = vrot.slane %v567, 4
      %v570 = vshll.u32 %v255, 16
      %v572 = vrot.slane %v570, 5
      %v573 = vsel %vm261, %v568, %v572
      %v575 = vshrl.u32 %v236, 16
      %v577 = vrot.slane %v575, 4
      %v578 = vshll.u32 %v236, 16
      %v580 = vrot.slane %v578, 5
      %v581 = vor.u32 %v577, %v580
      %v582 = vrot.slane %v581, 4
      %v584 = vshll.u32 %v237, 16
      %v586 = vrot.slane %v584, 5
      %v587 = vsel %vm261, %v582, %v586
      %v588 = vshrl.u32 %v237, 16
      %v590 = vrot.slane %v588, 4
      %v591 = vor.u32 %v590, %v586
      %v592 = vrot.slane %v591, 4
      %v594 = vshll.u32 %v256, 16
      %v596 = vrot.slane %v594, 5
      %v597 = vsel %vm261, %v592, %v596
      %v599 = vshrl.u32 %v238, 16
      %v601 = vrot.slane %v599, 4
      %v602 = vshll.u32 %v238, 16
      %v604 = vrot.slane %v602, 5
      %v605 = vor.u32 %v601, %v604
      %v606 = vrot.slane %v605, 4
      %v608 = vshll.u32 %v239, 16
      %v610 = vrot.slane %v608, 5
      %v611 = vsel %vm261, %v606, %v610
      %v612 = vshrl.u32 %v239, 16
      %v614 = vrot.slane %v612, 4
      %v615 = vor.u32 %v614, %v610
      %v616 = vrot.slane %v615, 4
      %v618 = vshll.u32 %v257, 16
      %v620 = vrot.slane %v618, 5
      %v621 = vsel %vm261, %v616, %v620
      %v623 = vshrl.u32 %v240, 16
      %v625 = vrot.slane %v623, 4
      %v626 = vshll.u32 %v240, 16
      %v628 = vrot.slane %v626, 5
      %v629 = vor.u32 %v625, %v628
      %v630 = vrot.slane %v629, 4
      %v632 = vshll.u32 %v241, 16
      %v634 = vrot.slane %v632, 5
      %v635 = vsel %vm261, %v630, %v634
      %v636 = vshrl.u32 %v241, 16
      %v638 = vrot.slane %v636, 4
      %v639 = vor.u32 %v638, %v634
      %v640 = vrot.slane %v639, 4
      %v642 = vshll.u32 %v258, 16
      %v644 = vrot.slane %v642, 5
      %v645 = vsel %vm261, %v640, %v644
      %s646 = scalar_lea.vmem %s1, 2
      %v647 = vld [vmem:[%s646] sm:$0x3]
      %v648 = vunpack.c.l.b16 %v275
      %v649 = vunpack.c.l.b16 %v285
      %v650 = vunpack.c.l.b16 %v299
      %v651 = vunpack.c.l.b16 %v309
      %v652 = vunpack.c.l.b16 %v323
      %v653 = vunpack.c.l.b16 %v333
      %v654 = vunpack.c.l.b16 %v347
      %v655 = vunpack.c.l.b16 %v357
      %v656 = vunpack.c.l.b16 %v371
      %v657 = vunpack.c.l.b16 %v381
      %v658 = vunpack.c.l.b16 %v395
      %v659 = vunpack.c.l.b16 %v405
      %v660 = vunpack.c.l.b16 %v419
      %v661 = vunpack.c.l.b16 %v429
      %v662 = vunpack.c.l.b16 %v443
      %v663 = vunpack.c.l.b16 %v453
      %v664 = vunpack.c.l.b16 %v467
      %v665 = vunpack.c.l.b16 %v477
      %v666 = vunpack.c.l.b16 %v491
      %v667 = vunpack.c.l.b16 %v501
      %v668 = vunpack.c.l.b16 %v515
      %v669 = vunpack.c.l.b16 %v525
      %v670 = vunpack.c.l.b16 %v539
      %v671 = vunpack.c.l.b16 %v549
      %v672 = vunpack.c.l.b16 %v563
      %v673 = vunpack.c.l.b16 %v573
      %v674 = vunpack.c.l.b16 %v587
      %v675 = vunpack.c.l.b16 %v597
      %v676 = vunpack.c.l.b16 %v611
      %v677 = vunpack.c.l.b16 %v621
      %v678 = vunpack.c.l.b16 %v635
      %v679 = vunpack.c.l.b16 %v645
      %v680 = vpack.c.b16 %v649, %v648
      %v681 = vpack.c.b16 %v651, %v650
      %v682 = vpack.c.b16 %v653, %v652
      %v683 = vpack.c.b16 %v655, %v654
      %v684 = vpack.c.b16 %v657, %v656
      %v685 = vpack.c.b16 %v659, %v658
      %v686 = vpack.c.b16 %v661, %v660
      %v687 = vpack.c.b16 %v663, %v662
      %v688 = vpack.c.b16 %v665, %v664
      %v689 = vpack.c.b16 %v667, %v666
      %v690 = vpack.c.b16 %v669, %v668
      %v691 = vpack.c.b16 %v671, %v670
      %v692 = vpack.c.b16 %v673, %v672
      %v693 = vpack.c.b16 %v675, %v674
      %v694 = vpack.c.b16 %v677, %v676
      %v695 = vpack.c.b16 %v679, %v678
      %vm696 = vcmask 31744
      %v698 = vsel %vm696, %v680, 0
      %v701 = vsel %vm696, %v681, 0
      %v704 = vsel %vm696, %v682, 0
      %v707 = vsel %vm696, %v683, 0
      %v710 = vsel %vm696, %v684, 0
      %v713 = vsel %vm696, %v685, 0
      %v716 = vsel %vm696, %v686, 0
      %v719 = vsel %vm696, %v687, 0
      %v722 = vsel %vm696, %v688, 0
      %v725 = vsel %vm696, %v689, 0
      %v728 = vsel %vm696, %v690, 0
      %v731 = vsel %vm696, %v691, 0
      %v734 = vsel %vm696, %v692, 0
      %v737 = vsel %vm696, %v693, 0
      %v740 = vsel %vm696, %v694, 0
      %v743 = vsel %vm696, %v695, 0
      %vm745 = vcmask 1041408
      %v747 = vsel %vm745, %v647, 0
      %749 = vmatprep.subr.bf16.mxu0 0
      %750 = vmatpush1.bf16.msra.mxu0 0
      %751 = vmatprep.subr.bf16.mxu0 0
      %752 = vmatpush1.bf16.msra.mxu0 0
      %753 = vmatprep.subr.bf16.mxu0 0
      %754 = vmatpush1.bf16.msra.mxu0 0
      %755 = vmatprep.subr.bf16.mxu0 0
      %756 = vmatpush1.bf16.msra.mxu0 0
      %757 = vmatprep.subr.bf16.mxu0 0
      %758 = vmatpush1.bf16.msra.mxu0 0
      %759 = vmatprep.subr.bf16.mxu0 0
      %760 = vmatpush1.bf16.msra.mxu0 0
      %761 = vmatprep.subr.bf16.mxu0 0
      %762 = vmatpush1.bf16.msra.mxu0 0
      %763 = vmatprep.subr.bf16.mxu0 0
      %764 = vmatpush1.bf16.msra.mxu0 %v747
      %765 = vmatprep.subr.bf16.mxu0 0
      %766 = vmatpush2.bf16.msra.mxu0 0
      %767 = vmatprep.subr.bf16.mxu0 0
      %768 = vmatpush2.bf16.msra.mxu0 0
      %769 = vmatprep.subr.bf16.mxu0 0
      %770 = vmatpush2.bf16.msra.mxu0 0
      %771 = vmatprep.subr.bf16.mxu0 0
      %772 = vmatpush2.bf16.msra.mxu0 0
      %773 = vmatprep.subr.bf16.mxu0 0
      %774 = vmatpush2.bf16.msra.mxu0 0
      %775 = vmatprep.subr.bf16.mxu0 0
      %776 = vmatpush2.bf16.msra.mxu0 0
      %777 = vmatprep.subr.bf16.mxu0 0
      %778 = vmatpush2.bf16.msra.mxu0 0
      %779 = vmatprep.subr.bf16.mxu0 0
      %780 = vmatpush2.bf16.msra.mxu0 0
      %781 = vmatprep.mubr.bf16.mxu0 0
      %782 = vmatmul.mubr.bf16.gmra.mxu0 %v698
      %v783 = vpop.f32.mrf.mxu0
      %v784 = vadd.f32 0.0, %v783
      %v785 = vpop.f32.mrf.mxu0
      %v786 = vpop.f32.mrf.mxu0
      %v787 = vadd.f32 0.0, %v786
      %v788 = vpop.f32.mrf.mxu0
      %789 = vmatprep.mubr.bf16.mxu0 0
      %790 = vmatmul.mubr.bf16.gmra.mxu0 %v701
      %v791 = vpop.f32.mrf.mxu0
      %v792 = vadd.f32 0.0, %v791
      %v793 = vpop.f32.mrf.mxu0
      %v794 = vpop.f32.mrf.mxu0
      %v795 = vadd.f32 0.0, %v794
      %v796 = vpop.f32.mrf.mxu0
      %797 = vmatprep.mubr.bf16.mxu0 0
      %798 = vmatmul.mubr.bf16.gmra.mxu0 %v704
      %v799 = vpop.f32.mrf.mxu0
      %v800 = vadd.f32 0.0, %v799
      %v801 = vpop.f32.mrf.mxu0
      %v802 = vpop.f32.mrf.mxu0
      %v803 = vadd.f32 0.0, %v802
      %v804 = vpop.f32.mrf.mxu0
      %805 = vmatprep.mubr.bf16.mxu0 0
      %806 = vmatmul.mubr.bf16.gmra.mxu0 %v707
      %v807 = vpop.f32.mrf.mxu0
      %v808 = vadd.f32 0.0, %v807
      %v809 = vpop.f32.mrf.mxu0
      %v810 = vpop.f32.mrf.mxu0
      %v811 = vadd.f32 0.0, %v810
      %v812 = vpop.f32.mrf.mxu0
      %813 = vmatprep.mubr.bf16.mxu0 0
      %814 = vmatmul.mubr.bf16.gmra.mxu0 %v710
      %v815 = vpop.f32.mrf.mxu0
      %v816 = vadd.f32 0.0, %v815
      %v817 = vpop.f32.mrf.mxu0
      %v818 = vpop.f32.mrf.mxu0
      %v819 = vadd.f32 0.0, %v818
      %v820 = vpop.f32.mrf.mxu0
      %821 = vmatprep.mubr.bf16.mxu0 0
      %822 = vmatmul.mubr.bf16.gmra.mxu0 %v713
      %v823 = vpop.f32.mrf.mxu0
      %v824 = vadd.f32 0.0, %v823
      %v825 = vpop.f32.mrf.mxu0
      %v826 = vpop.f32.mrf.mxu0
      %v827 = vadd.f32 0.0, %v826
      %v828 = vpop.f32.mrf.mxu0
      %829 = vmatprep.mubr.bf16.mxu0 0
      %830 = vmatmul.mubr.bf16.gmra.mxu0 %v716
      %v831 = vpop.f32.mrf.mxu0
      %v832 = vadd.f32 0.0, %v831
      %v833 = vpop.f32.mrf.mxu0
      %v834 = vpop.f32.mrf.mxu0
      %v835 = vadd.f32 0.0, %v834
      %v836 = vpop.f32.mrf.mxu0
      %837 = vmatprep.mubr.bf16.mxu0 0
      %838 = vmatmul.mubr.bf16.gmra.mxu0 %v719
      %v839 = vpop.f32.mrf.mxu0
      %v840 = vadd.f32 0.0, %v839
      %v841 = vpop.f32.mrf.mxu0
      %v842 = vpop.f32.mrf.mxu0
      %v843 = vadd.f32 0.0, %v842
      %v844 = vpop.f32.mrf.mxu0
      %845 = vmatprep.mubr.bf16.mxu0 0
      %846 = vmatmul.mubr.bf16.gmra.mxu0 %v722
      %v847 = vpop.f32.mrf.mxu0
      %v848 = vadd.f32 0.0, %v847
      %v849 = vpop.f32.mrf.mxu0
      %v850 = vpop.f32.mrf.mxu0
      %v851 = vadd.f32 0.0, %v850
      %v852 = vpop.f32.mrf.mxu0
      %853 = vmatprep.mubr.bf16.mxu0 0
      %854 = vmatmul.mubr.bf16.gmra.mxu0 %v725
      %v855 = vpop.f32.mrf.mxu0
      %v856 = vadd.f32 0.0, %v855
      %v857 = vpop.f32.mrf.mxu0
      %v858 = vpop.f32.mrf.mxu0
      %v859 = vadd.f32 0.0, %v858
      %v860 = vpop.f32.mrf.mxu0
      %861 = vmatprep.mubr.bf16.mxu0 0
      %862 = vmatmul.mubr.bf16.gmra.mxu0 %v728
      %v863 = vpop.f32.mrf.mxu0
      %v864 = vadd.f32 0.0, %v863
      %v865 = vpop.f32.mrf.mxu0
      %v866 = vpop.f32.mrf.mxu0
      %v867 = vadd.f32 0.0, %v866
      %v868 = vpop.f32.mrf.mxu0
      %869 = vmatprep.mubr.bf16.mxu0 0
      %870 = vmatmul.mubr.bf16.gmra.mxu0 %v731
      %v871 = vpop.f32.mrf.mxu0
      %v872 = vadd.f32 0.0, %v871
      %v873 = vpop.f32.mrf.mxu0
      %v874 = vpop.f32.mrf.mxu0
      %v875 = vadd.f32 0.0, %v874
      %v876 = vpop.f32.mrf.mxu0
      %877 = vmatprep.mubr.bf16.mxu0 0
      %878 = vmatmul.mubr.bf16.gmra.mxu0 %v734
      %v879 = vpop.f32.mrf.mxu0
      %v880 = vadd.f32 0.0, %v879
      %v881 = vpop.f32.mrf.mxu0
      %v882 = vpop.f32.mrf.mxu0
      %v883 = vadd.f32 0.0, %v882
      %v884 = vpop.f32.mrf.mxu0
      %885 = vmatprep.mubr.bf16.mxu0 0
      %886 = vmatmul.mubr.bf16.gmra.mxu0 %v737
      %v887 = vpop.f32.mrf.mxu0
      %v888 = vadd.f32 0.0, %v887
      %v889 = vpop.f32.mrf.mxu0
      %v890 = vpop.f32.mrf.mxu0
      %v891 = vadd.f32 0.0, %v890
      %v892 = vpop.f32.mrf.mxu0
      %893 = vmatprep.mubr.bf16.mxu0 0
      %894 = vmatmul.mubr.bf16.gmra.mxu0 %v740
      %v895 = vpop.f32.mrf.mxu0
      %v896 = vadd.f32 0.0, %v895
      %v897 = vpop.f32.mrf.mxu0
      %v898 = vpop.f32.mrf.mxu0
      %v899 = vadd.f32 0.0, %v898
      %v900 = vpop.f32.mrf.mxu0
      %901 = vmatprep.mubr.bf16.mxu0 0
      %902 = vmatmul.mubr.bf16.gmra.mxu0 %v743
      %v903 = vpop.f32.mrf.mxu0
      %v904 = vadd.f32 0.0, %v903
      %v905 = vpop.f32.mrf.mxu0
      %v906 = vpop.f32.mrf.mxu0
      %v907 = vadd.f32 0.0, %v906
      %v908 = vpop.f32.mrf.mxu0
      %909 = vdwg.mxu0
      %v942 = vunpack.c.l.b16 %v210
      %v943 = vunpack.c.l.b16 %v211
      %v944 = vunpack.c.l.b16 %v212
      %v945 = vunpack.c.l.b16 %v213
      %v946 = vunpack.c.l.b16 %v214
      %v947 = vunpack.c.l.b16 %v215
      %v948 = vunpack.c.l.b16 %v216
      %v949 = vunpack.c.l.b16 %v217
      %v950 = vunpack.c.l.b16 %v218
      %v951 = vunpack.c.l.b16 %v219
      %v952 = vunpack.c.l.b16 %v220
      %v953 = vunpack.c.l.b16 %v221
      %v954 = vunpack.c.l.b16 %v222
      %v955 = vunpack.c.l.b16 %v223
      %v956 = vunpack.c.l.b16 %v224
      %v957 = vunpack.c.l.b16 %v225
      %v958 = vunpack.c.l.b16 %v226
      %v959 = vunpack.c.l.b16 %v227
      %v960 = vunpack.c.l.b16 %v228
      %v961 = vunpack.c.l.b16 %v229
      %v962 = vunpack.c.l.b16 %v230
      %v963 = vunpack.c.l.b16 %v231
      %v964 = vunpack.c.l.b16 %v232
      %v965 = vunpack.c.l.b16 %v233
      %v966 = vunpack.c.l.b16 %v234
      %v967 = vunpack.c.l.b16 %v235
      %v968 = vunpack.c.l.b16 %v236
      %v969 = vunpack.c.l.b16 %v237
      %v970 = vunpack.c.l.b16 %v238
      %v971 = vunpack.c.l.b16 %v239
      %v972 = vunpack.c.l.b16 %v240
      %v973 = vunpack.c.l.b16 %v241
      %v974 = vpack.c.b16 %v943, %v942
      %v975 = vpack.c.b16 %v945, %v944
      %v976 = vpack.c.b16 %v947, %v946
      %v977 = vpack.c.b16 %v949, %v948
      %v978 = vpack.c.b16 %v951, %v950
      %v979 = vpack.c.b16 %v953, %v952
      %v980 = vpack.c.b16 %v955, %v954
      %v981 = vpack.c.b16 %v957, %v956
      %v982 = vpack.c.b16 %v959, %v958
      %v983 = vpack.c.b16 %v961, %v960
      %v984 = vpack.c.b16 %v963, %v962
      %v985 = vpack.c.b16 %v965, %v964
      %v986 = vpack.c.b16 %v967, %v966
      %v987 = vpack.c.b16 %v969, %v968
      %v988 = vpack.c.b16 %v971, %v970
      %v989 = vpack.c.b16 %v973, %v972
      %v991 = vsel %vm696, %v974, 0
      %v994 = vsel %vm696, %v975, 0
      %v997 = vsel %vm696, %v976, 0
      %v1000 = vsel %vm696, %v977, 0
      %v1003 = vsel %vm696, %v978, 0
      %v1006 = vsel %vm696, %v979, 0
      %v1009 = vsel %vm696, %v980, 0
      %v1012 = vsel %vm696, %v981, 0
      %v1015 = vsel %vm696, %v982, 0
      %v1018 = vsel %vm696, %v983, 0
      %v1021 = vsel %vm696, %v984, 0
      %v1024 = vsel %vm696, %v985, 0
      %v1027 = vsel %vm696, %v986, 0
      %v1030 = vsel %vm696, %v987, 0
      %v1033 = vsel %vm696, %v988, 0
      %v1036 = vsel %vm696, %v989, 0
      %v1039 = vsel %vm745, %v242, 0
      %1041 = vmatprep.subr.bf16.mxu0 0
      %1042 = vmatpush1.bf16.msra.mxu0 0
      %1043 = vmatprep.subr.bf16.mxu0 0
      %1044 = vmatpush1.bf16.msra.mxu0 0
      %1045 = vmatprep.subr.bf16.mxu0 0
      %1046 = vmatpush1.bf16.msra.mxu0 0
      %1047 = vmatprep.subr.bf16.mxu0 0
      %1048 = vmatpush1.bf16.msra.mxu0 0
      %1049 = vmatprep.subr.bf16.mxu0 0
      %1050 = vmatpush1.bf16.msra.mxu0 0
      %1051 = vmatprep.subr.bf16.mxu0 0
      %1052 = vmatpush1.bf16.msra.mxu0 0
      %1053 = vmatprep.subr.bf16.mxu0 0
      %1054 = vmatpush1.bf16.msra.mxu0 0
      %1055 = vmatprep.subr.bf16.mxu0 0
      %1056 = vmatpush1.bf16.msra.mxu0 %v1039
      %1057 = vmatprep.subr.bf16.mxu0 0
      %1058 = vmatpush2.bf16.msra.mxu0 0
      %1059 = vmatprep.subr.bf16.mxu0 0
      %1060 = vmatpush2.bf16.msra.mxu0 0
      %1061 = vmatprep.subr.bf16.mxu0 0
      %1062 = vmatpush2.bf16.msra.mxu0 0
      %1063 = vmatprep.subr.bf16.mxu0 0
      %1064 = vmatpush2.bf16.msra.mxu0 0
      %1065 = vmatprep.subr.bf16.mxu0 0
      %1066 = vmatpush2.bf16.msra.mxu0 0
      %1067 = vmatprep.subr.bf16.mxu0 0
      %1068 = vmatpush2.bf16.msra.mxu0 0
      %1069 = vmatprep.subr.bf16.mxu0 0
      %1070 = vmatpush2.bf16.msra.mxu0 0
      %1071 = vmatprep.subr.bf16.mxu0 0
      %1072 = vmatpush2.bf16.msra.mxu0 0
      %1073 = vmatprep.mubr.bf16.mxu0 0
      %1074 = vmatmul.mubr.bf16.gmra.mxu0 %v991
      %v1075 = vpop.f32.mrf.mxu0
      %v1076 = vadd.f32 %v784, %v1075
      %v1077 = vpop.f32.mrf.mxu0
      %v1078 = vpop.f32.mrf.mxu0
      %v1079 = vadd.f32 %v787, %v1078
      %v1080 = vpop.f32.mrf.mxu0
      %1081 = vmatprep.mubr.bf16.mxu0 0
      %1082 = vmatmul.mubr.bf16.gmra.mxu0 %v994
      %v1083 = vpop.f32.mrf.mxu0
      %v1084 = vadd.f32 %v792, %v1083
      %v1085 = vpop.f32.mrf.mxu0
      %v1086 = vpop.f32.mrf.mxu0
      %v1087 = vadd.f32 %v795, %v1086
      %v1088 = vpop.f32.mrf.mxu0
      %1089 = vmatprep.mubr.bf16.mxu0 0
      %1090 = vmatmul.mubr.bf16.gmra.mxu0 %v997
      %v1091 = vpop.f32.mrf.mxu0
      %v1092 = vadd.f32 %v800, %v1091
      %v1093 = vpop.f32.mrf.mxu0
      %v1094 = vpop.f32.mrf.mxu0
      %v1095 = vadd.f32 %v803, %v1094
      %v1096 = vpop.f32.mrf.mxu0
      %1097 = vmatprep.mubr.bf16.mxu0 0
      %1098 = vmatmul.mubr.bf16.gmra.mxu0 %v1000
      %v1099 = vpop.f32.mrf.mxu0
      %v1100 = vadd.f32 %v808, %v1099
      %v1101 = vpop.f32.mrf.mxu0
      %v1102 = vpop.f32.mrf.mxu0
      %v1103 = vadd.f32 %v811, %v1102
      %v1104 = vpop.f32.mrf.mxu0
      %1105 = vmatprep.mubr.bf16.mxu0 0
      %1106 = vmatmul.mubr.bf16.gmra.mxu0 %v1003
      %v1107 = vpop.f32.mrf.mxu0
      %v1108 = vadd.f32 %v816, %v1107
      %v1109 = vpop.f32.mrf.mxu0
      %v1110 = vpop.f32.mrf.mxu0
      %v1111 = vadd.f32 %v819, %v1110
      %v1112 = vpop.f32.mrf.mxu0
      %1113 = vmatprep.mubr.bf16.mxu0 0
      %1114 = vmatmul.mubr.bf16.gmra.mxu0 %v1006
      %v1115 = vpop.f32.mrf.mxu0
      %v1116 = vadd.f32 %v824, %v1115
      %v1117 = vpop.f32.mrf.mxu0
      %v1118 = vpop.f32.mrf.mxu0
      %v1119 = vadd.f32 %v827, %v1118
      %v1120 = vpop.f32.mrf.mxu0
      %1121 = vmatprep.mubr.bf16.mxu0 0
      %1122 = vmatmul.mubr.bf16.gmra.mxu0 %v1009
      %v1123 = vpop.f32.mrf.mxu0
      %v1124 = vadd.f32 %v832, %v1123
      %v1125 = vpop.f32.mrf.mxu0
      %v1126 = vpop.f32.mrf.mxu0
      %v1127 = vadd.f32 %v835, %v1126
      %v1128 = vpop.f32.mrf.mxu0
      %1129 = vmatprep.mubr.bf16.mxu0 0
      %1130 = vmatmul.mubr.bf16.gmra.mxu0 %v1012
      %v1131 = vpop.f32.mrf.mxu0
      %v1132 = vadd.f32 %v840, %v1131
      %v1133 = vpop.f32.mrf.mxu0
      %v1134 = vpop.f32.mrf.mxu0
      %v1135 = vadd.f32 %v843, %v1134
      %v1136 = vpop.f32.mrf.mxu0
      %1137 = vmatprep.mubr.bf16.mxu0 0
      %1138 = vmatmul.mubr.bf16.gmra.mxu0 %v1015
      %v1139 = vpop.f32.mrf.mxu0
      %v1140 = vadd.f32 %v848, %v1139
      %v1141 = vpop.f32.mrf.mxu0
      %v1142 = vpop.f32.mrf.mxu0
      %v1143 = vadd.f32 %v851, %v1142
      %v1144 = vpop.f32.mrf.mxu0
      %1145 = vmatprep.mubr.bf16.mxu0 0
      %1146 = vmatmul.mubr.bf16.gmra.mxu0 %v1018
      %v1147 = vpop.f32.mrf.mxu0
      %v1148 = vadd.f32 %v856, %v1147
      %v1149 = vpop.f32.mrf.mxu0
      %v1150 = vpop.f32.mrf.mxu0
      %v1151 = vadd.f32 %v859, %v1150
      %v1152 = vpop.f32.mrf.mxu0
      %1153 = vmatprep.mubr.bf16.mxu0 0
      %1154 = vmatmul.mubr.bf16.gmra.mxu0 %v1021
      %v1155 = vpop.f32.mrf.mxu0
      %v1156 = vadd.f32 %v864, %v1155
      %v1157 = vpop.f32.mrf.mxu0
      %v1158 = vpop.f32.mrf.mxu0
      %v1159 = vadd.f32 %v867, %v1158
      %v1160 = vpop.f32.mrf.mxu0
      %1161 = vmatprep.mubr.bf16.mxu0 0
      %1162 = vmatmul.mubr.bf16.gmra.mxu0 %v1024
      %v1163 = vpop.f32.mrf.mxu0
      %v1164 = vadd.f32 %v872, %v1163
      %v1165 = vpop.f32.mrf.mxu0
      %v1166 = vpop.f32.mrf.mxu0
      %v1167 = vadd.f32 %v875, %v1166
      %v1168 = vpop.f32.mrf.mxu0
      %1169 = vmatprep.mubr.bf16.mxu0 0
      %1170 = vmatmul.mubr.bf16.gmra.mxu0 %v1027
      %v1171 = vpop.f32.mrf.mxu0
      %v1172 = vadd.f32 %v880, %v1171
      %v1173 = vpop.f32.mrf.mxu0
      %v1174 = vpop.f32.mrf.mxu0
      %v1175 = vadd.f32 %v883, %v1174
      %v1176 = vpop.f32.mrf.mxu0
      %1177 = vmatprep.mubr.bf16.mxu0 0
      %1178 = vmatmul.mubr.bf16.gmra.mxu0 %v1030
      %v1179 = vpop.f32.mrf.mxu0
      %v1180 = vadd.f32 %v888, %v1179
      %v1181 = vpop.f32.mrf.mxu0
      %v1182 = vpop.f32.mrf.mxu0
      %v1183 = vadd.f32 %v891, %v1182
      %v1184 = vpop.f32.mrf.mxu0
      %1185 = vmatprep.mubr.bf16.mxu0 0
      %1186 = vmatmul.mubr.bf16.gmra.mxu0 %v1033
      %v1187 = vpop.f32.mrf.mxu0
      %v1188 = vadd.f32 %v896, %v1187
      %v1189 = vpop.f32.mrf.mxu0
      %v1190 = vpop.f32.mrf.mxu0
      %v1191 = vadd.f32 %v899, %v1190
      %v1192 = vpop.f32.mrf.mxu0
      %1193 = vmatprep.mubr.bf16.mxu0 0
      %1194 = vmatmul.mubr.bf16.gmra.mxu0 %v1036
      %v1195 = vpop.f32.mrf.mxu0
      %v1196 = vadd.f32 %v904, %v1195
      %v1197 = vpop.f32.mrf.mxu0
      %v1198 = vpop.f32.mrf.mxu0
      %v1199 = vadd.f32 %v907, %v1198
      %v1200 = vpop.f32.mrf.mxu0
      %1201 = vdwg.mxu0
      %v1202 = vld [vmem:[%s209] sm:$0xe]
      %v1203 = vld [vmem:[%s209 + $0xc] sm:$0xe]
      %v1204 = vld [vmem:[%s209 + $0x18] sm:$0xe]
      %v1205 = vld [vmem:[%s209 + $0x24] sm:$0xe]
      %v1206 = vld [vmem:[%s209 + $0x30] sm:$0xe]
      %v1207 = vld [vmem:[%s209 + $0x3c] sm:$0xe]
      %v1208 = vld [vmem:[%s209 + $0x48] sm:$0xe]
      %v1209 = vld [vmem:[%s209 + $0x54] sm:$0xe]
      %v1210 = vld [vmem:[%s209 + $0x60] sm:$0xe]
      %v1211 = vld [vmem:[%s209 + $0x6c] sm:$0xe]
      %v1212 = vld [vmem:[%s209 + $0x78] sm:$0xe]
      %v1213 = vld [vmem:[%s209 + $0x84] sm:$0xe]
      %v1214 = vld [vmem:[%s209 + $0x90] sm:$0xe]
      %v1215 = vld [vmem:[%s209 + $0x9c] sm:$0xe]
      %v1216 = vld [vmem:[%s209 + $0xa8] sm:$0xe]
      %v1217 = vld [vmem:[%s209 + $0xb4] sm:$0xe]
      %vm1250 = vcmask 1042432
      %vm1251 = vcmask 1046532
      %vm1252 = vmor %vm1250, %vm1251
      %v1253 = vrot.slane %v1202, 5
      %v1254 = vrot.slane %v1253, 4
      %v1255 = vrot.slane %v211, 5
      %v1256 = vsel %vm1252, %v1254, %v1255
      %v1257 = vrot.slane %v1255, 4
      %v1258 = vrot.slane %v243, 5
      %v1259 = vsel %vm1252, %v1257, %v1258
      %v1260 = vrot.slane %v1203, 5
      %v1261 = vrot.slane %v1260, 4
      %v1262 = vrot.slane %v213, 5
      %v1263 = vsel %vm1252, %v1261, %v1262
      %v1264 = vrot.slane %v1262, 4
      %v1265 = vrot.slane %v244, 5
      %v1266 = vsel %vm1252, %v1264, %v1265
      %v1267 = vrot.slane %v1204, 5
      %v1268 = vrot.slane %v1267, 4
      %v1269 = vrot.slane %v215, 5
      %v1270 = vsel %vm1252, %v1268, %v1269
      %v1271 = vrot.slane %v1269, 4
      %v1272 = vrot.slane %v245, 5
      %v1273 = vsel %vm1252, %v1271, %v1272
      %v1274 = vrot.slane %v1205, 5
      %v1275 = vrot.slane %v1274, 4
      %v1276 = vrot.slane %v217, 5
      %v1277 = vsel %vm1252, %v1275, %v1276
      %v1278 = vrot.slane %v1276, 4
      %v1279 = vrot.slane %v246, 5
      %v1280 = vsel %vm1252, %v1278, %v1279
      %v1281 = vrot.slane %v1206, 5
      %v1282 = vrot.slane %v1281, 4
      %v1283 = vrot.slane %v219, 5
      %v1284 = vsel %vm1252, %v1282, %v1283
      %v1285 = vrot.slane %v1283, 4
      %v1286 = vrot.slane %v247, 5
      %v1287 = vsel %vm1252, %v1285, %v1286
      %v1288 = vrot.slane %v1207, 5
      %v1289 = vrot.slane %v1288, 4
      %v1290 = vrot.slane %v221, 5
      %v1291 = vsel %vm1252, %v1289, %v1290
      %v1292 = vrot.slane %v1290, 4
      %v1293 = vrot.slane %v248, 5
      %v1294 = vsel %vm1252, %v1292, %v1293
      %v1295 = vrot.slane %v1208, 5
      %v1296 = vrot.slane %v1295, 4
      %v1297 = vrot.slane %v223, 5
      %v1298 = vsel %vm1252, %v1296, %v1297
      %v1299 = vrot.slane %v1297, 4
      %v1300 = vrot.slane %v249, 5
      %v1301 = vsel %vm1252, %v1299, %v1300
      %v1302 = vrot.slane %v1209, 5
      %v1303 = vrot.slane %v1302, 4
      %v1304 = vrot.slane %v225, 5
      %v1305 = vsel %vm1252, %v1303, %v1304
      %v1306 = vrot.slane %v1304, 4
      %v1307 = vrot.slane %v250, 5
      %v1308 = vsel %vm1252, %v1306, %v1307
      %v1309 = vrot.slane %v1210, 5
      %v1310 = vrot.slane %v1309, 4
      %v1311 = vrot.slane %v227, 5
      %v1312 = vsel %vm1252, %v1310, %v1311
      %v1313 = vrot.slane %v1311, 4
      %v1314 = vrot.slane %v251, 5
      %v1315 = vsel %vm1252, %v1313, %v1314
      %v1316 = vrot.slane %v1211, 5
      %v1317 = vrot.slane %v1316, 4
      %v1318 = vrot.slane %v229, 5
      %v1319 = vsel %vm1252, %v1317, %v1318
      %v1320 = vrot.slane %v1318, 4
      %v1321 = vrot.slane %v252, 5
      %v1322 = vsel %vm1252, %v1320, %v1321
      %v1323 = vrot.slane %v1212, 5
      %v1324 = vrot.slane %v1323, 4
      %v1325 = vrot.slane %v231, 5
      %v1326 = vsel %vm1252, %v1324, %v1325
      %v1327 = vrot.slane %v1325, 4
      %v1328 = vrot.slane %v253, 5
      %v1329 = vsel %vm1252, %v1327, %v1328
      %v1330 = vrot.slane %v1213, 5
      %v1331 = vrot.slane %v1330, 4
      %v1332 = vrot.slane %v233, 5
      %v1333 = vsel %vm1252, %v1331, %v1332
      %v1334 = vrot.slane %v1332, 4
      %v1335 = vrot.slane %v254, 5
      %v1336 = vsel %vm1252, %v1334, %v1335
      %v1337 = vrot.slane %v1214, 5
      %v1338 = vrot.slane %v1337, 4
      %v1339 = vrot.slane %v235, 5
      %v1340 = vsel %vm1252, %v1338, %v1339
      %v1341 = vrot.slane %v1339, 4
      %v1342 = vrot.slane %v255, 5
      %v1343 = vsel %vm1252, %v1341, %v1342
      %v1344 = vrot.slane %v1215, 5
      %v1345 = vrot.slane %v1344, 4
      %v1346 = vrot.slane %v237, 5
      %v1347 = vsel %vm1252, %v1345, %v1346
      %v1348 = vrot.slane %v1346, 4
      %v1349 = vrot.slane %v256, 5
      %v1350 = vsel %vm1252, %v1348, %v1349
      %v1351 = vrot.slane %v1216, 5
      %v1352 = vrot.slane %v1351, 4
      %v1353 = vrot.slane %v239, 5
      %v1354 = vsel %vm1252, %v1352, %v1353
      %v1355 = vrot.slane %v1353, 4
      %v1356 = vrot.slane %v257, 5
      %v1357 = vsel %vm1252, %v1355, %v1356
      %v1358 = vrot.slane %v1217, 5
      %v1359 = vrot.slane %v1358, 4
      %v1360 = vrot.slane %v241, 5
      %v1361 = vsel %vm1252, %v1359, %v1360
      %v1362 = vrot.slane %v1360, 4
      %v1363 = vrot.slane %v258, 5
      %v1364 = vsel %vm1252, %v1362, %v1363
      %s1365 = scalar_lea.vmem %s1, 4
      %v1366 = vld [vmem:[%s1365] sm:$0x3]
      %v1367 = vunpack.c.l.b16 %v1256
      %v1368 = vunpack.c.l.b16 %v1259
      %v1369 = vunpack.c.l.b16 %v1263
      %v1370 = vunpack.c.l.b16 %v1266
      %v1371 = vunpack.c.l.b16 %v1270
      %v1372 = vunpack.c.l.b16 %v1273
      %v1373 = vunpack.c.l.b16 %v1277
      %v1374 = vunpack.c.l.b16 %v1280
      %v1375 = vunpack.c.l.b16 %v1284
      %v1376 = vunpack.c.l.b16 %v1287
      %v1377 = vunpack.c.l.b16 %v1291
      %v1378 = vunpack.c.l.b16 %v1294
      %v1379 = vunpack.c.l.b16 %v1298
      %v1380 = vunpack.c.l.b16 %v1301
      %v1381 = vunpack.c.l.b16 %v1305
      %v1382 = vunpack.c.l.b16 %v1308
      %v1383 = vunpack.c.l.b16 %v1312
      %v1384 = vunpack.c.l.b16 %v1315
      %v1385 = vunpack.c.l.b16 %v1319
      %v1386 = vunpack.c.l.b16 %v1322
      %v1387 = vunpack.c.l.b16 %v1326
      %v1388 = vunpack.c.l.b16 %v1329
      %v1389 = vunpack.c.l.b16 %v1333
      %v1390 = vunpack.c.l.b16 %v1336
      %v1391 = vunpack.c.l.b16 %v1340
      %v1392 = vunpack.c.l.b16 %v1343
      %v1393 = vunpack.c.l.b16 %v1347
      %v1394 = vunpack.c.l.b16 %v1350
      %v1395 = vunpack.c.l.b16 %v1354
      %v1396 = vunpack.c.l.b16 %v1357
      %v1397 = vunpack.c.l.b16 %v1361
      %v1398 = vunpack.c.l.b16 %v1364
      %v1399 = vpack.c.b16 %v1368, %v1367
      %v1400 = vpack.c.b16 %v1370, %v1369
      %v1401 = vpack.c.b16 %v1372, %v1371
      %v1402 = vpack.c.b16 %v1374, %v1373
      %v1403 = vpack.c.b16 %v1376, %v1375
      %v1404 = vpack.c.b16 %v1378, %v1377
      %v1405 = vpack.c.b16 %v1380, %v1379
      %v1406 = vpack.c.b16 %v1382, %v1381
      %v1407 = vpack.c.b16 %v1384, %v1383
      %v1408 = vpack.c.b16 %v1386, %v1385
      %v1409 = vpack.c.b16 %v1388, %v1387
      %v1410 = vpack.c.b16 %v1390, %v1389
      %v1411 = vpack.c.b16 %v1392, %v1391
      %v1412 = vpack.c.b16 %v1394, %v1393
      %v1413 = vpack.c.b16 %v1396, %v1395
      %v1414 = vpack.c.b16 %v1398, %v1397
      %v1416 = vsel %vm696, %v1399, 0
      %v1419 = vsel %vm696, %v1400, 0
      %v1422 = vsel %vm696, %v1401, 0
      %v1425 = vsel %vm696, %v1402, 0
      %v1428 = vsel %vm696, %v1403, 0
      %v1431 = vsel %vm696, %v1404, 0
      %v1434 = vsel %vm696, %v1405, 0
      %v1437 = vsel %vm696, %v1406, 0
      %v1440 = vsel %vm696, %v1407, 0
      %v1443 = vsel %vm696, %v1408, 0
      %v1446 = vsel %vm696, %v1409, 0
      %v1449 = vsel %vm696, %v1410, 0
      %v1452 = vsel %vm696, %v1411, 0
      %v1455 = vsel %vm696, %v1412, 0
      %v1458 = vsel %vm696, %v1413, 0
      %v1461 = vsel %vm696, %v1414, 0
      %v1464 = vsel %vm745, %v1366, 0
      %1466 = vmatprep.subr.bf16.mxu0 0
      %1467 = vmatpush1.bf16.msra.mxu0 0
      %1468 = vmatprep.subr.bf16.mxu0 0
      %1469 = vmatpush1.bf16.msra.mxu0 0
      %1470 = vmatprep.subr.bf16.mxu0 0
      %1471 = vmatpush1.bf16.msra.mxu0 0
      %1472 = vmatprep.subr.bf16.mxu0 0
      %1473 = vmatpush1.bf16.msra.mxu0 0
      %1474 = vmatprep.subr.bf16.mxu0 0
      %1475 = vmatpush1.bf16.msra.mxu0 0
      %1476 = vmatprep.subr.bf16.mxu0 0
      %1477 = vmatpush1.bf16.msra.mxu0 0
      %1478 = vmatprep.subr.bf16.mxu0 0
      %1479 = vmatpush1.bf16.msra.mxu0 0
      %1480 = vmatprep.subr.bf16.mxu0 0
      %1481 = vmatpush1.bf16.msra.mxu0 %v1464
      %1482 = vmatprep.subr.bf16.mxu0 0
      %1483 = vmatpush2.bf16.msra.mxu0 0
      %1484 = vmatprep.subr.bf16.mxu0 0
      %1485 = vmatpush2.bf16.msra.mxu0 0
      %1486 = vmatprep.subr.bf16.mxu0 0
      %1487 = vmatpush2.bf16.msra.mxu0 0
      %1488 = vmatprep.subr.bf16.mxu0 0
      %1489 = vmatpush2.bf16.msra.mxu0 0
      %1490 = vmatprep.subr.bf16.mxu0 0
      %1491 = vmatpush2.bf16.msra.mxu0 0
      %1492 = vmatprep.subr.bf16.mxu0 0
      %1493 = vmatpush2.bf16.msra.mxu0 0
      %1494 = vmatprep.subr.bf16.mxu0 0
      %1495 = vmatpush2.bf16.msra.mxu0 0
      %1496 = vmatprep.subr.bf16.mxu0 0
      %1497 = vmatpush2.bf16.msra.mxu0 0
      %1498 = vmatprep.mubr.bf16.mxu0 0
      %1499 = vmatmul.mubr.bf16.gmra.mxu0 %v1416
      %v1500 = vpop.f32.mrf.mxu0
      %v1501 = vadd.f32 0.0, %v1500
      %v1502 = vpop.f32.mrf.mxu0
      %v1503 = vpop.f32.mrf.mxu0
      %v1504 = vadd.f32 0.0, %v1503
      %v1505 = vpop.f32.mrf.mxu0
      %1506 = vmatprep.mubr.bf16.mxu0 0
      %1507 = vmatmul.mubr.bf16.gmra.mxu0 %v1419
      %v1508 = vpop.f32.mrf.mxu0
      %v1509 = vadd.f32 0.0, %v1508
      %v1510 = vpop.f32.mrf.mxu0
      %v1511 = vpop.f32.mrf.mxu0
      %v1512 = vadd.f32 0.0, %v1511
      %v1513 = vpop.f32.mrf.mxu0
      %1514 = vmatprep.mubr.bf16.mxu0 0
      %1515 = vmatmul.mubr.bf16.gmra.mxu0 %v1422
      %v1516 = vpop.f32.mrf.mxu0
      %v1517 = vadd.f32 0.0, %v1516
      %v1518 = vpop.f32.mrf.mxu0
      %v1519 = vpop.f32.mrf.mxu0
      %v1520 = vadd.f32 0.0, %v1519
      %v1521 = vpop.f32.mrf.mxu0
      %1522 = vmatprep.mubr.bf16.mxu0 0
      %1523 = vmatmul.mubr.bf16.gmra.mxu0 %v1425
      %v1524 = vpop.f32.mrf.mxu0
      %v1525 = vadd.f32 0.0, %v1524
      %v1526 = vpop.f32.mrf.mxu0
      %v1527 = vpop.f32.mrf.mxu0
      %v1528 = vadd.f32 0.0, %v1527
      %v1529 = vpop.f32.mrf.mxu0
      %1530 = vmatprep.mubr.bf16.mxu0 0
      %1531 = vmatmul.mubr.bf16.gmra.mxu0 %v1428
      %v1532 = vpop.f32.mrf.mxu0
      %v1533 = vadd.f32 0.0, %v1532
      %v1534 = vpop.f32.mrf.mxu0
      %v1535 = vpop.f32.mrf.mxu0
      %v1536 = vadd.f32 0.0, %v1535
      %v1537 = vpop.f32.mrf.mxu0
      %1538 = vmatprep.mubr.bf16.mxu0 0
      %1539 = vmatmul.mubr.bf16.gmra.mxu0 %v1431
      %v1540 = vpop.f32.mrf.mxu0
      %v1541 = vadd.f32 0.0, %v1540
      %v1542 = vpop.f32.mrf.mxu0
      %v1543 = vpop.f32.mrf.mxu0
      %v1544 = vadd.f32 0.0, %v1543
      %v1545 = vpop.f32.mrf.mxu0
      %1546 = vmatprep.mubr.bf16.mxu0 0
      %1547 = vmatmul.mubr.bf16.gmra.mxu0 %v1434
      %v1548 = vpop.f32.mrf.mxu0
      %v1549 = vadd.f32 0.0, %v1548
      %v1550 = vpop.f32.mrf.mxu0
      %v1551 = vpop.f32.mrf.mxu0
      %v1552 = vadd.f32 0.0, %v1551
      %v1553 = vpop.f32.mrf.mxu0
      %1554 = vmatprep.mubr.bf16.mxu0 0
      %1555 = vmatmul.mubr.bf16.gmra.mxu0 %v1437
      %v1556 = vpop.f32.mrf.mxu0
      %v1557 = vadd.f32 0.0, %v1556
      %v1558 = vpop.f32.mrf.mxu0
      %v1559 = vpop.f32.mrf.mxu0
      %v1560 = vadd.f32 0.0, %v1559
      %v1561 = vpop.f32.mrf.mxu0
      %1562 = vmatprep.mubr.bf16.mxu0 0
      %1563 = vmatmul.mubr.bf16.gmra.mxu0 %v1440
      %v1564 = vpop.f32.mrf.mxu0
      %v1565 = vadd.f32 0.0, %v1564
      %v1566 = vpop.f32.mrf.mxu0
      %v1567 = vpop.f32.mrf.mxu0
      %v1568 = vadd.f32 0.0, %v1567
      %v1569 = vpop.f32.mrf.mxu0
      %1570 = vmatprep.mubr.bf16.mxu0 0
      %1571 = vmatmul.mubr.bf16.gmra.mxu0 %v1443
      %v1572 = vpop.f32.mrf.mxu0
      %v1573 = vadd.f32 0.0, %v1572
      %v1574 = vpop.f32.mrf.mxu0
      %v1575 = vpop.f32.mrf.mxu0
      %v1576 = vadd.f32 0.0, %v1575
      %v1577 = vpop.f32.mrf.mxu0
      %1578 = vmatprep.mubr.bf16.mxu0 0
      %1579 = vmatmul.mubr.bf16.gmra.mxu0 %v1446
      %v1580 = vpop.f32.mrf.mxu0
      %v1581 = vadd.f32 0.0, %v1580
      %v1582 = vpop.f32.mrf.mxu0
      %v1583 = vpop.f32.mrf.mxu0
      %v1584 = vadd.f32 0.0, %v1583
      %v1585 = vpop.f32.mrf.mxu0
      %1586 = vmatprep.mubr.bf16.mxu0 0
      %1587 = vmatmul.mubr.bf16.gmra.mxu0 %v1449
      %v1588 = vpop.f32.mrf.mxu0
      %v1589 = vadd.f32 0.0, %v1588
      %v1590 = vpop.f32.mrf.mxu0
      %v1591 = vpop.f32.mrf.mxu0
      %v1592 = vadd.f32 0.0, %v1591
      %v1593 = vpop.f32.mrf.mxu0
      %1594 = vmatprep.mubr.bf16.mxu0 0
      %1595 = vmatmul.mubr.bf16.gmra.mxu0 %v1452
      %v1596 = vpop.f32.mrf.mxu0
      %v1597 = vadd.f32 0.0, %v1596
      %v1598 = vpop.f32.mrf.mxu0
      %v1599 = vpop.f32.mrf.mxu0
      %v1600 = vadd.f32 0.0, %v1599
      %v1601 = vpop.f32.mrf.mxu0
      %1602 = vmatprep.mubr.bf16.mxu0 0
      %1603 = vmatmul.mubr.bf16.gmra.mxu0 %v1455
      %v1604 = vpop.f32.mrf.mxu0
      %v1605 = vadd.f32 0.0, %v1604
      %v1606 = vpop.f32.mrf.mxu0
      %v1607 = vpop.f32.mrf.mxu0
      %v1608 = vadd.f32 0.0, %v1607
      %v1609 = vpop.f32.mrf.mxu0
      %1610 = vmatprep.mubr.bf16.mxu0 0
      %1611 = vmatmul.mubr.bf16.gmra.mxu0 %v1458
      %v1612 = vpop.f32.mrf.mxu0
      %v1613 = vadd.f32 0.0, %v1612
      %v1614 = vpop.f32.mrf.mxu0
      %v1615 = vpop.f32.mrf.mxu0
      %v1616 = vadd.f32 0.0, %v1615
      %v1617 = vpop.f32.mrf.mxu0
      %1618 = vmatprep.mubr.bf16.mxu0 0
      %1619 = vmatmul.mubr.bf16.gmra.mxu0 %v1461
      %v1620 = vpop.f32.mrf.mxu0
      %v1621 = vadd.f32 0.0, %v1620
      %v1622 = vpop.f32.mrf.mxu0
      %v1623 = vpop.f32.mrf.mxu0
      %v1624 = vadd.f32 0.0, %v1623
      %v1625 = vpop.f32.mrf.mxu0
      %1626 = vdwg.mxu0
      %v1627 = vadd.f32 %v1076, %v1501
      %v1628 = vadd.f32 %v1079, %v1504
      %v1629 = vadd.f32 %v1084, %v1509
      %v1630 = vadd.f32 %v1087, %v1512
      %v1631 = vadd.f32 %v1092, %v1517
      %v1632 = vadd.f32 %v1095, %v1520
      %v1633 = vadd.f32 %v1100, %v1525
      %v1634 = vadd.f32 %v1103, %v1528
      %v1635 = vadd.f32 %v1108, %v1533
      %v1636 = vadd.f32 %v1111, %v1536
      %v1637 = vadd.f32 %v1116, %v1541
      %v1638 = vadd.f32 %v1119, %v1544
      %v1639 = vadd.f32 %v1124, %v1549
      %v1640 = vadd.f32 %v1127, %v1552
      %v1641 = vadd.f32 %v1132, %v1557
      %v1642 = vadd.f32 %v1135, %v1560
      %v1643 = vadd.f32 %v1140, %v1565
      %v1644 = vadd.f32 %v1143, %v1568
      %v1645 = vadd.f32 %v1148, %v1573
      %v1646 = vadd.f32 %v1151, %v1576
      %v1647 = vadd.f32 %v1156, %v1581
      %v1648 = vadd.f32 %v1159, %v1584
      %v1649 = vadd.f32 %v1164, %v1589
      %v1650 = vadd.f32 %v1167, %v1592
      %v1651 = vadd.f32 %v1172, %v1597
      %v1652 = vadd.f32 %v1175, %v1600
      %v1653 = vadd.f32 %v1180, %v1605
      %v1654 = vadd.f32 %v1183, %v1608
      %v1655 = vadd.f32 %v1188, %v1613
      %v1656 = vadd.f32 %v1191, %v1616
      %v1657 = vadd.f32 %v1196, %v1621
      %v1658 = vadd.f32 %v1199, %v1624
      %s1659 = sadd.s32 %s206, 1
      %s1660 = smul.u32 %s1659, 3
      %s1661 = smul.addr %s1660, 4
      %s1662 = scalar_lea.vmem %s190, %s1661
      %v1663 = vld [vmem:[%s1662] sm:$0xf]
      %v1664 = vld [vmem:[%s1662 + $0x4] sm:$0xf]
      %v1665 = vld [vmem:[%s1662 + $0xc] sm:$0xf]
      %v1666 = vld [vmem:[%s1662 + $0x10] sm:$0xf]
      %v1667 = vld [vmem:[%s1662 + $0x18] sm:$0xf]
      %v1668 = vld [vmem:[%s1662 + $0x1c] sm:$0xf]
      %v1669 = vld [vmem:[%s1662 + $0x24] sm:$0xf]
      %v1670 = vld [vmem:[%s1662 + $0x28] sm:$0xf]
      %v1671 = vld [vmem:[%s1662 + $0x30] sm:$0xf]
      %v1672 = vld [vmem:[%s1662 + $0x34] sm:$0xf]
      %v1673 = vld [vmem:[%s1662 + $0x3c] sm:$0xf]
      %v1674 = vld [vmem:[%s1662 + $0x40] sm:$0xf]
      %v1675 = vld [vmem:[%s1662 + $0x48] sm:$0xf]
      %v1676 = vld [vmem:[%s1662 + $0x4c] sm:$0xf]
      %v1677 = vld [vmem:[%s1662 + $0x54] sm:$0xf]
      %v1678 = vld [vmem:[%s1662 + $0x58] sm:$0xf]
      %v1679 = vld [vmem:[%s1662 + $0x60] sm:$0xf]
      %v1680 = vld [vmem:[%s1662 + $0x64] sm:$0xf]
      %v1681 = vld [vmem:[%s1662 + $0x6c] sm:$0xf]
      %v1682 = vld [vmem:[%s1662 + $0x70] sm:$0xf]
      %v1683 = vld [vmem:[%s1662 + $0x78] sm:$0xf]
      %v1684 = vld [vmem:[%s1662 + $0x7c] sm:$0xf]
      %v1685 = vld [vmem:[%s1662 + $0x84] sm:$0xf]
      %v1686 = vld [vmem:[%s1662 + $0x88] sm:$0xf]
      %v1687 = vld [vmem:[%s1662 + $0x90] sm:$0xf]
      %v1688 = vld [vmem:[%s1662 + $0x94] sm:$0xf]
      %v1689 = vld [vmem:[%s1662 + $0x9c] sm:$0xf]
      %v1690 = vld [vmem:[%s1662 + $0xa0] sm:$0xf]
      %v1691 = vld [vmem:[%s1662 + $0xa8] sm:$0xf]
      %v1692 = vld [vmem:[%s1662 + $0xac] sm:$0xf]
      %v1693 = vld [vmem:[%s1662 + $0xb4] sm:$0xf]
      %v1694 = vld [vmem:[%s1662 + $0xb8] sm:$0xf]
      %s1695 = scalar_lea.vmem %s1, 6
      %v1696 = vld [vmem:[%s1695] sm:$0x3]
      %v1729 = vunpack.c.l.b16 %v1663
      %v1730 = vunpack.c.l.b16 %v1664
      %v1731 = vunpack.c.l.b16 %v1665
      %v1732 = vunpack.c.l.b16 %v1666
      %v1733 = vunpack.c.l.b16 %v1667
      %v1734 = vunpack.c.l.b16 %v1668
      %v1735 = vunpack.c.l.b16 %v1669
      %v1736 = vunpack.c.l.b16 %v1670
      %v1737 = vunpack.c.l.b16 %v1671
      %v1738 = vunpack.c.l.b16 %v1672
      %v1739 = vunpack.c.l.b16 %v1673
      %v1740 = vunpack.c.l.b16 %v1674
      %v1741 = vunpack.c.l.b16 %v1675
      %v1742 = vunpack.c.l.b16 %v1676
      %v1743 = vunpack.c.l.b16 %v1677
      %v1744 = vunpack.c.l.b16 %v1678
      %v1745 = vunpack.c.l.b16 %v1679
      %v1746 = vunpack.c.l.b16 %v1680
      %v1747 = vunpack.c.l.b16 %v1681
      %v1748 = vunpack.c.l.b16 %v1682
      %v1749 = vunpack.c.l.b16 %v1683
      %v1750 = vunpack.c.l.b16 %v1684
      %v1751 = vunpack.c.l.b16 %v1685
      %v1752 = vunpack.c.l.b16 %v1686
      %v1753 = vunpack.c.l.b16 %v1687
      %v1754 = vunpack.c.l.b16 %v1688
      %v1755 = vunpack.c.l.b16 %v1689
      %v1756 = vunpack.c.l.b16 %v1690
      %v1757 = vunpack.c.l.b16 %v1691
      %v1758 = vunpack.c.l.b16 %v1692
      %v1759 = vunpack.c.l.b16 %v1693
      %v1760 = vunpack.c.l.b16 %v1694
      %v1761 = vpack.c.b16 %v1730, %v1729
      %v1762 = vpack.c.b16 %v1732, %v1731
      %v1763 = vpack.c.b16 %v1734, %v1733
      %v1764 = vpack.c.b16 %v1736, %v1735
      %v1765 = vpack.c.b16 %v1738, %v1737
      %v1766 = vpack.c.b16 %v1740, %v1739
      %v1767 = vpack.c.b16 %v1742, %v1741
      %v1768 = vpack.c.b16 %v1744, %v1743
      %v1769 = vpack.c.b16 %v1746, %v1745
      %v1770 = vpack.c.b16 %v1748, %v1747
      %v1771 = vpack.c.b16 %v1750, %v1749
      %v1772 = vpack.c.b16 %v1752, %v1751
      %v1773 = vpack.c.b16 %v1754, %v1753
      %v1774 = vpack.c.b16 %v1756, %v1755
      %v1775 = vpack.c.b16 %v1758, %v1757
      %v1776 = vpack.c.b16 %v1760, %v1759
      %v1778 = vsel %vm696, %v1761, 0
      %v1781 = vsel %vm696, %v1762, 0
      %v1784 = vsel %vm696, %v1763, 0
      %v1787 = vsel %vm696, %v1764, 0
      %v1790 = vsel %vm696, %v1765, 0
      %v1793 = vsel %vm696, %v1766, 0
      %v1796 = vsel %vm696, %v1767, 0
      %v1799 = vsel %vm696, %v1768, 0
      %v1802 = vsel %vm696, %v1769, 0
      %v1805 = vsel %vm696, %v1770, 0
      %v1808 = vsel %vm696, %v1771, 0
      %v1811 = vsel %vm696, %v1772, 0
      %v1814 = vsel %vm696, %v1773, 0
      %v1817 = vsel %vm696, %v1774, 0
      %v1820 = vsel %vm696, %v1775, 0
      %v1823 = vsel %vm696, %v1776, 0
      %v1826 = vsel %vm745, %v1696, 0
      %1828 = vmatprep.subr.bf16.mxu0 0
      %1829 = vmatpush1.bf16.msra.mxu0 0
      %1830 = vmatprep.subr.bf16.mxu0 0
      %1831 = vmatpush1.bf16.msra.mxu0 0
      %1832 = vmatprep.subr.bf16.mxu0 0
      %1833 = vmatpush1.bf16.msra.mxu0 0
      %1834 = vmatprep.subr.bf16.mxu0 0
      %1835 = vmatpush1.bf16.msra.mxu0 0
      %1836 = vmatprep.subr.bf16.mxu0 0
      %1837 = vmatpush1.bf16.msra.mxu0 0
      %1838 = vmatprep.subr.bf16.mxu0 0
      %1839 = vmatpush1.bf16.msra.mxu0 0
      %1840 = vmatprep.subr.bf16.mxu0 0
      %1841 = vmatpush1.bf16.msra.mxu0 0
      %1842 = vmatprep.subr.bf16.mxu0 0
      %1843 = vmatpush1.bf16.msra.mxu0 %v1826
      %1844 = vmatprep.subr.bf16.mxu0 0
      %1845 = vmatpush2.bf16.msra.mxu0 0
      %1846 = vmatprep.subr.bf16.mxu0 0
      %1847 = vmatpush2.bf16.msra.mxu0 0
      %1848 = vmatprep.subr.bf16.mxu0 0
      %1849 = vmatpush2.bf16.msra.mxu0 0
      %1850 = vmatprep.subr.bf16.mxu0 0
      %1851 = vmatpush2.bf16.msra.mxu0 0
      %1852 = vmatprep.subr.bf16.mxu0 0
      %1853 = vmatpush2.bf16.msra.mxu0 0
      %1854 = vmatprep.subr.bf16.mxu0 0
      %1855 = vmatpush2.bf16.msra.mxu0 0
      %1856 = vmatprep.subr.bf16.mxu0 0
      %1857 = vmatpush2.bf16.msra.mxu0 0
      %1858 = vmatprep.subr.bf16.mxu0 0
      %1859 = vmatpush2.bf16.msra.mxu0 0
      %1860 = vmatprep.mubr.bf16.mxu0 0
      %1861 = vmatmul.mubr.bf16.gmra.mxu0 %v1778
      %v1862 = vpop.f32.mrf.mxu0
      %v1863 = vadd.f32 0.0, %v1862
      %v1864 = vpop.f32.mrf.mxu0
      %v1865 = vpop.f32.mrf.mxu0
      %v1866 = vadd.f32 0.0, %v1865
      %v1867 = vpop.f32.mrf.mxu0
      %1868 = vmatprep.mubr.bf16.mxu0 0
      %1869 = vmatmul.mubr.bf16.gmra.mxu0 %v1781
      %v1870 = vpop.f32.mrf.mxu0
      %v1871 = vadd.f32 0.0, %v1870
      %v1872 = vpop.f32.mrf.mxu0
      %v1873 = vpop.f32.mrf.mxu0
      %v1874 = vadd.f32 0.0, %v1873
      %v1875 = vpop.f32.mrf.mxu0
      %1876 = vmatprep.mubr.bf16.mxu0 0
      %1877 = vmatmul.mubr.bf16.gmra.mxu0 %v1784
      %v1878 = vpop.f32.mrf.mxu0
      %v1879 = vadd.f32 0.0, %v1878
      %v1880 = vpop.f32.mrf.mxu0
      %v1881 = vpop.f32.mrf.mxu0
      %v1882 = vadd.f32 0.0, %v1881
      %v1883 = vpop.f32.mrf.mxu0
      %1884 = vmatprep.mubr.bf16.mxu0 0
      %1885 = vmatmul.mubr.bf16.gmra.mxu0 %v1787
      %v1886 = vpop.f32.mrf.mxu0
      %v1887 = vadd.f32 0.0, %v1886
      %v1888 = vpop.f32.mrf.mxu0
      %v1889 = vpop.f32.mrf.mxu0
      %v1890 = vadd.f32 0.0, %v1889
      %v1891 = vpop.f32.mrf.mxu0
      %1892 = vmatprep.mubr.bf16.mxu0 0
      %1893 = vmatmul.mubr.bf16.gmra.mxu0 %v1790
      %v1894 = vpop.f32.mrf.mxu0
      %v1895 = vadd.f32 0.0, %v1894
      %v1896 = vpop.f32.mrf.mxu0
      %v1897 = vpop.f32.mrf.mxu0
      %v1898 = vadd.f32 0.0, %v1897
      %v1899 = vpop.f32.mrf.mxu0
      %1900 = vmatprep.mubr.bf16.mxu0 0
      %1901 = vmatmul.mubr.bf16.gmra.mxu0 %v1793
      %v1902 = vpop.f32.mrf.mxu0
      %v1903 = vadd.f32 0.0, %v1902
      %v1904 = vpop.f32.mrf.mxu0
      %v1905 = vpop.f32.mrf.mxu0
      %v1906 = vadd.f32 0.0, %v1905
      %v1907 = vpop.f32.mrf.mxu0
      %1908 = vmatprep.mubr.bf16.mxu0 0
      %1909 = vmatmul.mubr.bf16.gmra.mxu0 %v1796
      %v1910 = vpop.f32.mrf.mxu0
      %v1911 = vadd.f32 0.0, %v1910
      %v1912 = vpop.f32.mrf.mxu0
      %v1913 = vpop.f32.mrf.mxu0
      %v1914 = vadd.f32 0.0, %v1913
      %v1915 = vpop.f32.mrf.mxu0
      %1916 = vmatprep.mubr.bf16.mxu0 0
      %1917 = vmatmul.mubr.bf16.gmra.mxu0 %v1799
      %v1918 = vpop.f32.mrf.mxu0
      %v1919 = vadd.f32 0.0, %v1918
      %v1920 = vpop.f32.mrf.mxu0
      %v1921 = vpop.f32.mrf.mxu0
      %v1922 = vadd.f32 0.0, %v1921
      %v1923 = vpop.f32.mrf.mxu0
      %1924 = vmatprep.mubr.bf16.mxu0 0
      %1925 = vmatmul.mubr.bf16.gmra.mxu0 %v1802
      %v1926 = vpop.f32.mrf.mxu0
      %v1927 = vadd.f32 0.0, %v1926
      %v1928 = vpop.f32.mrf.mxu0
      %v1929 = vpop.f32.mrf.mxu0
      %v1930 = vadd.f32 0.0, %v1929
      %v1931 = vpop.f32.mrf.mxu0
      %1932 = vmatprep.mubr.bf16.mxu0 0
      %1933 = vmatmul.mubr.bf16.gmra.mxu0 %v1805
      %v1934 = vpop.f32.mrf.mxu0
      %v1935 = vadd.f32 0.0, %v1934
      %v1936 = vpop.f32.mrf.mxu0
      %v1937 = vpop.f32.mrf.mxu0
      %v1938 = vadd.f32 0.0, %v1937
      %v1939 = vpop.f32.mrf.mxu0
      %1940 = vmatprep.mubr.bf16.mxu0 0
      %1941 = vmatmul.mubr.bf16.gmra.mxu0 %v1808
      %v1942 = vpop.f32.mrf.mxu0
      %v1943 = vadd.f32 0.0, %v1942
      %v1944 = vpop.f32.mrf.mxu0
      %v1945 = vpop.f32.mrf.mxu0
      %v1946 = vadd.f32 0.0, %v1945
      %v1947 = vpop.f32.mrf.mxu0
      %1948 = vmatprep.mubr.bf16.mxu0 0
      %1949 = vmatmul.mubr.bf16.gmra.mxu0 %v1811
      %v1950 = vpop.f32.mrf.mxu0
      %v1951 = vadd.f32 0.0, %v1950
      %v1952 = vpop.f32.mrf.mxu0
      %v1953 = vpop.f32.mrf.mxu0
      %v1954 = vadd.f32 0.0, %v1953
      %v1955 = vpop.f32.mrf.mxu0
      %1956 = vmatprep.mubr.bf16.mxu0 0
      %1957 = vmatmul.mubr.bf16.gmra.mxu0 %v1814
      %v1958 = vpop.f32.mrf.mxu0
      %v1959 = vadd.f32 0.0, %v1958
      %v1960 = vpop.f32.mrf.mxu0
      %v1961 = vpop.f32.mrf.mxu0
      %v1962 = vadd.f32 0.0, %v1961
      %v1963 = vpop.f32.mrf.mxu0
      %1964 = vmatprep.mubr.bf16.mxu0 0
      %1965 = vmatmul.mubr.bf16.gmra.mxu0 %v1817
      %v1966 = vpop.f32.mrf.mxu0
      %v1967 = vadd.f32 0.0, %v1966
      %v1968 = vpop.f32.mrf.mxu0
      %v1969 = vpop.f32.mrf.mxu0
      %v1970 = vadd.f32 0.0, %v1969
      %v1971 = vpop.f32.mrf.mxu0
      %1972 = vmatprep.mubr.bf16.mxu0 0
      %1973 = vmatmul.mubr.bf16.gmra.mxu0 %v1820
      %v1974 = vpop.f32.mrf.mxu0
      %v1975 = vadd.f32 0.0, %v1974
      %v1976 = vpop.f32.mrf.mxu0
      %v1977 = vpop.f32.mrf.mxu0
      %v1978 = vadd.f32 0.0, %v1977
      %v1979 = vpop.f32.mrf.mxu0
      %1980 = vmatprep.mubr.bf16.mxu0 0
      %1981 = vmatmul.mubr.bf16.gmra.mxu0 %v1823
      %v1982 = vpop.f32.mrf.mxu0
      %v1983 = vadd.f32 0.0, %v1982
      %v1984 = vpop.f32.mrf.mxu0
      %v1985 = vpop.f32.mrf.mxu0
      %v1986 = vadd.f32 0.0, %v1985
      %v1987 = vpop.f32.mrf.mxu0
      %1988 = vdwg.mxu0
      %v1989 = vadd.f32 %v1627, %v1863
      %v1990 = vadd.f32 %v1628, %v1866
      %v1991 = vadd.f32 %v1629, %v1871
      %v1992 = vadd.f32 %v1630, %v1874
      %v1993 = vadd.f32 %v1631, %v1879
      %v1994 = vadd.f32 %v1632, %v1882
      %v1995 = vadd.f32 %v1633, %v1887
      %v1996 = vadd.f32 %v1634, %v1890
      %v1997 = vadd.f32 %v1635, %v1895
      %v1998 = vadd.f32 %v1636, %v1898
      %v1999 = vadd.f32 %v1637, %v1903
      %v2000 = vadd.f32 %v1638, %v1906
      %v2001 = vadd.f32 %v1639, %v1911
      %v2002 = vadd.f32 %v1640, %v1914
      %v2003 = vadd.f32 %v1641, %v1919
      %v2004 = vadd.f32 %v1642, %v1922
      %v2005 = vadd.f32 %v1643, %v1927
      %v2006 = vadd.f32 %v1644, %v1930
      %v2007 = vadd.f32 %v1645, %v1935
      %v2008 = vadd.f32 %v1646, %v1938
      %v2009 = vadd.f32 %v1647, %v1943
      %v2010 = vadd.f32 %v1648, %v1946
      %v2011 = vadd.f32 %v1649, %v1951
      %v2012 = vadd.f32 %v1650, %v1954
      %v2013 = vadd.f32 %v1651, %v1959
      %v2014 = vadd.f32 %v1652, %v1962
      %v2015 = vadd.f32 %v1653, %v1967
      %v2016 = vadd.f32 %v1654, %v1970
      %v2017 = vadd.f32 %v1655, %v1975
      %v2018 = vadd.f32 %v1656, %v1978
      %v2019 = vadd.f32 %v1657, %v1983
      %v2020 = vadd.f32 %v1658, %v1986
      %v2021 = vld [vmem:[%s1662] sm:$0xf]
      %v2022 = vld [vmem:[%s1662 + $0x4] sm:$0xf]
      %v2023 = vld [vmem:[%s1662 + $0x8] sm:$0x1]
      %v2024 = vld [vmem:[%s1662 + $0xc] sm:$0xf]
      %v2025 = vld [vmem:[%s1662 + $0x10] sm:$0xf]
      %v2026 = vld [vmem:[%s1662 + $0x14] sm:$0x1]
      %v2027 = vld [vmem:[%s1662 + $0x18] sm:$0xf]
      %v2028 = vld [vmem:[%s1662 + $0x1c] sm:$0xf]
      %v2029 = vld [vmem:[%s1662 + $0x20] sm:$0x1]
      %v2030 = vld [vmem:[%s1662 + $0x24] sm:$0xf]
      %v2031 = vld [vmem:[%s1662 + $0x28] sm:$0xf]
      %v2032 = vld [vmem:[%s1662 + $0x2c] sm:$0x1]
      %v2033 = vld [vmem:[%s1662 + $0x30] sm:$0xf]
      %v2034 = vld [vmem:[%s1662 + $0x34] sm:$0xf]
      %v2035 = vld [vmem:[%s1662 + $0x38] sm:$0x1]
      %v2036 = vld [vmem:[%s1662 + $0x3c] sm:$0xf]
      %v2037 = vld [vmem:[%s1662 + $0x40] sm:$0xf]
      %v2038 = vld [vmem:[%s1662 + $0x44] sm:$0x1]
      %v2039 = vld [vmem:[%s1662 + $0x48] sm:$0xf]
      %v2040 = vld [vmem:[%s1662 + $0x4c] sm:$0xf]
      %v2041 = vld [vmem:[%s1662 + $0x50] sm:$0x1]
      %v2042 = vld [vmem:[%s1662 + $0x54] sm:$0xf]
      %v2043 = vld [vmem:[%s1662 + $0x58] sm:$0xf]
      %v2044 = vld [vmem:[%s1662 + $0x5c] sm:$0x1]
      %v2045 = vld [vmem:[%s1662 + $0x60] sm:$0xf]
      %v2046 = vld [vmem:[%s1662 + $0x64] sm:$0xf]
      %v2047 = vld [vmem:[%s1662 + $0x68] sm:$0x1]
      %v2048 = vld [vmem:[%s1662 + $0x6c] sm:$0xf]
      %v2049 = vld [vmem:[%s1662 + $0x70] sm:$0xf]
      %v2050 = vld [vmem:[%s1662 + $0x74] sm:$0x1]
      %v2051 = vld [vmem:[%s1662 + $0x78] sm:$0xf]
      %v2052 = vld [vmem:[%s1662 + $0x7c] sm:$0xf]
      %v2053 = vld [vmem:[%s1662 + $0x80] sm:$0x1]
      %v2054 = vld [vmem:[%s1662 + $0x84] sm:$0xf]
      %v2055 = vld [vmem:[%s1662 + $0x88] sm:$0xf]
      %v2056 = vld [vmem:[%s1662 + $0x8c] sm:$0x1]
      %v2057 = vld [vmem:[%s1662 + $0x90] sm:$0xf]
      %v2058 = vld [vmem:[%s1662 + $0x94] sm:$0xf]
      %v2059 = vld [vmem:[%s1662 + $0x98] sm:$0x1]
      %v2060 = vld [vmem:[%s1662 + $0x9c] sm:$0xf]
      %v2061 = vld [vmem:[%s1662 + $0xa0] sm:$0xf]
      %v2062 = vld [vmem:[%s1662 + $0xa4] sm:$0x1]
      %v2063 = vld [vmem:[%s1662 + $0xa8] sm:$0xf]
      %v2064 = vld [vmem:[%s1662 + $0xac] sm:$0xf]
      %v2065 = vld [vmem:[%s1662 + $0xb0] sm:$0x1]
      %v2066 = vld [vmem:[%s1662 + $0xb4] sm:$0xf]
      %v2067 = vld [vmem:[%s1662 + $0xb8] sm:$0xf]
      %v2068 = vld [vmem:[%s1662 + $0xbc] sm:$0x1]
      %v2070 = vshrl.u32 %v2021, 16
      %v2072 = vrot.slane %v2070, 4
      %v2073 = vshll.u32 %v2021, 16
      %v2075 = vrot.slane %v2073, 5
      %v2076 = vor.u32 %v2072, %v2075
      %v2077 = vrot.slane %v2076, 4
      %v2079 = vshll.u32 %v2022, 16
      %v2081 = vrot.slane %v2079, 5
      %v2082 = vsel %vm261, %v2077, %v2081
      %v2083 = vshrl.u32 %v2022, 16
      %v2085 = vrot.slane %v2083, 4
      %v2086 = vor.u32 %v2085, %v2081
      %v2087 = vrot.slane %v2086, 4
      %v2089 = vshll.u32 %v2023, 16
      %v2091 = vrot.slane %v2089, 5
      %v2092 = vsel %vm261, %v2087, %v2091
      %v2094 = vshrl.u32 %v2024, 16
      %v2096 = vrot.slane %v2094, 4
      %v2097 = vshll.u32 %v2024, 16
      %v2099 = vrot.slane %v2097, 5
      %v2100 = vor.u32 %v2096, %v2099
      %v2101 = vrot.slane %v2100, 4
      %v2103 = vshll.u32 %v2025, 16
      %v2105 = vrot.slane %v2103, 5
      %v2106 = vsel %vm261, %v2101, %v2105
      %v2107 = vshrl.u32 %v2025, 16
      %v2109 = vrot.slane %v2107, 4
      %v2110 = vor.u32 %v2109, %v2105
      %v2111 = vrot.slane %v2110, 4
      %v2113 = vshll.u32 %v2026, 16
      %v2115 = vrot.slane %v2113, 5
      %v2116 = vsel %vm261, %v2111, %v2115
      %v2118 = vshrl.u32 %v2027, 16
      %v2120 = vrot.slane %v2118, 4
      %v2121 = vshll.u32 %v2027, 16
      %v2123 = vrot.slane %v2121, 5
      %v2124 = vor.u32 %v2120, %v2123
      %v2125 = vrot.slane %v2124, 4
      %v2127 = vshll.u32 %v2028, 16
      %v2129 = vrot.slane %v2127, 5
      %v2130 = vsel %vm261, %v2125, %v2129
      %v2131 = vshrl.u32 %v2028, 16
      %v2133 = vrot.slane %v2131, 4
      %v2134 = vor.u32 %v2133, %v2129
      %v2135 = vrot.slane %v2134, 4
      %v2137 = vshll.u32 %v2029, 16
      %v2139 = vrot.slane %v2137, 5
      %v2140 = vsel %vm261, %v2135, %v2139
      %v2142 = vshrl.u32 %v2030, 16
      %v2144 = vrot.slane %v2142, 4
      %v2145 = vshll.u32 %v2030, 16
      %v2147 = vrot.slane %v2145, 5
      %v2148 = vor.u32 %v2144, %v2147
      %v2149 = vrot.slane %v2148, 4
      %v2151 = vshll.u32 %v2031, 16
      %v2153 = vrot.slane %v2151, 5
      %v2154 = vsel %vm261, %v2149, %v2153
      %v2155 = vshrl.u32 %v2031, 16
      %v2157 = vrot.slane %v2155, 4
      %v2158 = vor.u32 %v2157, %v2153
      %v2159 = vrot.slane %v2158, 4
      %v2161 = vshll.u32 %v2032, 16
      %v2163 = vrot.slane %v2161, 5
      %v2164 = vsel %vm261, %v2159, %v2163
      %v2166 = vshrl.u32 %v2033, 16
      %v2168 = vrot.slane %v2166, 4
      %v2169 = vshll.u32 %v2033, 16
      %v2171 = vrot.slane %v2169, 5
      %v2172 = vor.u32 %v2168, %v2171
      %v2173 = vrot.slane %v2172, 4
      %v2175 = vshll.u32 %v2034, 16
      %v2177 = vrot.slane %v2175, 5
      %v2178 = vsel %vm261, %v2173, %v2177
      %v2179 = vshrl.u32 %v2034, 16
      %v2181 = vrot.slane %v2179, 4
      %v2182 = vor.u32 %v2181, %v2177
      %v2183 = vrot.slane %v2182, 4
      %v2185 = vshll.u32 %v2035, 16
      %v2187 = vrot.slane %v2185, 5
      %v2188 = vsel %vm261, %v2183, %v2187
      %v2190 = vshrl.u32 %v2036, 16
      %v2192 = vrot.slane %v2190, 4
      %v2193 = vshll.u32 %v2036, 16
      %v2195 = vrot.slane %v2193, 5
      %v2196 = vor.u32 %v2192, %v2195
      %v2197 = vrot.slane %v2196, 4
      %v2199 = vshll.u32 %v2037, 16
      %v2201 = vrot.slane %v2199, 5
      %v2202 = vsel %vm261, %v2197, %v2201
      %v2203 = vshrl.u32 %v2037, 16
      %v2205 = vrot.slane %v2203, 4
      %v2206 = vor.u32 %v2205, %v2201
      %v2207 = vrot.slane %v2206, 4
      %v2209 = vshll.u32 %v2038, 16
      %v2211 = vrot.slane %v2209, 5
      %v2212 = vsel %vm261, %v2207, %v2211
      %v2214 = vshrl.u32 %v2039, 16
      %v2216 = vrot.slane %v2214, 4
      %v2217 = vshll.u32 %v2039, 16
      %v2219 = vrot.slane %v2217, 5
      %v2220 = vor.u32 %v2216, %v2219
      %v2221 = vrot.slane %v2220, 4
      %v2223 = vshll.u32 %v2040, 16
      %v2225 = vrot.slane %v2223, 5
      %v2226 = vsel %vm261, %v2221, %v2225
      %v2227 = vshrl.u32 %v2040, 16
      %v2229 = vrot.slane %v2227, 4
      %v2230 = vor.u32 %v2229, %v2225
      %v2231 = vrot.slane %v2230, 4
      %v2233 = vshll.u32 %v2041, 16
      %v2235 = vrot.slane %v2233, 5
      %v2236 = vsel %vm261, %v2231, %v2235
      %v2238 = vshrl.u32 %v2042, 16
      %v2240 = vrot.slane %v2238, 4
      %v2241 = vshll.u32 %v2042, 16
      %v2243 = vrot.slane %v2241, 5
      %v2244 = vor.u32 %v2240, %v2243
      %v2245 = vrot.slane %v2244, 4
      %v2247 = vshll.u32 %v2043, 16
      %v2249 = vrot.slane %v2247, 5
      %v2250 = vsel %vm261, %v2245, %v2249
      %v2251 = vshrl.u32 %v2043, 16
      %v2253 = vrot.slane %v2251, 4
      %v2254 = vor.u32 %v2253, %v2249
      %v2255 = vrot.slane %v2254, 4
      %v2257 = vshll.u32 %v2044, 16
      %v2259 = vrot.slane %v2257, 5
      %v2260 = vsel %vm261, %v2255, %v2259
      %v2262 = vshrl.u32 %v2045, 16
      %v2264 = vrot.slane %v2262, 4
      %v2265 = vshll.u32 %v2045, 16
      %v2267 = vrot.slane %v2265, 5
      %v2268 = vor.u32 %v2264, %v2267
      %v2269 = vrot.slane %v2268, 4
      %v2271 = vshll.u32 %v2046, 16
      %v2273 = vrot.slane %v2271, 5
      %v2274 = vsel %vm261, %v2269, %v2273
      %v2275 = vshrl.u32 %v2046, 16
      %v2277 = vrot.slane %v2275, 4
      %v2278 = vor.u32 %v2277, %v2273
      %v2279 = vrot.slane %v2278, 4
      %v2281 = vshll.u32 %v2047, 16
      %v2283 = vrot.slane %v2281, 5
      %v2284 = vsel %vm261, %v2279, %v2283
      %v2286 = vshrl.u32 %v2048, 16
      %v2288 = vrot.slane %v2286, 4
      %v2289 = vshll.u32 %v2048, 16
      %v2291 = vrot.slane %v2289, 5
      %v2292 = vor.u32 %v2288, %v2291
      %v2293 = vrot.slane %v2292, 4
      %v2295 = vshll.u32 %v2049, 16
      %v2297 = vrot.slane %v2295, 5
      %v2298 = vsel %vm261, %v2293, %v2297
      %v2299 = vshrl.u32 %v2049, 16
      %v2301 = vrot.slane %v2299, 4
      %v2302 = vor.u32 %v2301, %v2297
      %v2303 = vrot.slane %v2302, 4
      %v2305 = vshll.u32 %v2050, 16
      %v2307 = vrot.slane %v2305, 5
      %v2308 = vsel %vm261, %v2303, %v2307
      %v2310 = vshrl.u32 %v2051, 16
      %v2312 = vrot.slane %v2310, 4
      %v2313 = vshll.u32 %v2051, 16
      %v2315 = vrot.slane %v2313, 5
      %v2316 = vor.u32 %v2312, %v2315
      %v2317 = vrot.slane %v2316, 4
      %v2319 = vshll.u32 %v2052, 16
      %v2321 = vrot.slane %v2319, 5
      %v2322 = vsel %vm261, %v2317, %v2321
      %v2323 = vshrl.u32 %v2052, 16
      %v2325 = vrot.slane %v2323, 4
      %v2326 = vor.u32 %v2325, %v2321
      %v2327 = vrot.slane %v2326, 4
      %v2329 = vshll.u32 %v2053, 16
      %v2331 = vrot.slane %v2329, 5
      %v2332 = vsel %vm261, %v2327, %v2331
      %v2334 = vshrl.u32 %v2054, 16
      %v2336 = vrot.slane %v2334, 4
      %v2337 = vshll.u32 %v2054, 16
      %v2339 = vrot.slane %v2337, 5
      %v2340 = vor.u32 %v2336, %v2339
      %v2341 = vrot.slane %v2340, 4
      %v2343 = vshll.u32 %v2055, 16
      %v2345 = vrot.slane %v2343, 5
      %v2346 = vsel %vm261, %v2341, %v2345
      %v2347 = vshrl.u32 %v2055, 16
      %v2349 = vrot.slane %v2347, 4
      %v2350 = vor.u32 %v2349, %v2345
      %v2351 = vrot.slane %v2350, 4
      %v2353 = vshll.u32 %v2056, 16
      %v2355 = vrot.slane %v2353, 5
      %v2356 = vsel %vm261, %v2351, %v2355
      %v2358 = vshrl.u32 %v2057, 16
      %v2360 = vrot.slane %v2358, 4
      %v2361 = vshll.u32 %v2057, 16
      %v2363 = vrot.slane %v2361, 5
      %v2364 = vor.u32 %v2360, %v2363
      %v2365 = vrot.slane %v2364, 4
      %v2367 = vshll.u32 %v2058, 16
      %v2369 = vrot.slane %v2367, 5
      %v2370 = vsel %vm261, %v2365, %v2369
      %v2371 = vshrl.u32 %v2058, 16
      %v2373 = vrot.slane %v2371, 4
      %v2374 = vor.u32 %v2373, %v2369
      %v2375 = vrot.slane %v2374, 4
      %v2377 = vshll.u32 %v2059, 16
      %v2379 = vrot.slane %v2377, 5
      %v2380 = vsel %vm261, %v2375, %v2379
      %v2382 = vshrl.u32 %v2060, 16
      %v2384 = vrot.slane %v2382, 4
      %v2385 = vshll.u32 %v2060, 16
      %v2387 = vrot.slane %v2385, 5
      %v2388 = vor.u32 %v2384, %v2387
      %v2389 = vrot.slane %v2388, 4
      %v2391 = vshll.u32 %v2061, 16
      %v2393 = vrot.slane %v2391, 5
      %v2394 = vsel %vm261, %v2389, %v2393
      %v2395 = vshrl.u32 %v2061, 16
      %v2397 = vrot.slane %v2395, 4
      %v2398 = vor.u32 %v2397, %v2393
      %v2399 = vrot.slane %v2398, 4
      %v2401 = vshll.u32 %v2062, 16
      %v2403 = vrot.slane %v2401, 5
      %v2404 = vsel %vm261, %v2399, %v2403
      %v2406 = vshrl.u32 %v2063, 16
      %v2408 = vrot.slane %v2406, 4
      %v2409 = vshll.u32 %v2063, 16
      %v2411 = vrot.slane %v2409, 5
      %v2412 = vor.u32 %v2408, %v2411
      %v2413 = vrot.slane %v2412, 4
      %v2415 = vshll.u32 %v2064, 16
      %v2417 = vrot.slane %v2415, 5
      %v2418 = vsel %vm261, %v2413, %v2417
      %v2419 = vshrl.u32 %v2064, 16
      %v2421 = vrot.slane %v2419, 4
      %v2422 = vor.u32 %v2421, %v2417
      %v2423 = vrot.slane %v2422, 4
      %v2425 = vshll.u32 %v2065, 16
      %v2427 = vrot.slane %v2425, 5
      %v2428 = vsel %vm261, %v2423, %v2427
      %v2430 = vshrl.u32 %v2066, 16
      %v2432 = vrot.slane %v2430, 4
      %v2433 = vshll.u32 %v2066, 16
      %v2435 = vrot.slane %v2433, 5
      %v2436 = vor.u32 %v2432, %v2435
      %v2437 = vrot.slane %v2436, 4
      %v2439 = vshll.u32 %v2067, 16
      %v2441 = vrot.slane %v2439, 5
      %v2442 = vsel %vm261, %v2437, %v2441
      %v2443 = vshrl.u32 %v2067, 16
      %v2445 = vrot.slane %v2443, 4
      %v2446 = vor.u32 %v2445, %v2441
      %v2447 = vrot.slane %v2446, 4
      %v2449 = vshll.u32 %v2068, 16
      %v2451 = vrot.slane %v2449, 5
      %v2452 = vsel %vm261, %v2447, %v2451
      %s2453 = scalar_lea.vmem %s1, 8
      %v2454 = vld [vmem:[%s2453] sm:$0x3]
      %v2455 = vunpack.c.l.b16 %v2082
      %v2456 = vunpack.c.l.b16 %v2092
      %v2457 = vunpack.c.l.b16 %v2106
      %v2458 = vunpack.c.l.b16 %v2116
      %v2459 = vunpack.c.l.b16 %v2130
      %v2460 = vunpack.c.l.b16 %v2140
      %v2461 = vunpack.c.l.b16 %v2154
      %v2462 = vunpack.c.l.b16 %v2164
      %v2463 = vunpack.c.l.b16 %v2178
      %v2464 = vunpack.c.l.b16 %v2188
      %v2465 = vunpack.c.l.b16 %v2202
      %v2466 = vunpack.c.l.b16 %v2212
      %v2467 = vunpack.c.l.b16 %v2226
      %v2468 = vunpack.c.l.b16 %v2236
      %v2469 = vunpack.c.l.b16 %v2250
      %v2470 = vunpack.c.l.b16 %v2260
      %v2471 = vunpack.c.l.b16 %v2274
      %v2472 = vunpack.c.l.b16 %v2284
      %v2473 = vunpack.c.l.b16 %v2298
      %v2474 = vunpack.c.l.b16 %v2308
      %v2475 = vunpack.c.l.b16 %v2322
      %v2476 = vunpack.c.l.b16 %v2332
      %v2477 = vunpack.c.l.b16 %v2346
      %v2478 = vunpack.c.l.b16 %v2356
      %v2479 = vunpack.c.l.b16 %v2370
      %v2480 = vunpack.c.l.b16 %v2380
      %v2481 = vunpack.c.l.b16 %v2394
      %v2482 = vunpack.c.l.b16 %v2404
      %v2483 = vunpack.c.l.b16 %v2418
      %v2484 = vunpack.c.l.b16 %v2428
      %v2485 = vunpack.c.l.b16 %v2442
      %v2486 = vunpack.c.l.b16 %v2452
      %v2487 = vpack.c.b16 %v2456, %v2455
      %v2488 = vpack.c.b16 %v2458, %v2457
      %v2489 = vpack.c.b16 %v2460, %v2459
      %v2490 = vpack.c.b16 %v2462, %v2461
      %v2491 = vpack.c.b16 %v2464, %v2463
      %v2492 = vpack.c.b16 %v2466, %v2465
      %v2493 = vpack.c.b16 %v2468, %v2467
      %v2494 = vpack.c.b16 %v2470, %v2469
      %v2495 = vpack.c.b16 %v2472, %v2471
      %v2496 = vpack.c.b16 %v2474, %v2473
      %v2497 = vpack.c.b16 %v2476, %v2475
      %v2498 = vpack.c.b16 %v2478, %v2477
      %v2499 = vpack.c.b16 %v2480, %v2479
      %v2500 = vpack.c.b16 %v2482, %v2481
      %v2501 = vpack.c.b16 %v2484, %v2483
      %v2502 = vpack.c.b16 %v2486, %v2485
      %v2504 = vsel %vm696, %v2487, 0
      %v2507 = vsel %vm696, %v2488, 0
      %v2510 = vsel %vm696, %v2489, 0
      %v2513 = vsel %vm696, %v2490, 0
      %v2516 = vsel %vm696, %v2491, 0
      %v2519 = vsel %vm696, %v2492, 0
      %v2522 = vsel %vm696, %v2493, 0
      %v2525 = vsel %vm696, %v2494, 0
      %v2528 = vsel %vm696, %v2495, 0
      %v2531 = vsel %vm696, %v2496, 0
      %v2534 = vsel %vm696, %v2497, 0
      %v2537 = vsel %vm696, %v2498, 0
      %v2540 = vsel %vm696, %v2499, 0
      %v2543 = vsel %vm696, %v2500, 0
      %v2546 = vsel %vm696, %v2501, 0
      %v2549 = vsel %vm696, %v2502, 0
      %v2552 = vsel %vm745, %v2454, 0
      %2554 = vmatprep.subr.bf16.mxu0 0
      %2555 = vmatpush1.bf16.msra.mxu0 0
      %2556 = vmatprep.subr.bf16.mxu0 0
      %2557 = vmatpush1.bf16.msra.mxu0 0
      %2558 = vmatprep.subr.bf16.mxu0 0
      %2559 = vmatpush1.bf16.msra.mxu0 0
      %2560 = vmatprep.subr.bf16.mxu0 0
      %2561 = vmatpush1.bf16.msra.mxu0 0
      %2562 = vmatprep.subr.bf16.mxu0 0
      %2563 = vmatpush1.bf16.msra.mxu0 0
      %2564 = vmatprep.subr.bf16.mxu0 0
      %2565 = vmatpush1.bf16.msra.mxu0 0
      %2566 = vmatprep.subr.bf16.mxu0 0
      %2567 = vmatpush1.bf16.msra.mxu0 0
      %2568 = vmatprep.subr.bf16.mxu0 0
      %2569 = vmatpush1.bf16.msra.mxu0 %v2552
      %2570 = vmatprep.subr.bf16.mxu0 0
      %2571 = vmatpush2.bf16.msra.mxu0 0
      %2572 = vmatprep.subr.bf16.mxu0 0
      %2573 = vmatpush2.bf16.msra.mxu0 0
      %2574 = vmatprep.subr.bf16.mxu0 0
      %2575 = vmatpush2.bf16.msra.mxu0 0
      %2576 = vmatprep.subr.bf16.mxu0 0
      %2577 = vmatpush2.bf16.msra.mxu0 0
      %2578 = vmatprep.subr.bf16.mxu0 0
      %2579 = vmatpush2.bf16.msra.mxu0 0
      %2580 = vmatprep.subr.bf16.mxu0 0
      %2581 = vmatpush2.bf16.msra.mxu0 0
      %2582 = vmatprep.subr.bf16.mxu0 0
      %2583 = vmatpush2.bf16.msra.mxu0 0
      %2584 = vmatprep.subr.bf16.mxu0 0
      %2585 = vmatpush2.bf16.msra.mxu0 0
      %2586 = vmatprep.mubr.bf16.mxu0 0
      %2587 = vmatmul.mubr.bf16.gmra.mxu0 %v2504
      %v2588 = vpop.f32.mrf.mxu0
      %v2589 = vadd.f32 0.0, %v2588
      %v2590 = vpop.f32.mrf.mxu0
      %v2591 = vpop.f32.mrf.mxu0
      %v2592 = vadd.f32 0.0, %v2591
      %v2593 = vpop.f32.mrf.mxu0
      %2594 = vmatprep.mubr.bf16.mxu0 0
      %2595 = vmatmul.mubr.bf16.gmra.mxu0 %v2507
      %v2596 = vpop.f32.mrf.mxu0
      %v2597 = vadd.f32 0.0, %v2596
      %v2598 = vpop.f32.mrf.mxu0
      %v2599 = vpop.f32.mrf.mxu0
      %v2600 = vadd.f32 0.0, %v2599
      %v2601 = vpop.f32.mrf.mxu0
      %2602 = vmatprep.mubr.bf16.mxu0 0
      %2603 = vmatmul.mubr.bf16.gmra.mxu0 %v2510
      %v2604 = vpop.f32.mrf.mxu0
      %v2605 = vadd.f32 0.0, %v2604
      %v2606 = vpop.f32.mrf.mxu0
      %v2607 = vpop.f32.mrf.mxu0
      %v2608 = vadd.f32 0.0, %v2607
      %v2609 = vpop.f32.mrf.mxu0
      %2610 = vmatprep.mubr.bf16.mxu0 0
      %2611 = vmatmul.mubr.bf16.gmra.mxu0 %v2513
      %v2612 = vpop.f32.mrf.mxu0
      %v2613 = vadd.f32 0.0, %v2612
      %v2614 = vpop.f32.mrf.mxu0
      %v2615 = vpop.f32.mrf.mxu0
      %v2616 = vadd.f32 0.0, %v2615
      %v2617 = vpop.f32.mrf.mxu0
      %2618 = vmatprep.mubr.bf16.mxu0 0
      %2619 = vmatmul.mubr.bf16.gmra.mxu0 %v2516
      %v2620 = vpop.f32.mrf.mxu0
      %v2621 = vadd.f32 0.0, %v2620
      %v2622 = vpop.f32.mrf.mxu0
      %v2623 = vpop.f32.mrf.mxu0
      %v2624 = vadd.f32 0.0, %v2623
      %v2625 = vpop.f32.mrf.mxu0
      %2626 = vmatprep.mubr.bf16.mxu0 0
      %2627 = vmatmul.mubr.bf16.gmra.mxu0 %v2519
      %v2628 = vpop.f32.mrf.mxu0
      %v2629 = vadd.f32 0.0, %v2628
      %v2630 = vpop.f32.mrf.mxu0
      %v2631 = vpop.f32.mrf.mxu0
      %v2632 = vadd.f32 0.0, %v2631
      %v2633 = vpop.f32.mrf.mxu0
      %2634 = vmatprep.mubr.bf16.mxu0 0
      %2635 = vmatmul.mubr.bf16.gmra.mxu0 %v2522
      %v2636 = vpop.f32.mrf.mxu0
      %v2637 = vadd.f32 0.0, %v2636
      %v2638 = vpop.f32.mrf.mxu0
      %v2639 = vpop.f32.mrf.mxu0
      %v2640 = vadd.f32 0.0, %v2639
      %v2641 = vpop.f32.mrf.mxu0
      %2642 = vmatprep.mubr.bf16.mxu0 0
      %2643 = vmatmul.mubr.bf16.gmra.mxu0 %v2525
      %v2644 = vpop.f32.mrf.mxu0
      %v2645 = vadd.f32 0.0, %v2644
      %v2646 = vpop.f32.mrf.mxu0
      %v2647 = vpop.f32.mrf.mxu0
      %v2648 = vadd.f32 0.0, %v2647
      %v2649 = vpop.f32.mrf.mxu0
      %2650 = vmatprep.mubr.bf16.mxu0 0
      %2651 = vmatmul.mubr.bf16.gmra.mxu0 %v2528
      %v2652 = vpop.f32.mrf.mxu0
      %v2653 = vadd.f32 0.0, %v2652
      %v2654 = vpop.f32.mrf.mxu0
      %v2655 = vpop.f32.mrf.mxu0
      %v2656 = vadd.f32 0.0, %v2655
      %v2657 = vpop.f32.mrf.mxu0
      %2658 = vmatprep.mubr.bf16.mxu0 0
      %2659 = vmatmul.mubr.bf16.gmra.mxu0 %v2531
      %v2660 = vpop.f32.mrf.mxu0
      %v2661 = vadd.f32 0.0, %v2660
      %v2662 = vpop.f32.mrf.mxu0
      %v2663 = vpop.f32.mrf.mxu0
      %v2664 = vadd.f32 0.0, %v2663
      %v2665 = vpop.f32.mrf.mxu0
      %2666 = vmatprep.mubr.bf16.mxu0 0
      %2667 = vmatmul.mubr.bf16.gmra.mxu0 %v2534
      %v2668 = vpop.f32.mrf.mxu0
      %v2669 = vadd.f32 0.0, %v2668
      %v2670 = vpop.f32.mrf.mxu0
      %v2671 = vpop.f32.mrf.mxu0
      %v2672 = vadd.f32 0.0, %v2671
      %v2673 = vpop.f32.mrf.mxu0
      %2674 = vmatprep.mubr.bf16.mxu0 0
      %2675 = vmatmul.mubr.bf16.gmra.mxu0 %v2537
      %v2676 = vpop.f32.mrf.mxu0
      %v2677 = vadd.f32 0.0, %v2676
      %v2678 = vpop.f32.mrf.mxu0
      %v2679 = vpop.f32.mrf.mxu0
      %v2680 = vadd.f32 0.0, %v2679
      %v2681 = vpop.f32.mrf.mxu0
      %2682 = vmatprep.mubr.bf16.mxu0 0
      %2683 = vmatmul.mubr.bf16.gmra.mxu0 %v2540
      %v2684 = vpop.f32.mrf.mxu0
      %v2685 = vadd.f32 0.0, %v2684
      %v2686 = vpop.f32.mrf.mxu0
      %v2687 = vpop.f32.mrf.mxu0
      %v2688 = vadd.f32 0.0, %v2687
      %v2689 = vpop.f32.mrf.mxu0
      %2690 = vmatprep.mubr.bf16.mxu0 0
      %2691 = vmatmul.mubr.bf16.gmra.mxu0 %v2543
      %v2692 = vpop.f32.mrf.mxu0
      %v2693 = vadd.f32 0.0, %v2692
      %v2694 = vpop.f32.mrf.mxu0
      %v2695 = vpop.f32.mrf.mxu0
      %v2696 = vadd.f32 0.0, %v2695
      %v2697 = vpop.f32.mrf.mxu0
      %2698 = vmatprep.mubr.bf16.mxu0 0
      %2699 = vmatmul.mubr.bf16.gmra.mxu0 %v2546
      %v2700 = vpop.f32.mrf.mxu0
      %v2701 = vadd.f32 0.0, %v2700
      %v2702 = vpop.f32.mrf.mxu0
      %v2703 = vpop.f32.mrf.mxu0
      %v2704 = vadd.f32 0.0, %v2703
      %v2705 = vpop.f32.mrf.mxu0
      %2706 = vmatprep.mubr.bf16.mxu0 0
      %2707 = vmatmul.mubr.bf16.gmra.mxu0 %v2549
      %v2708 = vpop.f32.mrf.mxu0
      %v2709 = vadd.f32 0.0, %v2708
      %v2710 = vpop.f32.mrf.mxu0
      %v2711 = vpop.f32.mrf.mxu0
      %v2712 = vadd.f32 0.0, %v2711
      %v2713 = vpop.f32.mrf.mxu0
      %2714 = vdwg.mxu0
      %v2715 = vadd.f32 %v1989, %v2589
      %v2716 = vadd.f32 %v1990, %v2592
      %v2717 = vadd.f32 %v1991, %v2597
      %v2718 = vadd.f32 %v1992, %v2600
      %v2719 = vadd.f32 %v1993, %v2605
      %v2720 = vadd.f32 %v1994, %v2608
      %v2721 = vadd.f32 %v1995, %v2613
      %v2722 = vadd.f32 %v1996, %v2616
      %v2723 = vadd.f32 %v1997, %v2621
      %v2724 = vadd.f32 %v1998, %v2624
      %v2725 = vadd.f32 %v1999, %v2629
      %v2726 = vadd.f32 %v2000, %v2632
      %v2727 = vadd.f32 %v2001, %v2637
      %v2728 = vadd.f32 %v2002, %v2640
      %v2729 = vadd.f32 %v2003, %v2645
      %v2730 = vadd.f32 %v2004, %v2648
      %v2731 = vadd.f32 %v2005, %v2653
      %v2732 = vadd.f32 %v2006, %v2656
      %v2733 = vadd.f32 %v2007, %v2661
      %v2734 = vadd.f32 %v2008, %v2664
      %v2735 = vadd.f32 %v2009, %v2669
      %v2736 = vadd.f32 %v2010, %v2672
      %v2737 = vadd.f32 %v2011, %v2677
      %v2738 = vadd.f32 %v2012, %v2680
      %v2739 = vadd.f32 %v2013, %v2685
      %v2740 = vadd.f32 %v2014, %v2688
      %v2741 = vadd.f32 %v2015, %v2693
      %v2742 = vadd.f32 %v2016, %v2696
      %v2743 = vadd.f32 %v2017, %v2701
      %v2744 = vadd.f32 %v2018, %v2704
      %v2745 = vadd.f32 %v2019, %v2709
      %v2746 = vadd.f32 %v2020, %v2712
      %v2747 = vld [vmem:[%s1662] sm:$0xe]
      %v2748 = vld [vmem:[%s1662 + $0xc] sm:$0xe]
      %v2749 = vld [vmem:[%s1662 + $0x18] sm:$0xe]
      %v2750 = vld [vmem:[%s1662 + $0x24] sm:$0xe]
      %v2751 = vld [vmem:[%s1662 + $0x30] sm:$0xe]
      %v2752 = vld [vmem:[%s1662 + $0x3c] sm:$0xe]
      %v2753 = vld [vmem:[%s1662 + $0x48] sm:$0xe]
      %v2754 = vld [vmem:[%s1662 + $0x54] sm:$0xe]
      %v2755 = vld [vmem:[%s1662 + $0x60] sm:$0xe]
      %v2756 = vld [vmem:[%s1662 + $0x6c] sm:$0xe]
      %v2757 = vld [vmem:[%s1662 + $0x78] sm:$0xe]
      %v2758 = vld [vmem:[%s1662 + $0x84] sm:$0xe]
      %v2759 = vld [vmem:[%s1662 + $0x90] sm:$0xe]
      %v2760 = vld [vmem:[%s1662 + $0x9c] sm:$0xe]
      %v2761 = vld [vmem:[%s1662 + $0xa8] sm:$0xe]
      %v2762 = vld [vmem:[%s1662 + $0xb4] sm:$0xe]
      %v2811 = vrot.slane %v2747, 5
      %v2812 = vrot.slane %v2811, 4
      %v2813 = vrot.slane %v2022, 5
      %v2814 = vsel %vm1252, %v2812, %v2813
      %v2815 = vrot.slane %v2813, 4
      %v2816 = vrot.slane %v2023, 5
      %v2817 = vsel %vm1252, %v2815, %v2816
      %v2818 = vrot.slane %v2748, 5
      %v2819 = vrot.slane %v2818, 4
      %v2820 = vrot.slane %v2025, 5
      %v2821 = vsel %vm1252, %v2819, %v2820
      %v2822 = vrot.slane %v2820, 4
      %v2823 = vrot.slane %v2026, 5
      %v2824 = vsel %vm1252, %v2822, %v2823
      %v2825 = vrot.slane %v2749, 5
      %v2826 = vrot.slane %v2825, 4
      %v2827 = vrot.slane %v2028, 5
      %v2828 = vsel %vm1252, %v2826, %v2827
      %v2829 = vrot.slane %v2827, 4
      %v2830 = vrot.slane %v2029, 5
      %v2831 = vsel %vm1252, %v2829, %v2830
      %v2832 = vrot.slane %v2750, 5
      %v2833 = vrot.slane %v2832, 4
      %v2834 = vrot.slane %v2031, 5
      %v2835 = vsel %vm1252, %v2833, %v2834
      %v2836 = vrot.slane %v2834, 4
      %v2837 = vrot.slane %v2032, 5
      %v2838 = vsel %vm1252, %v2836, %v2837
      %v2839 = vrot.slane %v2751, 5
      %v2840 = vrot.slane %v2839, 4
      %v2841 = vrot.slane %v2034, 5
      %v2842 = vsel %vm1252, %v2840, %v2841
      %v2843 = vrot.slane %v2841, 4
      %v2844 = vrot.slane %v2035, 5
      %v2845 = vsel %vm1252, %v2843, %v2844
      %v2846 = vrot.slane %v2752, 5
      %v2847 = vrot.slane %v2846, 4
      %v2848 = vrot.slane %v2037, 5
      %v2849 = vsel %vm1252, %v2847, %v2848
      %v2850 = vrot.slane %v2848, 4
      %v2851 = vrot.slane %v2038, 5
      %v2852 = vsel %vm1252, %v2850, %v2851
      %v2853 = vrot.slane %v2753, 5
      %v2854 = vrot.slane %v2853, 4
      %v2855 = vrot.slane %v2040, 5
      %v2856 = vsel %vm1252, %v2854, %v2855
      %v2857 = vrot.slane %v2855, 4
      %v2858 = vrot.slane %v2041, 5
      %v2859 = vsel %vm1252, %v2857, %v2858
      %v2860 = vrot.slane %v2754, 5
      %v2861 = vrot.slane %v2860, 4
      %v2862 = vrot.slane %v2043, 5
      %v2863 = vsel %vm1252, %v2861, %v2862
      %v2864 = vrot.slane %v2862, 4
      %v2865 = vrot.slane %v2044, 5
      %v2866 = vsel %vm1252, %v2864, %v2865
      %v2867 = vrot.slane %v2755, 5
      %v2868 = vrot.slane %v2867, 4
      %v2869 = vrot.slane %v2046, 5
      %v2870 = vsel %vm1252, %v2868, %v2869
      %v2871 = vrot.slane %v2869, 4
      %v2872 = vrot.slane %v2047, 5
      %v2873 = vsel %vm1252, %v2871, %v2872
      %v2874 = vrot.slane %v2756, 5
      %v2875 = vrot.slane %v2874, 4
      %v2876 = vrot.slane %v2049, 5
      %v2877 = vsel %vm1252, %v2875, %v2876
      %v2878 = vrot.slane %v2876, 4
      %v2879 = vrot.slane %v2050, 5
      %v2880 = vsel %vm1252, %v2878, %v2879
      %v2881 = vrot.slane %v2757, 5
      %v2882 = vrot.slane %v2881, 4
      %v2883 = vrot.slane %v2052, 5
      %v2884 = vsel %vm1252, %v2882, %v2883
      %v2885 = vrot.slane %v2883, 4
      %v2886 = vrot.slane %v2053, 5
      %v2887 = vsel %vm1252, %v2885, %v2886
      %v2888 = vrot.slane %v2758, 5
      %v2889 = vrot.slane %v2888, 4
      %v2890 = vrot.slane %v2055, 5
      %v2891 = vsel %vm1252, %v2889, %v2890
      %v2892 = vrot.slane %v2890, 4
      %v2893 = vrot.slane %v2056, 5
      %v2894 = vsel %vm1252, %v2892, %v2893
      %v2895 = vrot.slane %v2759, 5
      %v2896 = vrot.slane %v2895, 4
      %v2897 = vrot.slane %v2058, 5
      %v2898 = vsel %vm1252, %v2896, %v2897
      %v2899 = vrot.slane %v2897, 4
      %v2900 = vrot.slane %v2059, 5
      %v2901 = vsel %vm1252, %v2899, %v2900
      %v2902 = vrot.slane %v2760, 5
      %v2903 = vrot.slane %v2902, 4
      %v2904 = vrot.slane %v2061, 5
      %v2905 = vsel %vm1252, %v2903, %v2904
      %v2906 = vrot.slane %v2904, 4
      %v2907 = vrot.slane %v2062, 5
      %v2908 = vsel %vm1252, %v2906, %v2907
      %v2909 = vrot.slane %v2761, 5
      %v2910 = vrot.slane %v2909, 4
      %v2911 = vrot.slane %v2064, 5
      %v2912 = vsel %vm1252, %v2910, %v2911
      %v2913 = vrot.slane %v2911, 4
      %v2914 = vrot.slane %v2065, 5
      %v2915 = vsel %vm1252, %v2913, %v2914
      %v2916 = vrot.slane %v2762, 5
      %v2917 = vrot.slane %v2916, 4
      %v2918 = vrot.slane %v2067, 5
      %v2919 = vsel %vm1252, %v2917, %v2918
      %v2920 = vrot.slane %v2918, 4
      %v2921 = vrot.slane %v2068, 5
      %v2922 = vsel %vm1252, %v2920, %v2921
      %s2923 = scalar_lea.vmem %s1, 10
      %v2924 = vld [vmem:[%s2923] sm:$0x3]
      %v2925 = vunpack.c.l.b16 %v2814
      %v2926 = vunpack.c.l.b16 %v2817
      %v2927 = vunpack.c.l.b16 %v2821
      %v2928 = vunpack.c.l.b16 %v2824
      %v2929 = vunpack.c.l.b16 %v2828
      %v2930 = vunpack.c.l.b16 %v2831
      %v2931 = vunpack.c.l.b16 %v2835
      %v2932 = vunpack.c.l.b16 %v2838
      %v2933 = vunpack.c.l.b16 %v2842
      %v2934 = vunpack.c.l.b16 %v2845
      %v2935 = vunpack.c.l.b16 %v2849
      %v2936 = vunpack.c.l.b16 %v2852
      %v2937 = vunpack.c.l.b16 %v2856
      %v2938 = vunpack.c.l.b16 %v2859
      %v2939 = vunpack.c.l.b16 %v2863
      %v2940 = vunpack.c.l.b16 %v2866
      %v2941 = vunpack.c.l.b16 %v2870
      %v2942 = vunpack.c.l.b16 %v2873
      %v2943 = vunpack.c.l.b16 %v2877
      %v2944 = vunpack.c.l.b16 %v2880
      %v2945 = vunpack.c.l.b16 %v2884
      %v2946 = vunpack.c.l.b16 %v2887
      %v2947 = vunpack.c.l.b16 %v2891
      %v2948 = vunpack.c.l.b16 %v2894
      %v2949 = vunpack.c.l.b16 %v2898
      %v2950 = vunpack.c.l.b16 %v2901
      %v2951 = vunpack.c.l.b16 %v2905
      %v2952 = vunpack.c.l.b16 %v2908
      %v2953 = vunpack.c.l.b16 %v2912
      %v2954 = vunpack.c.l.b16 %v2915
      %v2955 = vunpack.c.l.b16 %v2919
      %v2956 = vunpack.c.l.b16 %v2922
      %v2957 = vpack.c.b16 %v2926, %v2925
      %v2958 = vpack.c.b16 %v2928, %v2927
      %v2959 = vpack.c.b16 %v2930, %v2929
      %v2960 = vpack.c.b16 %v2932, %v2931
      %v2961 = vpack.c.b16 %v2934, %v2933
      %v2962 = vpack.c.b16 %v2936, %v2935
      %v2963 = vpack.c.b16 %v2938, %v2937
      %v2964 = vpack.c.b16 %v2940, %v2939
      %v2965 = vpack.c.b16 %v2942, %v2941
      %v2966 = vpack.c.b16 %v2944, %v2943
      %v2967 = vpack.c.b16 %v2946, %v2945
      %v2968 = vpack.c.b16 %v2948, %v2947
      %v2969 = vpack.c.b16 %v2950, %v2949
      %v2970 = vpack.c.b16 %v2952, %v2951
      %v2971 = vpack.c.b16 %v2954, %v2953
      %v2972 = vpack.c.b16 %v2956, %v2955
      %v2974 = vsel %vm696, %v2957, 0
      %v2977 = vsel %vm696, %v2958, 0
      %v2980 = vsel %vm696, %v2959, 0
      %v2983 = vsel %vm696, %v2960, 0
      %v2986 = vsel %vm696, %v2961, 0
      %v2989 = vsel %vm696, %v2962, 0
      %v2992 = vsel %vm696, %v2963, 0
      %v2995 = vsel %vm696, %v2964, 0
      %v2998 = vsel %vm696, %v2965, 0
      %v3001 = vsel %vm696, %v2966, 0
      %v3004 = vsel %vm696, %v2967, 0
      %v3007 = vsel %vm696, %v2968, 0
      %v3010 = vsel %vm696, %v2969, 0
      %v3013 = vsel %vm696, %v2970, 0
      %v3016 = vsel %vm696, %v2971, 0
      %v3019 = vsel %vm696, %v2972, 0
      %v3022 = vsel %vm745, %v2924, 0
      %3024 = vmatprep.subr.bf16.mxu0 0
      %3025 = vmatpush1.bf16.msra.mxu0 0
      %3026 = vmatprep.subr.bf16.mxu0 0
      %3027 = vmatpush1.bf16.msra.mxu0 0
      %3028 = vmatprep.subr.bf16.mxu0 0
      %3029 = vmatpush1.bf16.msra.mxu0 0
      %3030 = vmatprep.subr.bf16.mxu0 0
      %3031 = vmatpush1.bf16.msra.mxu0 0
      %3032 = vmatprep.subr.bf16.mxu0 0
      %3033 = vmatpush1.bf16.msra.mxu0 0
      %3034 = vmatprep.subr.bf16.mxu0 0
      %3035 = vmatpush1.bf16.msra.mxu0 0
      %3036 = vmatprep.subr.bf16.mxu0 0
      %3037 = vmatpush1.bf16.msra.mxu0 0
      %3038 = vmatprep.subr.bf16.mxu0 0
      %3039 = vmatpush1.bf16.msra.mxu0 %v3022
      %3040 = vmatprep.subr.bf16.mxu0 0
      %3041 = vmatpush2.bf16.msra.mxu0 0
      %3042 = vmatprep.subr.bf16.mxu0 0
      %3043 = vmatpush2.bf16.msra.mxu0 0
      %3044 = vmatprep.subr.bf16.mxu0 0
      %3045 = vmatpush2.bf16.msra.mxu0 0
      %3046 = vmatprep.subr.bf16.mxu0 0
      %3047 = vmatpush2.bf16.msra.mxu0 0
      %3048 = vmatprep.subr.bf16.mxu0 0
      %3049 = vmatpush2.bf16.msra.mxu0 0
      %3050 = vmatprep.subr.bf16.mxu0 0
      %3051 = vmatpush2.bf16.msra.mxu0 0
      %3052 = vmatprep.subr.bf16.mxu0 0
      %3053 = vmatpush2.bf16.msra.mxu0 0
      %3054 = vmatprep.subr.bf16.mxu0 0
      %3055 = vmatpush2.bf16.msra.mxu0 0
      %3056 = vmatprep.mubr.bf16.mxu0 0
      %3057 = vmatmul.mubr.bf16.gmra.mxu0 %v2974
      %v3058 = vpop.f32.mrf.mxu0
      %v3059 = vadd.f32 0.0, %v3058
      %v3060 = vpop.f32.mrf.mxu0
      %v3061 = vpop.f32.mrf.mxu0
      %v3062 = vadd.f32 0.0, %v3061
      %v3063 = vpop.f32.mrf.mxu0
      %3064 = vmatprep.mubr.bf16.mxu0 0
      %3065 = vmatmul.mubr.bf16.gmra.mxu0 %v2977
      %v3066 = vpop.f32.mrf.mxu0
      %v3067 = vadd.f32 0.0, %v3066
      %v3068 = vpop.f32.mrf.mxu0
      %v3069 = vpop.f32.mrf.mxu0
      %v3070 = vadd.f32 0.0, %v3069
      %v3071 = vpop.f32.mrf.mxu0
      %3072 = vmatprep.mubr.bf16.mxu0 0
      %3073 = vmatmul.mubr.bf16.gmra.mxu0 %v2980
      %v3074 = vpop.f32.mrf.mxu0
      %v3075 = vadd.f32 0.0, %v3074
      %v3076 = vpop.f32.mrf.mxu0
      %v3077 = vpop.f32.mrf.mxu0
      %v3078 = vadd.f32 0.0, %v3077
      %v3079 = vpop.f32.mrf.mxu0
      %3080 = vmatprep.mubr.bf16.mxu0 0
      %3081 = vmatmul.mubr.bf16.gmra.mxu0 %v2983
      %v3082 = vpop.f32.mrf.mxu0
      %v3083 = vadd.f32 0.0, %v3082
      %v3084 = vpop.f32.mrf.mxu0
      %v3085 = vpop.f32.mrf.mxu0
      %v3086 = vadd.f32 0.0, %v3085
      %v3087 = vpop.f32.mrf.mxu0
      %3088 = vmatprep.mubr.bf16.mxu0 0
      %3089 = vmatmul.mubr.bf16.gmra.mxu0 %v2986
      %v3090 = vpop.f32.mrf.mxu0
      %v3091 = vadd.f32 0.0, %v3090
      %v3092 = vpop.f32.mrf.mxu0
      %v3093 = vpop.f32.mrf.mxu0
      %v3094 = vadd.f32 0.0, %v3093
      %v3095 = vpop.f32.mrf.mxu0
      %3096 = vmatprep.mubr.bf16.mxu0 0
      %3097 = vmatmul.mubr.bf16.gmra.mxu0 %v2989
      %v3098 = vpop.f32.mrf.mxu0
      %v3099 = vadd.f32 0.0, %v3098
      %v3100 = vpop.f32.mrf.mxu0
      %v3101 = vpop.f32.mrf.mxu0
      %v3102 = vadd.f32 0.0, %v3101
      %v3103 = vpop.f32.mrf.mxu0
      %3104 = vmatprep.mubr.bf16.mxu0 0
      %3105 = vmatmul.mubr.bf16.gmra.mxu0 %v2992
      %v3106 = vpop.f32.mrf.mxu0
      %v3107 = vadd.f32 0.0, %v3106
      %v3108 = vpop.f32.mrf.mxu0
      %v3109 = vpop.f32.mrf.mxu0
      %v3110 = vadd.f32 0.0, %v3109
      %v3111 = vpop.f32.mrf.mxu0
      %3112 = vmatprep.mubr.bf16.mxu0 0
      %3113 = vmatmul.mubr.bf16.gmra.mxu0 %v2995
      %v3114 = vpop.f32.mrf.mxu0
      %v3115 = vadd.f32 0.0, %v3114
      %v3116 = vpop.f32.mrf.mxu0
      %v3117 = vpop.f32.mrf.mxu0
      %v3118 = vadd.f32 0.0, %v3117
      %v3119 = vpop.f32.mrf.mxu0
      %3120 = vmatprep.mubr.bf16.mxu0 0
      %3121 = vmatmul.mubr.bf16.gmra.mxu0 %v2998
      %v3122 = vpop.f32.mrf.mxu0
      %v3123 = vadd.f32 0.0, %v3122
      %v3124 = vpop.f32.mrf.mxu0
      %v3125 = vpop.f32.mrf.mxu0
      %v3126 = vadd.f32 0.0, %v3125
      %v3127 = vpop.f32.mrf.mxu0
      %3128 = vmatprep.mubr.bf16.mxu0 0
      %3129 = vmatmul.mubr.bf16.gmra.mxu0 %v3001
      %v3130 = vpop.f32.mrf.mxu0
      %v3131 = vadd.f32 0.0, %v3130
      %v3132 = vpop.f32.mrf.mxu0
      %v3133 = vpop.f32.mrf.mxu0
      %v3134 = vadd.f32 0.0, %v3133
      %v3135 = vpop.f32.mrf.mxu0
      %3136 = vmatprep.mubr.bf16.mxu0 0
      %3137 = vmatmul.mubr.bf16.gmra.mxu0 %v3004
      %v3138 = vpop.f32.mrf.mxu0
      %v3139 = vadd.f32 0.0, %v3138
      %v3140 = vpop.f32.mrf.mxu0
      %v3141 = vpop.f32.mrf.mxu0
      %v3142 = vadd.f32 0.0, %v3141
      %v3143 = vpop.f32.mrf.mxu0
      %3144 = vmatprep.mubr.bf16.mxu0 0
      %3145 = vmatmul.mubr.bf16.gmra.mxu0 %v3007
      %v3146 = vpop.f32.mrf.mxu0
      %v3147 = vadd.f32 0.0, %v3146
      %v3148 = vpop.f32.mrf.mxu0
      %v3149 = vpop.f32.mrf.mxu0
      %v3150 = vadd.f32 0.0, %v3149
      %v3151 = vpop.f32.mrf.mxu0
      %3152 = vmatprep.mubr.bf16.mxu0 0
      %3153 = vmatmul.mubr.bf16.gmra.mxu0 %v3010
      %v3154 = vpop.f32.mrf.mxu0
      %v3155 = vadd.f32 0.0, %v3154
      %v3156 = vpop.f32.mrf.mxu0
      %v3157 = vpop.f32.mrf.mxu0
      %v3158 = vadd.f32 0.0, %v3157
      %v3159 = vpop.f32.mrf.mxu0
      %3160 = vmatprep.mubr.bf16.mxu0 0
      %3161 = vmatmul.mubr.bf16.gmra.mxu0 %v3013
      %v3162 = vpop.f32.mrf.mxu0
      %v3163 = vadd.f32 0.0, %v3162
      %v3164 = vpop.f32.mrf.mxu0
      %v3165 = vpop.f32.mrf.mxu0
      %v3166 = vadd.f32 0.0, %v3165
      %v3167 = vpop.f32.mrf.mxu0
      %3168 = vmatprep.mubr.bf16.mxu0 0
      %3169 = vmatmul.mubr.bf16.gmra.mxu0 %v3016
      %v3170 = vpop.f32.mrf.mxu0
      %v3171 = vadd.f32 0.0, %v3170
      %v3172 = vpop.f32.mrf.mxu0
      %v3173 = vpop.f32.mrf.mxu0
      %v3174 = vadd.f32 0.0, %v3173
      %v3175 = vpop.f32.mrf.mxu0
      %3176 = vmatprep.mubr.bf16.mxu0 0
      %3177 = vmatmul.mubr.bf16.gmra.mxu0 %v3019
      %v3178 = vpop.f32.mrf.mxu0
      %v3179 = vadd.f32 0.0, %v3178
      %v3180 = vpop.f32.mrf.mxu0
      %v3181 = vpop.f32.mrf.mxu0
      %v3182 = vadd.f32 0.0, %v3181
      %v3183 = vpop.f32.mrf.mxu0
      %3184 = vdwg.mxu0
      %v3185 = vadd.f32 %v2715, %v3059
      %v3186 = vadd.f32 %v2716, %v3062
      %v3187 = vadd.f32 %v2717, %v3067
      %v3188 = vadd.f32 %v2718, %v3070
      %v3189 = vadd.f32 %v2719, %v3075
      %v3190 = vadd.f32 %v2720, %v3078
      %v3191 = vadd.f32 %v2721, %v3083
      %v3192 = vadd.f32 %v2722, %v3086
      %v3193 = vadd.f32 %v2723, %v3091
      %v3194 = vadd.f32 %v2724, %v3094
      %v3195 = vadd.f32 %v2725, %v3099
      %v3196 = vadd.f32 %v2726, %v3102
      %v3197 = vadd.f32 %v2727, %v3107
      %v3198 = vadd.f32 %v2728, %v3110
      %v3199 = vadd.f32 %v2729, %v3115
      %v3200 = vadd.f32 %v2730, %v3118
      %v3201 = vadd.f32 %v2731, %v3123
      %v3202 = vadd.f32 %v2732, %v3126
      %v3203 = vadd.f32 %v2733, %v3131
      %v3204 = vadd.f32 %v2734, %v3134
      %v3205 = vadd.f32 %v2735, %v3139
      %v3206 = vadd.f32 %v2736, %v3142
      %v3207 = vadd.f32 %v2737, %v3147
      %v3208 = vadd.f32 %v2738, %v3150
      %v3209 = vadd.f32 %v2739, %v3155
      %v3210 = vadd.f32 %v2740, %v3158
      %v3211 = vadd.f32 %v2741, %v3163
      %v3212 = vadd.f32 %v2742, %v3166
      %v3213 = vadd.f32 %v2743, %v3171
      %v3214 = vadd.f32 %v2744, %v3174
      %v3215 = vadd.f32 %v2745, %v3179
      %v3216 = vadd.f32 %v2746, %v3182
      %s3217 = sadd.s32 %s206, 2
      %s3218 = smul.u32 %s3217, 3
      %s3219 = smul.addr %s3218, 4
      %s3220 = scalar_lea.vmem %s190, %s3219
      %v3221 = vld [vmem:[%s3220] sm:$0xf]
      %v3222 = vld [vmem:[%s3220 + $0x4] sm:$0xf]
      %v3223 = vld [vmem:[%s3220 + $0xc] sm:$0xf]
      %v3224 = vld [vmem:[%s3220 + $0x10] sm:$0xf]
      %v3225 = vld [vmem:[%s3220 + $0x18] sm:$0xf]
      %v3226 = vld [vmem:[%s3220 + $0x1c] sm:$0xf]
      %v3227 = vld [vmem:[%s3220 + $0x24] sm:$0xf]
      %v3228 = vld [vmem:[%s3220 + $0x28] sm:$0xf]
      %v3229 = vld [vmem:[%s3220 + $0x30] sm:$0xf]
      %v3230 = vld [vmem:[%s3220 + $0x34] sm:$0xf]
      %v3231 = vld [vmem:[%s3220 + $0x3c] sm:$0xf]
      %v3232 = vld [vmem:[%s3220 + $0x40] sm:$0xf]
      %v3233 = vld [vmem:[%s3220 + $0x48] sm:$0xf]
      %v3234 = vld [vmem:[%s3220 + $0x4c] sm:$0xf]
      %v3235 = vld [vmem:[%s3220 + $0x54] sm:$0xf]
      %v3236 = vld [vmem:[%s3220 + $0x58] sm:$0xf]
      %v3237 = vld [vmem:[%s3220 + $0x60] sm:$0xf]
      %v3238 = vld [vmem:[%s3220 + $0x64] sm:$0xf]
      %v3239 = vld [vmem:[%s3220 + $0x6c] sm:$0xf]
      %v3240 = vld [vmem:[%s3220 + $0x70] sm:$0xf]
      %v3241 = vld [vmem:[%s3220 + $0x78] sm:$0xf]
      %v3242 = vld [vmem:[%s3220 + $0x7c] sm:$0xf]
      %v3243 = vld [vmem:[%s3220 + $0x84] sm:$0xf]
      %v3244 = vld [vmem:[%s3220 + $0x88] sm:$0xf]
      %v3245 = vld [vmem:[%s3220 + $0x90] sm:$0xf]
      %v3246 = vld [vmem:[%s3220 + $0x94] sm:$0xf]
      %v3247 = vld [vmem:[%s3220 + $0x9c] sm:$0xf]
      %v3248 = vld [vmem:[%s3220 + $0xa0] sm:$0xf]
      %v3249 = vld [vmem:[%s3220 + $0xa8] sm:$0xf]
      %v3250 = vld [vmem:[%s3220 + $0xac] sm:$0xf]
      %v3251 = vld [vmem:[%s3220 + $0xb4] sm:$0xf]
      %v3252 = vld [vmem:[%s3220 + $0xb8] sm:$0xf]
      %s3253 = scalar_lea.vmem %s1, 12
      %v3254 = vld [vmem:[%s3253] sm:$0x3]
      %v3287 = vunpack.c.l.b16 %v3221
      %v3288 = vunpack.c.l.b16 %v3222
      %v3289 = vunpack.c.l.b16 %v3223
      %v3290 = vunpack.c.l.b16 %v3224
      %v3291 = vunpack.c.l.b16 %v3225
      %v3292 = vunpack.c.l.b16 %v3226
      %v3293 = vunpack.c.l.b16 %v3227
      %v3294 = vunpack.c.l.b16 %v3228
      %v3295 = vunpack.c.l.b16 %v3229
      %v3296 = vunpack.c.l.b16 %v3230
      %v3297 = vunpack.c.l.b16 %v3231
      %v3298 = vunpack.c.l.b16 %v3232
      %v3299 = vunpack.c.l.b16 %v3233
      %v3300 = vunpack.c.l.b16 %v3234
      %v3301 = vunpack.c.l.b16 %v3235
      %v3302 = vunpack.c.l.b16 %v3236
      %v3303 = vunpack.c.l.b16 %v3237
      %v3304 = vunpack.c.l.b16 %v3238
      %v3305 = vunpack.c.l.b16 %v3239
      %v3306 = vunpack.c.l.b16 %v3240
      %v3307 = vunpack.c.l.b16 %v3241
      %v3308 = vunpack.c.l.b16 %v3242
      %v3309 = vunpack.c.l.b16 %v3243
      %v3310 = vunpack.c.l.b16 %v3244
      %v3311 = vunpack.c.l.b16 %v3245
      %v3312 = vunpack.c.l.b16 %v3246
      %v3313 = vunpack.c.l.b16 %v3247
      %v3314 = vunpack.c.l.b16 %v3248
      %v3315 = vunpack.c.l.b16 %v3249
      %v3316 = vunpack.c.l.b16 %v3250
      %v3317 = vunpack.c.l.b16 %v3251
      %v3318 = vunpack.c.l.b16 %v3252
      %v3319 = vpack.c.b16 %v3288, %v3287
      %v3320 = vpack.c.b16 %v3290, %v3289
      %v3321 = vpack.c.b16 %v3292, %v3291
      %v3322 = vpack.c.b16 %v3294, %v3293
      %v3323 = vpack.c.b16 %v3296, %v3295
      %v3324 = vpack.c.b16 %v3298, %v3297
      %v3325 = vpack.c.b16 %v3300, %v3299
      %v3326 = vpack.c.b16 %v3302, %v3301
      %v3327 = vpack.c.b16 %v3304, %v3303
      %v3328 = vpack.c.b16 %v3306, %v3305
      %v3329 = vpack.c.b16 %v3308, %v3307
      %v3330 = vpack.c.b16 %v3310, %v3309
      %v3331 = vpack.c.b16 %v3312, %v3311
      %v3332 = vpack.c.b16 %v3314, %v3313
      %v3333 = vpack.c.b16 %v3316, %v3315
      %v3334 = vpack.c.b16 %v3318, %v3317
      %v3336 = vsel %vm696, %v3319, 0
      %v3339 = vsel %vm696, %v3320, 0
      %v3342 = vsel %vm696, %v3321, 0
      %v3345 = vsel %vm696, %v3322, 0
      %v3348 = vsel %vm696, %v3323, 0
      %v3351 = vsel %vm696, %v3324, 0
      %v3354 = vsel %vm696, %v3325, 0
      %v3357 = vsel %vm696, %v3326, 0
      %v3360 = vsel %vm696, %v3327, 0
      %v3363 = vsel %vm696, %v3328, 0
      %v3366 = vsel %vm696, %v3329, 0
      %v3369 = vsel %vm696, %v3330, 0
      %v3372 = vsel %vm696, %v3331, 0
      %v3375 = vsel %vm696, %v3332, 0
      %v3378 = vsel %vm696, %v3333, 0
      %v3381 = vsel %vm696, %v3334, 0
      %v3384 = vsel %vm745, %v3254, 0
      %3386 = vmatprep.subr.bf16.mxu0 0
      %3387 = vmatpush1.bf16.msra.mxu0 0
      %3388 = vmatprep.subr.bf16.mxu0 0
      %3389 = vmatpush1.bf16.msra.mxu0 0
      %3390 = vmatprep.subr.bf16.mxu0 0
      %3391 = vmatpush1.bf16.msra.mxu0 0
      %3392 = vmatprep.subr.bf16.mxu0 0
      %3393 = vmatpush1.bf16.msra.mxu0 0
      %3394 = vmatprep.subr.bf16.mxu0 0
      %3395 = vmatpush1.bf16.msra.mxu0 0
      %3396 = vmatprep.subr.bf16.mxu0 0
      %3397 = vmatpush1.bf16.msra.mxu0 0
      %3398 = vmatprep.subr.bf16.mxu0 0
      %3399 = vmatpush1.bf16.msra.mxu0 0
      %3400 = vmatprep.subr.bf16.mxu0 0
      %3401 = vmatpush1.bf16.msra.mxu0 %v3384
      %3402 = vmatprep.subr.bf16.mxu0 0
      %3403 = vmatpush2.bf16.msra.mxu0 0
      %3404 = vmatprep.subr.bf16.mxu0 0
      %3405 = vmatpush2.bf16.msra.mxu0 0
      %3406 = vmatprep.subr.bf16.mxu0 0
      %3407 = vmatpush2.bf16.msra.mxu0 0
      %3408 = vmatprep.subr.bf16.mxu0 0
      %3409 = vmatpush2.bf16.msra.mxu0 0
      %3410 = vmatprep.subr.bf16.mxu0 0
      %3411 = vmatpush2.bf16.msra.mxu0 0
      %3412 = vmatprep.subr.bf16.mxu0 0
      %3413 = vmatpush2.bf16.msra.mxu0 0
      %3414 = vmatprep.subr.bf16.mxu0 0
      %3415 = vmatpush2.bf16.msra.mxu0 0
      %3416 = vmatprep.subr.bf16.mxu0 0
      %3417 = vmatpush2.bf16.msra.mxu0 0
      %3418 = vmatprep.mubr.bf16.mxu0 0
      %3419 = vmatmul.mubr.bf16.gmra.mxu0 %v3336
      %v3420 = vpop.f32.mrf.mxu0
      %v3421 = vadd.f32 0.0, %v3420
      %v3422 = vpop.f32.mrf.mxu0
      %v3423 = vpop.f32.mrf.mxu0
      %v3424 = vadd.f32 0.0, %v3423
      %v3425 = vpop.f32.mrf.mxu0
      %3426 = vmatprep.mubr.bf16.mxu0 0
      %3427 = vmatmul.mubr.bf16.gmra.mxu0 %v3339
      %v3428 = vpop.f32.mrf.mxu0
      %v3429 = vadd.f32 0.0, %v3428
      %v3430 = vpop.f32.mrf.mxu0
      %v3431 = vpop.f32.mrf.mxu0
      %v3432 = vadd.f32 0.0, %v3431
      %v3433 = vpop.f32.mrf.mxu0
      %3434 = vmatprep.mubr.bf16.mxu0 0
      %3435 = vmatmul.mubr.bf16.gmra.mxu0 %v3342
      %v3436 = vpop.f32.mrf.mxu0
      %v3437 = vadd.f32 0.0, %v3436
      %v3438 = vpop.f32.mrf.mxu0
      %v3439 = vpop.f32.mrf.mxu0
      %v3440 = vadd.f32 0.0, %v3439
      %v3441 = vpop.f32.mrf.mxu0
      %3442 = vmatprep.mubr.bf16.mxu0 0
      %3443 = vmatmul.mubr.bf16.gmra.mxu0 %v3345
      %v3444 = vpop.f32.mrf.mxu0
      %v3445 = vadd.f32 0.0, %v3444
      %v3446 = vpop.f32.mrf.mxu0
      %v3447 = vpop.f32.mrf.mxu0
      %v3448 = vadd.f32 0.0, %v3447
      %v3449 = vpop.f32.mrf.mxu0
      %3450 = vmatprep.mubr.bf16.mxu0 0
      %3451 = vmatmul.mubr.bf16.gmra.mxu0 %v3348
      %v3452 = vpop.f32.mrf.mxu0
      %v3453 = vadd.f32 0.0, %v3452
      %v3454 = vpop.f32.mrf.mxu0
      %v3455 = vpop.f32.mrf.mxu0
      %v3456 = vadd.f32 0.0, %v3455
      %v3457 = vpop.f32.mrf.mxu0
      %3458 = vmatprep.mubr.bf16.mxu0 0
      %3459 = vmatmul.mubr.bf16.gmra.mxu0 %v3351
      %v3460 = vpop.f32.mrf.mxu0
      %v3461 = vadd.f32 0.0, %v3460
      %v3462 = vpop.f32.mrf.mxu0
      %v3463 = vpop.f32.mrf.mxu0
      %v3464 = vadd.f32 0.0, %v3463
      %v3465 = vpop.f32.mrf.mxu0
      %3466 = vmatprep.mubr.bf16.mxu0 0
      %3467 = vmatmul.mubr.bf16.gmra.mxu0 %v3354
      %v3468 = vpop.f32.mrf.mxu0
      %v3469 = vadd.f32 0.0, %v3468
      %v3470 = vpop.f32.mrf.mxu0
      %v3471 = vpop.f32.mrf.mxu0
      %v3472 = vadd.f32 0.0, %v3471
      %v3473 = vpop.f32.mrf.mxu0
      %3474 = vmatprep.mubr.bf16.mxu0 0
      %3475 = vmatmul.mubr.bf16.gmra.mxu0 %v3357
      %v3476 = vpop.f32.mrf.mxu0
      %v3477 = vadd.f32 0.0, %v3476
      %v3478 = vpop.f32.mrf.mxu0
      %v3479 = vpop.f32.mrf.mxu0
      %v3480 = vadd.f32 0.0, %v3479
      %v3481 = vpop.f32.mrf.mxu0
      %3482 = vmatprep.mubr.bf16.mxu0 0
      %3483 = vmatmul.mubr.bf16.gmra.mxu0 %v3360
      %v3484 = vpop.f32.mrf.mxu0
      %v3485 = vadd.f32 0.0, %v3484
      %v3486 = vpop.f32.mrf.mxu0
      %v3487 = vpop.f32.mrf.mxu0
      %v3488 = vadd.f32 0.0, %v3487
      %v3489 = vpop.f32.mrf.mxu0
      %3490 = vmatprep.mubr.bf16.mxu0 0
      %3491 = vmatmul.mubr.bf16.gmra.mxu0 %v3363
      %v3492 = vpop.f32.mrf.mxu0
      %v3493 = vadd.f32 0.0, %v3492
      %v3494 = vpop.f32.mrf.mxu0
      %v3495 = vpop.f32.mrf.mxu0
      %v3496 = vadd.f32 0.0, %v3495
      %v3497 = vpop.f32.mrf.mxu0
      %3498 = vmatprep.mubr.bf16.mxu0 0
      %3499 = vmatmul.mubr.bf16.gmra.mxu0 %v3366
      %v3500 = vpop.f32.mrf.mxu0
      %v3501 = vadd.f32 0.0, %v3500
      %v3502 = vpop.f32.mrf.mxu0
      %v3503 = vpop.f32.mrf.mxu0
      %v3504 = vadd.f32 0.0, %v3503
      %v3505 = vpop.f32.mrf.mxu0
      %3506 = vmatprep.mubr.bf16.mxu0 0
      %3507 = vmatmul.mubr.bf16.gmra.mxu0 %v3369
      %v3508 = vpop.f32.mrf.mxu0
      %v3509 = vadd.f32 0.0, %v3508
      %v3510 = vpop.f32.mrf.mxu0
      %v3511 = vpop.f32.mrf.mxu0
      %v3512 = vadd.f32 0.0, %v3511
      %v3513 = vpop.f32.mrf.mxu0
      %3514 = vmatprep.mubr.bf16.mxu0 0
      %3515 = vmatmul.mubr.bf16.gmra.mxu0 %v3372
      %v3516 = vpop.f32.mrf.mxu0
      %v3517 = vadd.f32 0.0, %v3516
      %v3518 = vpop.f32.mrf.mxu0
      %v3519 = vpop.f32.mrf.mxu0
      %v3520 = vadd.f32 0.0, %v3519
      %v3521 = vpop.f32.mrf.mxu0
      %3522 = vmatprep.mubr.bf16.mxu0 0
      %3523 = vmatmul.mubr.bf16.gmra.mxu0 %v3375
      %v3524 = vpop.f32.mrf.mxu0
      %v3525 = vadd.f32 0.0, %v3524
      %v3526 = vpop.f32.mrf.mxu0
      %v3527 = vpop.f32.mrf.mxu0
      %v3528 = vadd.f32 0.0, %v3527
      %v3529 = vpop.f32.mrf.mxu0
      %3530 = vmatprep.mubr.bf16.mxu0 0
      %3531 = vmatmul.mubr.bf16.gmra.mxu0 %v3378
      %v3532 = vpop.f32.mrf.mxu0
      %v3533 = vadd.f32 0.0, %v3532
      %v3534 = vpop.f32.mrf.mxu0
      %v3535 = vpop.f32.mrf.mxu0
      %v3536 = vadd.f32 0.0, %v3535
      %v3537 = vpop.f32.mrf.mxu0
      %3538 = vmatprep.mubr.bf16.mxu0 0
      %3539 = vmatmul.mubr.bf16.gmra.mxu0 %v3381
      %v3540 = vpop.f32.mrf.mxu0
      %v3541 = vadd.f32 0.0, %v3540
      %v3542 = vpop.f32.mrf.mxu0
      %v3543 = vpop.f32.mrf.mxu0
      %v3544 = vadd.f32 0.0, %v3543
      %v3545 = vpop.f32.mrf.mxu0
      %3546 = vdwg.mxu0
      %v3547 = vadd.f32 %v3185, %v3421
      %v3548 = vadd.f32 %v3186, %v3424
      %v3549 = vadd.f32 %v3187, %v3429
      %v3550 = vadd.f32 %v3188, %v3432
      %v3551 = vadd.f32 %v3189, %v3437
      %v3552 = vadd.f32 %v3190, %v3440
      %v3553 = vadd.f32 %v3191, %v3445
      %v3554 = vadd.f32 %v3192, %v3448
      %v3555 = vadd.f32 %v3193, %v3453
      %v3556 = vadd.f32 %v3194, %v3456
      %v3557 = vadd.f32 %v3195, %v3461
      %v3558 = vadd.f32 %v3196, %v3464
      %v3559 = vadd.f32 %v3197, %v3469
      %v3560 = vadd.f32 %v3198, %v3472
      %v3561 = vadd.f32 %v3199, %v3477
      %v3562 = vadd.f32 %v3200, %v3480
      %v3563 = vadd.f32 %v3201, %v3485
      %v3564 = vadd.f32 %v3202, %v3488
      %v3565 = vadd.f32 %v3203, %v3493
      %v3566 = vadd.f32 %v3204, %v3496
      %v3567 = vadd.f32 %v3205, %v3501
      %v3568 = vadd.f32 %v3206, %v3504
      %v3569 = vadd.f32 %v3207, %v3509
      %v3570 = vadd.f32 %v3208, %v3512
      %v3571 = vadd.f32 %v3209, %v3517
      %v3572 = vadd.f32 %v3210, %v3520
      %v3573 = vadd.f32 %v3211, %v3525
      %v3574 = vadd.f32 %v3212, %v3528
      %v3575 = vadd.f32 %v3213, %v3533
      %v3576 = vadd.f32 %v3214, %v3536
      %v3577 = vadd.f32 %v3215, %v3541
      %v3578 = vadd.f32 %v3216, %v3544
      %v3579 = vld [vmem:[%s3220] sm:$0xf]
      %v3580 = vld [vmem:[%s3220 + $0x4] sm:$0xf]
      %v3581 = vld [vmem:[%s3220 + $0x8] sm:$0x1]
      %v3582 = vld [vmem:[%s3220 + $0xc] sm:$0xf]
      %v3583 = vld [vmem:[%s3220 + $0x10] sm:$0xf]
      %v3584 = vld [vmem:[%s3220 + $0x14] sm:$0x1]
      %v3585 = vld [vmem:[%s3220 + $0x18] sm:$0xf]
      %v3586 = vld [vmem:[%s3220 + $0x1c] sm:$0xf]
      %v3587 = vld [vmem:[%s3220 + $0x20] sm:$0x1]
      %v3588 = vld [vmem:[%s3220 + $0x24] sm:$0xf]
      %v3589 = vld [vmem:[%s3220 + $0x28] sm:$0xf]
      %v3590 = vld [vmem:[%s3220 + $0x2c] sm:$0x1]
      %v3591 = vld [vmem:[%s3220 + $0x30] sm:$0xf]
      %v3592 = vld [vmem:[%s3220 + $0x34] sm:$0xf]
      %v3593 = vld [vmem:[%s3220 + $0x38] sm:$0x1]
      %v3594 = vld [vmem:[%s3220 + $0x3c] sm:$0xf]
      %v3595 = vld [vmem:[%s3220 + $0x40] sm:$0xf]
      %v3596 = vld [vmem:[%s3220 + $0x44] sm:$0x1]
      %v3597 = vld [vmem:[%s3220 + $0x48] sm:$0xf]
      %v3598 = vld [vmem:[%s3220 + $0x4c] sm:$0xf]
      %v3599 = vld [vmem:[%s3220 + $0x50] sm:$0x1]
      %v3600 = vld [vmem:[%s3220 + $0x54] sm:$0xf]
      %v3601 = vld [vmem:[%s3220 + $0x58] sm:$0xf]
      %v3602 = vld [vmem:[%s3220 + $0x5c] sm:$0x1]
      %v3603 = vld [vmem:[%s3220 + $0x60] sm:$0xf]
      %v3604 = vld [vmem:[%s3220 + $0x64] sm:$0xf]
      %v3605 = vld [vmem:[%s3220 + $0x68] sm:$0x1]
      %v3606 = vld [vmem:[%s3220 + $0x6c] sm:$0xf]
      %v3607 = vld [vmem:[%s3220 + $0x70] sm:$0xf]
      %v3608 = vld [vmem:[%s3220 + $0x74] sm:$0x1]
      %v3609 = vld [vmem:[%s3220 + $0x78] sm:$0xf]
      %v3610 = vld [vmem:[%s3220 + $0x7c] sm:$0xf]
      %v3611 = vld [vmem:[%s3220 + $0x80] sm:$0x1]
      %v3612 = vld [vmem:[%s3220 + $0x84] sm:$0xf]
      %v3613 = vld [vmem:[%s3220 + $0x88] sm:$0xf]
      %v3614 = vld [vmem:[%s3220 + $0x8c] sm:$0x1]
      %v3615 = vld [vmem:[%s3220 + $0x90] sm:$0xf]
      %v3616 = vld [vmem:[%s3220 + $0x94] sm:$0xf]
      %v3617 = vld [vmem:[%s3220 + $0x98] sm:$0x1]
      %v3618 = vld [vmem:[%s3220 + $0x9c] sm:$0xf]
      %v3619 = vld [vmem:[%s3220 + $0xa0] sm:$0xf]
      %v3620 = vld [vmem:[%s3220 + $0xa4] sm:$0x1]
      %v3621 = vld [vmem:[%s3220 + $0xa8] sm:$0xf]
      %v3622 = vld [vmem:[%s3220 + $0xac] sm:$0xf]
      %v3623 = vld [vmem:[%s3220 + $0xb0] sm:$0x1]
      %v3624 = vld [vmem:[%s3220 + $0xb4] sm:$0xf]
      %v3625 = vld [vmem:[%s3220 + $0xb8] sm:$0xf]
      %v3626 = vld [vmem:[%s3220 + $0xbc] sm:$0x1]
      %v3628 = vshrl.u32 %v3579, 16
      %v3630 = vrot.slane %v3628, 4
      %v3631 = vshll.u32 %v3579, 16
      %v3633 = vrot.slane %v3631, 5
      %v3634 = vor.u32 %v3630, %v3633
      %v3635 = vrot.slane %v3634, 4
      %v3637 = vshll.u32 %v3580, 16
      %v3639 = vrot.slane %v3637, 5
      %v3640 = vsel %vm261, %v3635, %v3639
      %v3641 = vshrl.u32 %v3580, 16
      %v3643 = vrot.slane %v3641, 4
      %v3644 = vor.u32 %v3643, %v3639
      %v3645 = vrot.slane %v3644, 4
      %v3647 = vshll.u32 %v3581, 16
      %v3649 = vrot.slane %v3647, 5
      %v3650 = vsel %vm261, %v3645, %v3649
      %v3652 = vshrl.u32 %v3582, 16
      %v3654 = vrot.slane %v3652, 4
      %v3655 = vshll.u32 %v3582, 16
      %v3657 = vrot.slane %v3655, 5
      %v3658 = vor.u32 %v3654, %v3657
      %v3659 = vrot.slane %v3658, 4
      %v3661 = vshll.u32 %v3583, 16
      %v3663 = vrot.slane %v3661, 5
      %v3664 = vsel %vm261, %v3659, %v3663
      %v3665 = vshrl.u32 %v3583, 16
      %v3667 = vrot.slane %v3665, 4
      %v3668 = vor.u32 %v3667, %v3663
      %v3669 = vrot.slane %v3668, 4
      %v3671 = vshll.u32 %v3584, 16
      %v3673 = vrot.slane %v3671, 5
      %v3674 = vsel %vm261, %v3669, %v3673
      %v3676 = vshrl.u32 %v3585, 16
      %v3678 = vrot.slane %v3676, 4
      %v3679 = vshll.u32 %v3585, 16
      %v3681 = vrot.slane %v3679, 5
      %v3682 = vor.u32 %v3678, %v3681
      %v3683 = vrot.slane %v3682, 4
      %v3685 = vshll.u32 %v3586, 16
      %v3687 = vrot.slane %v3685, 5
      %v3688 = vsel %vm261, %v3683, %v3687
      %v3689 = vshrl.u32 %v3586, 16
      %v3691 = vrot.slane %v3689, 4
      %v3692 = vor.u32 %v3691, %v3687
      %v3693 = vrot.slane %v3692, 4
      %v3695 = vshll.u32 %v3587, 16
      %v3697 = vrot.slane %v3695, 5
      %v3698 = vsel %vm261, %v3693, %v3697
      %v3700 = vshrl.u32 %v3588, 16
      %v3702 = vrot.slane %v3700, 4
      %v3703 = vshll.u32 %v3588, 16
      %v3705 = vrot.slane %v3703, 5
      %v3706 = vor.u32 %v3702, %v3705
      %v3707 = vrot.slane %v3706, 4
      %v3709 = vshll.u32 %v3589, 16
      %v3711 = vrot.slane %v3709, 5
      %v3712 = vsel %vm261, %v3707, %v3711
      %v3713 = vshrl.u32 %v3589, 16
      %v3715 = vrot.slane %v3713, 4
      %v3716 = vor.u32 %v3715, %v3711
      %v3717 = vrot.slane %v3716, 4
      %v3719 = vshll.u32 %v3590, 16
      %v3721 = vrot.slane %v3719, 5
      %v3722 = vsel %vm261, %v3717, %v3721
      %v3724 = vshrl.u32 %v3591, 16
      %v3726 = vrot.slane %v3724, 4
      %v3727 = vshll.u32 %v3591, 16
      %v3729 = vrot.slane %v3727, 5
      %v3730 = vor.u32 %v3726, %v3729
      %v3731 = vrot.slane %v3730, 4
      %v3733 = vshll.u32 %v3592, 16
      %v3735 = vrot.slane %v3733, 5
      %v3736 = vsel %vm261, %v3731, %v3735
      %v3737 = vshrl.u32 %v3592, 16
      %v3739 = vrot.slane %v3737, 4
      %v3740 = vor.u32 %v3739, %v3735
      %v3741 = vrot.slane %v3740, 4
      %v3743 = vshll.u32 %v3593, 16
      %v3745 = vrot.slane %v3743, 5
      %v3746 = vsel %vm261, %v3741, %v3745
      %v3748 = vshrl.u32 %v3594, 16
      %v3750 = vrot.slane %v3748, 4
      %v3751 = vshll.u32 %v3594, 16
      %v3753 = vrot.slane %v3751, 5
      %v3754 = vor.u32 %v3750, %v3753
      %v3755 = vrot.slane %v3754, 4
      %v3757 = vshll.u32 %v3595, 16
      %v3759 = vrot.slane %v3757, 5
      %v3760 = vsel %vm261, %v3755, %v3759
      %v3761 = vshrl.u32 %v3595, 16
      %v3763 = vrot.slane %v3761, 4
      %v3764 = vor.u32 %v3763, %v3759
      %v3765 = vrot.slane %v3764, 4
      %v3767 = vshll.u32 %v3596, 16
      %v3769 = vrot.slane %v3767, 5
      %v3770 = vsel %vm261, %v3765, %v3769
      %v3772 = vshrl.u32 %v3597, 16
      %v3774 = vrot.slane %v3772, 4
      %v3775 = vshll.u32 %v3597, 16
      %v3777 = vrot.slane %v3775, 5
      %v3778 = vor.u32 %v3774, %v3777
      %v3779 = vrot.slane %v3778, 4
      %v3781 = vshll.u32 %v3598, 16
      %v3783 = vrot.slane %v3781, 5
      %v3784 = vsel %vm261, %v3779, %v3783
      %v3785 = vshrl.u32 %v3598, 16
      %v3787 = vrot.slane %v3785, 4
      %v3788 = vor.u32 %v3787, %v3783
      %v3789 = vrot.slane %v3788, 4
      %v3791 = vshll.u32 %v3599, 16
      %v3793 = vrot.slane %v3791, 5
      %v3794 = vsel %vm261, %v3789, %v3793
      %v3796 = vshrl.u32 %v3600, 16
      %v3798 = vrot.slane %v3796, 4
      %v3799 = vshll.u32 %v3600, 16
      %v3801 = vrot.slane %v3799, 5
      %v3802 = vor.u32 %v3798, %v3801
      %v3803 = vrot.slane %v3802, 4
      %v3805 = vshll.u32 %v3601, 16
      %v3807 = vrot.slane %v3805, 5
      %v3808 = vsel %vm261, %v3803, %v3807
      %v3809 = vshrl.u32 %v3601, 16
      %v3811 = vrot.slane %v3809, 4
      %v3812 = vor.u32 %v3811, %v3807
      %v3813 = vrot.slane %v3812, 4
      %v3815 = vshll.u32 %v3602, 16
      %v3817 = vrot.slane %v3815, 5
      %v3818 = vsel %vm261, %v3813, %v3817
      %v3820 = vshrl.u32 %v3603, 16
      %v3822 = vrot.slane %v3820, 4
      %v3823 = vshll.u32 %v3603, 16
      %v3825 = vrot.slane %v3823, 5
      %v3826 = vor.u32 %v3822, %v3825
      %v3827 = vrot.slane %v3826, 4
      %v3829 = vshll.u32 %v3604, 16
      %v3831 = vrot.slane %v3829, 5
      %v3832 = vsel %vm261, %v3827, %v3831
      %v3833 = vshrl.u32 %v3604, 16
      %v3835 = vrot.slane %v3833, 4
      %v3836 = vor.u32 %v3835, %v3831
      %v3837 = vrot.slane %v3836, 4
      %v3839 = vshll.u32 %v3605, 16
      %v3841 = vrot.slane %v3839, 5
      %v3842 = vsel %vm261, %v3837, %v3841
      %v3844 = vshrl.u32 %v3606, 16
      %v3846 = vrot.slane %v3844, 4
      %v3847 = vshll.u32 %v3606, 16
      %v3849 = vrot.slane %v3847, 5
      %v3850 = vor.u32 %v3846, %v3849
      %v3851 = vrot.slane %v3850, 4
      %v3853 = vshll.u32 %v3607, 16
      %v3855 = vrot.slane %v3853, 5
      %v3856 = vsel %vm261, %v3851, %v3855
      %v3857 = vshrl.u32 %v3607, 16
      %v3859 = vrot.slane %v3857, 4
      %v3860 = vor.u32 %v3859, %v3855
      %v3861 = vrot.slane %v3860, 4
      %v3863 = vshll.u32 %v3608, 16
      %v3865 = vrot.slane %v3863, 5
      %v3866 = vsel %vm261, %v3861, %v3865
      %v3868 = vshrl.u32 %v3609, 16
      %v3870 = vrot.slane %v3868, 4
      %v3871 = vshll.u32 %v3609, 16
      %v3873 = vrot.slane %v3871, 5
      %v3874 = vor.u32 %v3870, %v3873
      %v3875 = vrot.slane %v3874, 4
      %v3877 = vshll.u32 %v3610, 16
      %v3879 = vrot.slane %v3877, 5
      %v3880 = vsel %vm261, %v3875, %v3879
      %v3881 = vshrl.u32 %v3610, 16
      %v3883 = vrot.slane %v3881, 4
      %v3884 = vor.u32 %v3883, %v3879
      %v3885 = vrot.slane %v3884, 4
      %v3887 = vshll.u32 %v3611, 16
      %v3889 = vrot.slane %v3887, 5
      %v3890 = vsel %vm261, %v3885, %v3889
      %v3892 = vshrl.u32 %v3612, 16
      %v3894 = vrot.slane %v3892, 4
      %v3895 = vshll.u32 %v3612, 16
      %v3897 = vrot.slane %v3895, 5
      %v3898 = vor.u32 %v3894, %v3897
      %v3899 = vrot.slane %v3898, 4
      %v3901 = vshll.u32 %v3613, 16
      %v3903 = vrot.slane %v3901, 5
      %v3904 = vsel %vm261, %v3899, %v3903
      %v3905 = vshrl.u32 %v3613, 16
      %v3907 = vrot.slane %v3905, 4
      %v3908 = vor.u32 %v3907, %v3903
      %v3909 = vrot.slane %v3908, 4
      %v3911 = vshll.u32 %v3614, 16
      %v3913 = vrot.slane %v3911, 5
      %v3914 = vsel %vm261, %v3909, %v3913
      %v3916 = vshrl.u32 %v3615, 16
      %v3918 = vrot.slane %v3916, 4
      %v3919 = vshll.u32 %v3615, 16
      %v3921 = vrot.slane %v3919, 5
      %v3922 = vor.u32 %v3918, %v3921
      %v3923 = vrot.slane %v3922, 4
      %v3925 = vshll.u32 %v3616, 16
      %v3927 = vrot.slane %v3925, 5
      %v3928 = vsel %vm261, %v3923, %v3927
      %v3929 = vshrl.u32 %v3616, 16
      %v3931 = vrot.slane %v3929, 4
      %v3932 = vor.u32 %v3931, %v3927
      %v3933 = vrot.slane %v3932, 4
      %v3935 = vshll.u32 %v3617, 16
      %v3937 = vrot.slane %v3935, 5
      %v3938 = vsel %vm261, %v3933, %v3937
      %v3940 = vshrl.u32 %v3618, 16
      %v3942 = vrot.slane %v3940, 4
      %v3943 = vshll.u32 %v3618, 16
      %v3945 = vrot.slane %v3943, 5
      %v3946 = vor.u32 %v3942, %v3945
      %v3947 = vrot.slane %v3946, 4
      %v3949 = vshll.u32 %v3619, 16
      %v3951 = vrot.slane %v3949, 5
      %v3952 = vsel %vm261, %v3947, %v3951
      %v3953 = vshrl.u32 %v3619, 16
      %v3955 = vrot.slane %v3953, 4
      %v3956 = vor.u32 %v3955, %v3951
      %v3957 = vrot.slane %v3956, 4
      %v3959 = vshll.u32 %v3620, 16
      %v3961 = vrot.slane %v3959, 5
      %v3962 = vsel %vm261, %v3957, %v3961
      %v3964 = vshrl.u32 %v3621, 16
      %v3966 = vrot.slane %v3964, 4
      %v3967 = vshll.u32 %v3621, 16
      %v3969 = vrot.slane %v3967, 5
      %v3970 = vor.u32 %v3966, %v3969
      %v3971 = vrot.slane %v3970, 4
      %v3973 = vshll.u32 %v3622, 16
      %v3975 = vrot.slane %v3973, 5
      %v3976 = vsel %vm261, %v3971, %v3975
      %v3977 = vshrl.u32 %v3622, 16
      %v3979 = vrot.slane %v3977, 4
      %v3980 = vor.u32 %v3979, %v3975
      %v3981 = vrot.slane %v3980, 4
      %v3983 = vshll.u32 %v3623, 16
      %v3985 = vrot.slane %v3983, 5
      %v3986 = vsel %vm261, %v3981, %v3985
      %v3988 = vshrl.u32 %v3624, 16
      %v3990 = vrot.slane %v3988, 4
      %v3991 = vshll.u32 %v3624, 16
      %v3993 = vrot.slane %v3991, 5
      %v3994 = vor.u32 %v3990, %v3993
      %v3995 = vrot.slane %v3994, 4
      %v3997 = vshll.u32 %v3625, 16
      %v3999 = vrot.slane %v3997, 5
      %v4000 = vsel %vm261, %v3995, %v3999
      %v4001 = vshrl.u32 %v3625, 16
      %v4003 = vrot.slane %v4001, 4
      %v4004 = vor.u32 %v4003, %v3999
      %v4005 = vrot.slane %v4004, 4
      %v4007 = vshll.u32 %v3626, 16
      %v4009 = vrot.slane %v4007, 5
      %v4010 = vsel %vm261, %v4005, %v4009
      %s4011 = scalar_lea.vmem %s1, 14
      %v4012 = vld [vmem:[%s4011] sm:$0x3]
      %v4013 = vunpack.c.l.b16 %v3640
      %v4014 = vunpack.c.l.b16 %v3650
      %v4015 = vunpack.c.l.b16 %v3664
      %v4016 = vunpack.c.l.b16 %v3674
      %v4017 = vunpack.c.l.b16 %v3688
      %v4018 = vunpack.c.l.b16 %v3698
      %v4019 = vunpack.c.l.b16 %v3712
      %v4020 = vunpack.c.l.b16 %v3722
      %v4021 = vunpack.c.l.b16 %v3736
      %v4022 = vunpack.c.l.b16 %v3746
      %v4023 = vunpack.c.l.b16 %v3760
      %v4024 = vunpack.c.l.b16 %v3770
      %v4025 = vunpack.c.l.b16 %v3784
      %v4026 = vunpack.c.l.b16 %v3794
      %v4027 = vunpack.c.l.b16 %v3808
      %v4028 = vunpack.c.l.b16 %v3818
      %v4029 = vunpack.c.l.b16 %v3832
      %v4030 = vunpack.c.l.b16 %v3842
      %v4031 = vunpack.c.l.b16 %v3856
      %v4032 = vunpack.c.l.b16 %v3866
      %v4033 = vunpack.c.l.b16 %v3880
      %v4034 = vunpack.c.l.b16 %v3890
      %v4035 = vunpack.c.l.b16 %v3904
      %v4036 = vunpack.c.l.b16 %v3914
      %v4037 = vunpack.c.l.b16 %v3928
      %v4038 = vunpack.c.l.b16 %v3938
      %v4039 = vunpack.c.l.b16 %v3952
      %v4040 = vunpack.c.l.b16 %v3962
      %v4041 = vunpack.c.l.b16 %v3976
      %v4042 = vunpack.c.l.b16 %v3986
      %v4043 = vunpack.c.l.b16 %v4000
      %v4044 = vunpack.c.l.b16 %v4010
      %v4045 = vpack.c.b16 %v4014, %v4013
      %v4046 = vpack.c.b16 %v4016, %v4015
      %v4047 = vpack.c.b16 %v4018, %v4017
      %v4048 = vpack.c.b16 %v4020, %v4019
      %v4049 = vpack.c.b16 %v4022, %v4021
      %v4050 = vpack.c.b16 %v4024, %v4023
      %v4051 = vpack.c.b16 %v4026, %v4025
      %v4052 = vpack.c.b16 %v4028, %v4027
      %v4053 = vpack.c.b16 %v4030, %v4029
      %v4054 = vpack.c.b16 %v4032, %v4031
      %v4055 = vpack.c.b16 %v4034, %v4033
      %v4056 = vpack.c.b16 %v4036, %v4035
      %v4057 = vpack.c.b16 %v4038, %v4037
      %v4058 = vpack.c.b16 %v4040, %v4039
      %v4059 = vpack.c.b16 %v4042, %v4041
      %v4060 = vpack.c.b16 %v4044, %v4043
      %v4062 = vsel %vm696, %v4045, 0
      %v4065 = vsel %vm696, %v4046, 0
      %v4068 = vsel %vm696, %v4047, 0
      %v4071 = vsel %vm696, %v4048, 0
      %v4074 = vsel %vm696, %v4049, 0
      %v4077 = vsel %vm696, %v4050, 0
      %v4080 = vsel %vm696, %v4051, 0
      %v4083 = vsel %vm696, %v4052, 0
      %v4086 = vsel %vm696, %v4053, 0
      %v4089 = vsel %vm696, %v4054, 0
      %v4092 = vsel %vm696, %v4055, 0
      %v4095 = vsel %vm696, %v4056, 0
      %v4098 = vsel %vm696, %v4057, 0
      %v4101 = vsel %vm696, %v4058, 0
      %v4104 = vsel %vm696, %v4059, 0
      %v4107 = vsel %vm696, %v4060, 0
      %v4110 = vsel %vm745, %v4012, 0
      %4112 = vmatprep.subr.bf16.mxu0 0
      %4113 = vmatpush1.bf16.msra.mxu0 0
      %4114 = vmatprep.subr.bf16.mxu0 0
      %4115 = vmatpush1.bf16.msra.mxu0 0
      %4116 = vmatprep.subr.bf16.mxu0 0
      %4117 = vmatpush1.bf16.msra.mxu0 0
      %4118 = vmatprep.subr.bf16.mxu0 0
      %4119 = vmatpush1.bf16.msra.mxu0 0
      %4120 = vmatprep.subr.bf16.mxu0 0
      %4121 = vmatpush1.bf16.msra.mxu0 0
      %4122 = vmatprep.subr.bf16.mxu0 0
      %4123 = vmatpush1.bf16.msra.mxu0 0
      %4124 = vmatprep.subr.bf16.mxu0 0
      %4125 = vmatpush1.bf16.msra.mxu0 0
      %4126 = vmatprep.subr.bf16.mxu0 0
      %4127 = vmatpush1.bf16.msra.mxu0 %v4110
      %4128 = vmatprep.subr.bf16.mxu0 0
      %4129 = vmatpush2.bf16.msra.mxu0 0
      %4130 = vmatprep.subr.bf16.mxu0 0
      %4131 = vmatpush2.bf16.msra.mxu0 0
      %4132 = vmatprep.subr.bf16.mxu0 0
      %4133 = vmatpush2.bf16.msra.mxu0 0
      %4134 = vmatprep.subr.bf16.mxu0 0
      %4135 = vmatpush2.bf16.msra.mxu0 0
      %4136 = vmatprep.subr.bf16.mxu0 0
      %4137 = vmatpush2.bf16.msra.mxu0 0
      %4138 = vmatprep.subr.bf16.mxu0 0
      %4139 = vmatpush2.bf16.msra.mxu0 0
      %4140 = vmatprep.subr.bf16.mxu0 0
      %4141 = vmatpush2.bf16.msra.mxu0 0
      %4142 = vmatprep.subr.bf16.mxu0 0
      %4143 = vmatpush2.bf16.msra.mxu0 0
      %4144 = vmatprep.mubr.bf16.mxu0 0
      %4145 = vmatmul.mubr.bf16.gmra.mxu0 %v4062
      %v4146 = vpop.f32.mrf.mxu0
      %v4147 = vadd.f32 0.0, %v4146
      %v4148 = vpop.f32.mrf.mxu0
      %v4149 = vpop.f32.mrf.mxu0
      %v4150 = vadd.f32 0.0, %v4149
      %v4151 = vpop.f32.mrf.mxu0
      %4152 = vmatprep.mubr.bf16.mxu0 0
      %4153 = vmatmul.mubr.bf16.gmra.mxu0 %v4065
      %v4154 = vpop.f32.mrf.mxu0
      %v4155 = vadd.f32 0.0, %v4154
      %v4156 = vpop.f32.mrf.mxu0
      %v4157 = vpop.f32.mrf.mxu0
      %v4158 = vadd.f32 0.0, %v4157
      %v4159 = vpop.f32.mrf.mxu0
      %4160 = vmatprep.mubr.bf16.mxu0 0
      %4161 = vmatmul.mubr.bf16.gmra.mxu0 %v4068
      %v4162 = vpop.f32.mrf.mxu0
      %v4163 = vadd.f32 0.0, %v4162
      %v4164 = vpop.f32.mrf.mxu0
      %v4165 = vpop.f32.mrf.mxu0
      %v4166 = vadd.f32 0.0, %v4165
      %v4167 = vpop.f32.mrf.mxu0
      %4168 = vmatprep.mubr.bf16.mxu0 0
      %4169 = vmatmul.mubr.bf16.gmra.mxu0 %v4071
      %v4170 = vpop.f32.mrf.mxu0
      %v4171 = vadd.f32 0.0, %v4170
      %v4172 = vpop.f32.mrf.mxu0
      %v4173 = vpop.f32.mrf.mxu0
      %v4174 = vadd.f32 0.0, %v4173
      %v4175 = vpop.f32.mrf.mxu0
      %4176 = vmatprep.mubr.bf16.mxu0 0
      %4177 = vmatmul.mubr.bf16.gmra.mxu0 %v4074
      %v4178 = vpop.f32.mrf.mxu0
      %v4179 = vadd.f32 0.0, %v4178
      %v4180 = vpop.f32.mrf.mxu0
      %v4181 = vpop.f32.mrf.mxu0
      %v4182 = vadd.f32 0.0, %v4181
      %v4183 = vpop.f32.mrf.mxu0
      %4184 = vmatprep.mubr.bf16.mxu0 0
      %4185 = vmatmul.mubr.bf16.gmra.mxu0 %v4077
      %v4186 = vpop.f32.mrf.mxu0
      %v4187 = vadd.f32 0.0, %v4186
      %v4188 = vpop.f32.mrf.mxu0
      %v4189 = vpop.f32.mrf.mxu0
      %v4190 = vadd.f32 0.0, %v4189
      %v4191 = vpop.f32.mrf.mxu0
      %4192 = vmatprep.mubr.bf16.mxu0 0
      %4193 = vmatmul.mubr.bf16.gmra.mxu0 %v4080
      %v4194 = vpop.f32.mrf.mxu0
      %v4195 = vadd.f32 0.0, %v4194
      %v4196 = vpop.f32.mrf.mxu0
      %v4197 = vpop.f32.mrf.mxu0
      %v4198 = vadd.f32 0.0, %v4197
      %v4199 = vpop.f32.mrf.mxu0
      %4200 = vmatprep.mubr.bf16.mxu0 0
      %4201 = vmatmul.mubr.bf16.gmra.mxu0 %v4083
      %v4202 = vpop.f32.mrf.mxu0
      %v4203 = vadd.f32 0.0, %v4202
      %v4204 = vpop.f32.mrf.mxu0
      %v4205 = vpop.f32.mrf.mxu0
      %v4206 = vadd.f32 0.0, %v4205
      %v4207 = vpop.f32.mrf.mxu0
      %4208 = vmatprep.mubr.bf16.mxu0 0
      %4209 = vmatmul.mubr.bf16.gmra.mxu0 %v4086
      %v4210 = vpop.f32.mrf.mxu0
      %v4211 = vadd.f32 0.0, %v4210
      %v4212 = vpop.f32.mrf.mxu0
      %v4213 = vpop.f32.mrf.mxu0
      %v4214 = vadd.f32 0.0, %v4213
      %v4215 = vpop.f32.mrf.mxu0
      %4216 = vmatprep.mubr.bf16.mxu0 0
      %4217 = vmatmul.mubr.bf16.gmra.mxu0 %v4089
      %v4218 = vpop.f32.mrf.mxu0
      %v4219 = vadd.f32 0.0, %v4218
      %v4220 = vpop.f32.mrf.mxu0
      %v4221 = vpop.f32.mrf.mxu0
      %v4222 = vadd.f32 0.0, %v4221
      %v4223 = vpop.f32.mrf.mxu0
      %4224 = vmatprep.mubr.bf16.mxu0 0
      %4225 = vmatmul.mubr.bf16.gmra.mxu0 %v4092
      %v4226 = vpop.f32.mrf.mxu0
      %v4227 = vadd.f32 0.0, %v4226
      %v4228 = vpop.f32.mrf.mxu0
      %v4229 = vpop.f32.mrf.mxu0
      %v4230 = vadd.f32 0.0, %v4229
      %v4231 = vpop.f32.mrf.mxu0
      %4232 = vmatprep.mubr.bf16.mxu0 0
      %4233 = vmatmul.mubr.bf16.gmra.mxu0 %v4095
      %v4234 = vpop.f32.mrf.mxu0
      %v4235 = vadd.f32 0.0, %v4234
      %v4236 = vpop.f32.mrf.mxu0
      %v4237 = vpop.f32.mrf.mxu0
      %v4238 = vadd.f32 0.0, %v4237
      %v4239 = vpop.f32.mrf.mxu0
      %4240 = vmatprep.mubr.bf16.mxu0 0
      %4241 = vmatmul.mubr.bf16.gmra.mxu0 %v4098
      %v4242 = vpop.f32.mrf.mxu0
      %v4243 = vadd.f32 0.0, %v4242
      %v4244 = vpop.f32.mrf.mxu0
      %v4245 = vpop.f32.mrf.mxu0
      %v4246 = vadd.f32 0.0, %v4245
      %v4247 = vpop.f32.mrf.mxu0
      %4248 = vmatprep.mubr.bf16.mxu0 0
      %4249 = vmatmul.mubr.bf16.gmra.mxu0 %v4101
      %v4250 = vpop.f32.mrf.mxu0
      %v4251 = vadd.f32 0.0, %v4250
      %v4252 = vpop.f32.mrf.mxu0
      %v4253 = vpop.f32.mrf.mxu0
      %v4254 = vadd.f32 0.0, %v4253
      %v4255 = vpop.f32.mrf.mxu0
      %4256 = vmatprep.mubr.bf16.mxu0 0
      %4257 = vmatmul.mubr.bf16.gmra.mxu0 %v4104
      %v4258 = vpop.f32.mrf.mxu0
      %v4259 = vadd.f32 0.0, %v4258
      %v4260 = vpop.f32.mrf.mxu0
      %v4261 = vpop.f32.mrf.mxu0
      %v4262 = vadd.f32 0.0, %v4261
      %v4263 = vpop.f32.mrf.mxu0
      %4264 = vmatprep.mubr.bf16.mxu0 0
      %4265 = vmatmul.mubr.bf16.gmra.mxu0 %v4107
      %v4266 = vpop.f32.mrf.mxu0
      %v4267 = vadd.f32 0.0, %v4266
      %v4268 = vpop.f32.mrf.mxu0
      %v4269 = vpop.f32.mrf.mxu0
      %v4270 = vadd.f32 0.0, %v4269
      %v4271 = vpop.f32.mrf.mxu0
      %4272 = vdwg.mxu0
      %v4273 = vadd.f32 %v3547, %v4147
      %v4274 = vadd.f32 %v3548, %v4150
      %v4275 = vadd.f32 %v3549, %v4155
      %v4276 = vadd.f32 %v3550, %v4158
      %v4277 = vadd.f32 %v3551, %v4163
      %v4278 = vadd.f32 %v3552, %v4166
      %v4279 = vadd.f32 %v3553, %v4171
      %v4280 = vadd.f32 %v3554, %v4174
      %v4281 = vadd.f32 %v3555, %v4179
      %v4282 = vadd.f32 %v3556, %v4182
      %v4283 = vadd.f32 %v3557, %v4187
      %v4284 = vadd.f32 %v3558, %v4190
      %v4285 = vadd.f32 %v3559, %v4195
      %v4286 = vadd.f32 %v3560, %v4198
      %v4287 = vadd.f32 %v3561, %v4203
      %v4288 = vadd.f32 %v3562, %v4206
      %v4289 = vadd.f32 %v3563, %v4211
      %v4290 = vadd.f32 %v3564, %v4214
      %v4291 = vadd.f32 %v3565, %v4219
      %v4292 = vadd.f32 %v3566, %v4222
      %v4293 = vadd.f32 %v3567, %v4227
      %v4294 = vadd.f32 %v3568, %v4230
      %v4295 = vadd.f32 %v3569, %v4235
      %v4296 = vadd.f32 %v3570, %v4238
      %v4297 = vadd.f32 %v3571, %v4243
      %v4298 = vadd.f32 %v3572, %v4246
      %v4299 = vadd.f32 %v3573, %v4251
      %v4300 = vadd.f32 %v3574, %v4254
      %v4301 = vadd.f32 %v3575, %v4259
      %v4302 = vadd.f32 %v3576, %v4262
      %v4303 = vadd.f32 %v3577, %v4267
      %v4304 = vadd.f32 %v3578, %v4270
      %v4305 = vld [vmem:[%s3220] sm:$0xe]
      %v4306 = vld [vmem:[%s3220 + $0xc] sm:$0xe]
      %v4307 = vld [vmem:[%s3220 + $0x18] sm:$0xe]
      %v4308 = vld [vmem:[%s3220 + $0x24] sm:$0xe]
      %v4309 = vld [vmem:[%s3220 + $0x30] sm:$0xe]
      %v4310 = vld [vmem:[%s3220 + $0x3c] sm:$0xe]
      %v4311 = vld [vmem:[%s3220 + $0x48] sm:$0xe]
      %v4312 = vld [vmem:[%s3220 + $0x54] sm:$0xe]
      %v4313 = vld [vmem:[%s3220 + $0x60] sm:$0xe]
      %v4314 = vld [vmem:[%s3220 + $0x6c] sm:$0xe]
      %v4315 = vld [vmem:[%s3220 + $0x78] sm:$0xe]
      %v4316 = vld [vmem:[%s3220 + $0x84] sm:$0xe]
      %v4317 = vld [vmem:[%s3220 + $0x90] sm:$0xe]
      %v4318 = vld [vmem:[%s3220 + $0x9c] sm:$0xe]
      %v4319 = vld [vmem:[%s3220 + $0xa8] sm:$0xe]
      %v4320 = vld [vmem:[%s3220 + $0xb4] sm:$0xe]
      %v4369 = vrot.slane %v4305, 5
      %v4370 = vrot.slane %v4369, 4
      %v4371 = vrot.slane %v3580, 5
      %v4372 = vsel %vm1252, %v4370, %v4371
      %v4373 = vrot.slane %v4371, 4
      %v4374 = vrot.slane %v3581, 5
      %v4375 = vsel %vm1252, %v4373, %v4374
      %v4376 = vrot.slane %v4306, 5
      %v4377 = vrot.slane %v4376, 4
      %v4378 = vrot.slane %v3583, 5
      %v4379 = vsel %vm1252, %v4377, %v4378
      %v4380 = vrot.slane %v4378, 4
      %v4381 = vrot.slane %v3584, 5
      %v4382 = vsel %vm1252, %v4380, %v4381
      %v4383 = vrot.slane %v4307, 5
      %v4384 = vrot.slane %v4383, 4
      %v4385 = vrot.slane %v3586, 5
      %v4386 = vsel %vm1252, %v4384, %v4385
      %v4387 = vrot.slane %v4385, 4
      %v4388 = vrot.slane %v3587, 5
      %v4389 = vsel %vm1252, %v4387, %v4388
      %v4390 = vrot.slane %v4308, 5
      %v4391 = vrot.slane %v4390, 4
      %v4392 = vrot.slane %v3589, 5
      %v4393 = vsel %vm1252, %v4391, %v4392
      %v4394 = vrot.slane %v4392, 4
      %v4395 = vrot.slane %v3590, 5
      %v4396 = vsel %vm1252, %v4394, %v4395
      %v4397 = vrot.slane %v4309, 5
      %v4398 = vrot.slane %v4397, 4
      %v4399 = vrot.slane %v3592, 5
      %v4400 = vsel %vm1252, %v4398, %v4399
      %v4401 = vrot.slane %v4399, 4
      %v4402 = vrot.slane %v3593, 5
      %v4403 = vsel %vm1252, %v4401, %v4402
      %v4404 = vrot.slane %v4310, 5
      %v4405 = vrot.slane %v4404, 4
      %v4406 = vrot.slane %v3595, 5
      %v4407 = vsel %vm1252, %v4405, %v4406
      %v4408 = vrot.slane %v4406, 4
      %v4409 = vrot.slane %v3596, 5
      %v4410 = vsel %vm1252, %v4408, %v4409
      %v4411 = vrot.slane %v4311, 5
      %v4412 = vrot.slane %v4411, 4
      %v4413 = vrot.slane %v3598, 5
      %v4414 = vsel %vm1252, %v4412, %v4413
      %v4415 = vrot.slane %v4413, 4
      %v4416 = vrot.slane %v3599, 5
      %v4417 = vsel %vm1252, %v4415, %v4416
      %v4418 = vrot.slane %v4312, 5
      %v4419 = vrot.slane %v4418, 4
      %v4420 = vrot.slane %v3601, 5
      %v4421 = vsel %vm1252, %v4419, %v4420
      %v4422 = vrot.slane %v4420, 4
      %v4423 = vrot.slane %v3602, 5
      %v4424 = vsel %vm1252, %v4422, %v4423
      %v4425 = vrot.slane %v4313, 5
      %v4426 = vrot.slane %v4425, 4
      %v4427 = vrot.slane %v3604, 5
      %v4428 = vsel %vm1252, %v4426, %v4427
      %v4429 = vrot.slane %v4427, 4
      %v4430 = vrot.slane %v3605, 5
      %v4431 = vsel %vm1252, %v4429, %v4430
      %v4432 = vrot.slane %v4314, 5
      %v4433 = vrot.slane %v4432, 4
      %v4434 = vrot.slane %v3607, 5
      %v4435 = vsel %vm1252, %v4433, %v4434
      %v4436 = vrot.slane %v4434, 4
      %v4437 = vrot.slane %v3608, 5
      %v4438 = vsel %vm1252, %v4436, %v4437
      %v4439 = vrot.slane %v4315, 5
      %v4440 = vrot.slane %v4439, 4
      %v4441 = vrot.slane %v3610, 5
      %v4442 = vsel %vm1252, %v4440, %v4441
      %v4443 = vrot.slane %v4441, 4
      %v4444 = vrot.slane %v3611, 5
      %v4445 = vsel %vm1252, %v4443, %v4444
      %v4446 = vrot.slane %v4316, 5
      %v4447 = vrot.slane %v4446, 4
      %v4448 = vrot.slane %v3613, 5
      %v4449 = vsel %vm1252, %v4447, %v4448
      %v4450 = vrot.slane %v4448, 4
      %v4451 = vrot.slane %v3614, 5
      %v4452 = vsel %vm1252, %v4450, %v4451
      %v4453 = vrot.slane %v4317, 5
      %v4454 = vrot.slane %v4453, 4
      %v4455 = vrot.slane %v3616, 5
      %v4456 = vsel %vm1252, %v4454, %v4455
      %v4457 = vrot.slane %v4455, 4
      %v4458 = vrot.slane %v3617, 5
      %v4459 = vsel %vm1252, %v4457, %v4458
      %v4460 = vrot.slane %v4318, 5
      %v4461 = vrot.slane %v4460, 4
      %v4462 = vrot.slane %v3619, 5
      %v4463 = vsel %vm1252, %v4461, %v4462
      %v4464 = vrot.slane %v4462, 4
      %v4465 = vrot.slane %v3620, 5
      %v4466 = vsel %vm1252, %v4464, %v4465
      %v4467 = vrot.slane %v4319, 5
      %v4468 = vrot.slane %v4467, 4
      %v4469 = vrot.slane %v3622, 5
      %v4470 = vsel %vm1252, %v4468, %v4469
      %v4471 = vrot.slane %v4469, 4
      %v4472 = vrot.slane %v3623, 5
      %v4473 = vsel %vm1252, %v4471, %v4472
      %v4474 = vrot.slane %v4320, 5
      %v4475 = vrot.slane %v4474, 4
      %v4476 = vrot.slane %v3625, 5
      %v4477 = vsel %vm1252, %v4475, %v4476
      %v4478 = vrot.slane %v4476, 4
      %v4479 = vrot.slane %v3626, 5
      %v4480 = vsel %vm1252, %v4478, %v4479
      %s4481 = scalar_lea.vmem %s1, 16
      %v4482 = vld [vmem:[%s4481] sm:$0x3]
      %v4483 = vunpack.c.l.b16 %v4372
      %v4484 = vunpack.c.l.b16 %v4375
      %v4485 = vunpack.c.l.b16 %v4379
      %v4486 = vunpack.c.l.b16 %v4382
      %v4487 = vunpack.c.l.b16 %v4386
      %v4488 = vunpack.c.l.b16 %v4389
      %v4489 = vunpack.c.l.b16 %v4393
      %v4490 = vunpack.c.l.b16 %v4396
      %v4491 = vunpack.c.l.b16 %v4400
      %v4492 = vunpack.c.l.b16 %v4403
      %v4493 = vunpack.c.l.b16 %v4407
      %v4494 = vunpack.c.l.b16 %v4410
      %v4495 = vunpack.c.l.b16 %v4414
      %v4496 = vunpack.c.l.b16 %v4417
      %v4497 = vunpack.c.l.b16 %v4421
      %v4498 = vunpack.c.l.b16 %v4424
      %v4499 = vunpack.c.l.b16 %v4428
      %v4500 = vunpack.c.l.b16 %v4431
      %v4501 = vunpack.c.l.b16 %v4435
      %v4502 = vunpack.c.l.b16 %v4438
      %v4503 = vunpack.c.l.b16 %v4442
      %v4504 = vunpack.c.l.b16 %v4445
      %v4505 = vunpack.c.l.b16 %v4449
      %v4506 = vunpack.c.l.b16 %v4452
      %v4507 = vunpack.c.l.b16 %v4456
      %v4508 = vunpack.c.l.b16 %v4459
      %v4509 = vunpack.c.l.b16 %v4463
      %v4510 = vunpack.c.l.b16 %v4466
      %v4511 = vunpack.c.l.b16 %v4470
      %v4512 = vunpack.c.l.b16 %v4473
      %v4513 = vunpack.c.l.b16 %v4477
      %v4514 = vunpack.c.l.b16 %v4480
      %v4515 = vpack.c.b16 %v4484, %v4483
      %v4516 = vpack.c.b16 %v4486, %v4485
      %v4517 = vpack.c.b16 %v4488, %v4487
      %v4518 = vpack.c.b16 %v4490, %v4489
      %v4519 = vpack.c.b16 %v4492, %v4491
      %v4520 = vpack.c.b16 %v4494, %v4493
      %v4521 = vpack.c.b16 %v4496, %v4495
      %v4522 = vpack.c.b16 %v4498, %v4497
      %v4523 = vpack.c.b16 %v4500, %v4499
      %v4524 = vpack.c.b16 %v4502, %v4501
      %v4525 = vpack.c.b16 %v4504, %v4503
      %v4526 = vpack.c.b16 %v4506, %v4505
      %v4527 = vpack.c.b16 %v4508, %v4507
      %v4528 = vpack.c.b16 %v4510, %v4509
      %v4529 = vpack.c.b16 %v4512, %v4511
      %v4530 = vpack.c.b16 %v4514, %v4513
      %v4532 = vsel %vm696, %v4515, 0
      %v4535 = vsel %vm696, %v4516, 0
      %v4538 = vsel %vm696, %v4517, 0
      %v4541 = vsel %vm696, %v4518, 0
      %v4544 = vsel %vm696, %v4519, 0
      %v4547 = vsel %vm696, %v4520, 0
      %v4550 = vsel %vm696, %v4521, 0
      %v4553 = vsel %vm696, %v4522, 0
      %v4556 = vsel %vm696, %v4523, 0
      %v4559 = vsel %vm696, %v4524, 0
      %v4562 = vsel %vm696, %v4525, 0
      %v4565 = vsel %vm696, %v4526, 0
      %v4568 = vsel %vm696, %v4527, 0
      %v4571 = vsel %vm696, %v4528, 0
      %v4574 = vsel %vm696, %v4529, 0
      %v4577 = vsel %vm696, %v4530, 0
      %v4580 = vsel %vm745, %v4482, 0
      %4582 = vmatprep.subr.bf16.mxu0 0
      %4583 = vmatpush1.bf16.msra.mxu0 0
      %4584 = vmatprep.subr.bf16.mxu0 0
      %4585 = vmatpush1.bf16.msra.mxu0 0
      %4586 = vmatprep.subr.bf16.mxu0 0
      %4587 = vmatpush1.bf16.msra.mxu0 0
      %4588 = vmatprep.subr.bf16.mxu0 0
      %4589 = vmatpush1.bf16.msra.mxu0 0
      %4590 = vmatprep.subr.bf16.mxu0 0
      %4591 = vmatpush1.bf16.msra.mxu0 0
      %4592 = vmatprep.subr.bf16.mxu0 0
      %4593 = vmatpush1.bf16.msra.mxu0 0
      %4594 = vmatprep.subr.bf16.mxu0 0
      %4595 = vmatpush1.bf16.msra.mxu0 0
      %4596 = vmatprep.subr.bf16.mxu0 0
      %4597 = vmatpush1.bf16.msra.mxu0 %v4580
      %4598 = vmatprep.subr.bf16.mxu0 0
      %4599 = vmatpush2.bf16.msra.mxu0 0
      %4600 = vmatprep.subr.bf16.mxu0 0
      %4601 = vmatpush2.bf16.msra.mxu0 0
      %4602 = vmatprep.subr.bf16.mxu0 0
      %4603 = vmatpush2.bf16.msra.mxu0 0
      %4604 = vmatprep.subr.bf16.mxu0 0
      %4605 = vmatpush2.bf16.msra.mxu0 0
      %4606 = vmatprep.subr.bf16.mxu0 0
      %4607 = vmatpush2.bf16.msra.mxu0 0
      %4608 = vmatprep.subr.bf16.mxu0 0
      %4609 = vmatpush2.bf16.msra.mxu0 0
      %4610 = vmatprep.subr.bf16.mxu0 0
      %4611 = vmatpush2.bf16.msra.mxu0 0
      %4612 = vmatprep.subr.bf16.mxu0 0
      %4613 = vmatpush2.bf16.msra.mxu0 0
      %4614 = vmatprep.mubr.bf16.mxu0 0
      %4615 = vmatmul.mubr.bf16.gmra.mxu0 %v4532
      %v4616 = vpop.f32.mrf.mxu0
      %v4617 = vadd.f32 0.0, %v4616
      %v4618 = vpop.f32.mrf.mxu0
      %v4619 = vpop.f32.mrf.mxu0
      %v4620 = vadd.f32 0.0, %v4619
      %v4621 = vpop.f32.mrf.mxu0
      %4622 = vmatprep.mubr.bf16.mxu0 0
      %4623 = vmatmul.mubr.bf16.gmra.mxu0 %v4535
      %v4624 = vpop.f32.mrf.mxu0
      %v4625 = vadd.f32 0.0, %v4624
      %v4626 = vpop.f32.mrf.mxu0
      %v4627 = vpop.f32.mrf.mxu0
      %v4628 = vadd.f32 0.0, %v4627
      %v4629 = vpop.f32.mrf.mxu0
      %4630 = vmatprep.mubr.bf16.mxu0 0
      %4631 = vmatmul.mubr.bf16.gmra.mxu0 %v4538
      %v4632 = vpop.f32.mrf.mxu0
      %v4633 = vadd.f32 0.0, %v4632
      %v4634 = vpop.f32.mrf.mxu0
      %v4635 = vpop.f32.mrf.mxu0
      %v4636 = vadd.f32 0.0, %v4635
      %v4637 = vpop.f32.mrf.mxu0
      %4638 = vmatprep.mubr.bf16.mxu0 0
      %4639 = vmatmul.mubr.bf16.gmra.mxu0 %v4541
      %v4640 = vpop.f32.mrf.mxu0
      %v4641 = vadd.f32 0.0, %v4640
      %v4642 = vpop.f32.mrf.mxu0
      %v4643 = vpop.f32.mrf.mxu0
      %v4644 = vadd.f32 0.0, %v4643
      %v4645 = vpop.f32.mrf.mxu0
      %4646 = vmatprep.mubr.bf16.mxu0 0
      %4647 = vmatmul.mubr.bf16.gmra.mxu0 %v4544
      %v4648 = vpop.f32.mrf.mxu0
      %v4649 = vadd.f32 0.0, %v4648
      %v4650 = vpop.f32.mrf.mxu0
      %v4651 = vpop.f32.mrf.mxu0
      %v4652 = vadd.f32 0.0, %v4651
      %v4653 = vpop.f32.mrf.mxu0
      %4654 = vmatprep.mubr.bf16.mxu0 0
      %4655 = vmatmul.mubr.bf16.gmra.mxu0 %v4547
      %v4656 = vpop.f32.mrf.mxu0
      %v4657 = vadd.f32 0.0, %v4656
      %v4658 = vpop.f32.mrf.mxu0
      %v4659 = vpop.f32.mrf.mxu0
      %v4660 = vadd.f32 0.0, %v4659
      %v4661 = vpop.f32.mrf.mxu0
      %4662 = vmatprep.mubr.bf16.mxu0 0
      %4663 = vmatmul.mubr.bf16.gmra.mxu0 %v4550
      %v4664 = vpop.f32.mrf.mxu0
      %v4665 = vadd.f32 0.0, %v4664
      %v4666 = vpop.f32.mrf.mxu0
      %v4667 = vpop.f32.mrf.mxu0
      %v4668 = vadd.f32 0.0, %v4667
      %v4669 = vpop.f32.mrf.mxu0
      %4670 = vmatprep.mubr.bf16.mxu0 0
      %4671 = vmatmul.mubr.bf16.gmra.mxu0 %v4553
      %v4672 = vpop.f32.mrf.mxu0
      %v4673 = vadd.f32 0.0, %v4672
      %v4674 = vpop.f32.mrf.mxu0
      %v4675 = vpop.f32.mrf.mxu0
      %v4676 = vadd.f32 0.0, %v4675
      %v4677 = vpop.f32.mrf.mxu0
      %4678 = vmatprep.mubr.bf16.mxu0 0
      %4679 = vmatmul.mubr.bf16.gmra.mxu0 %v4556
      %v4680 = vpop.f32.mrf.mxu0
      %v4681 = vadd.f32 0.0, %v4680
      %v4682 = vpop.f32.mrf.mxu0
      %v4683 = vpop.f32.mrf.mxu0
      %v4684 = vadd.f32 0.0, %v4683
      %v4685 = vpop.f32.mrf.mxu0
      %4686 = vmatprep.mubr.bf16.mxu0 0
      %4687 = vmatmul.mubr.bf16.gmra.mxu0 %v4559
      %v4688 = vpop.f32.mrf.mxu0
      %v4689 = vadd.f32 0.0, %v4688
      %v4690 = vpop.f32.mrf.mxu0
      %v4691 = vpop.f32.mrf.mxu0
      %v4692 = vadd.f32 0.0, %v4691
      %v4693 = vpop.f32.mrf.mxu0
      %4694 = vmatprep.mubr.bf16.mxu0 0
      %4695 = vmatmul.mubr.bf16.gmra.mxu0 %v4562
      %v4696 = vpop.f32.mrf.mxu0
      %v4697 = vadd.f32 0.0, %v4696
      %v4698 = vpop.f32.mrf.mxu0
      %v4699 = vpop.f32.mrf.mxu0
      %v4700 = vadd.f32 0.0, %v4699
      %v4701 = vpop.f32.mrf.mxu0
      %4702 = vmatprep.mubr.bf16.mxu0 0
      %4703 = vmatmul.mubr.bf16.gmra.mxu0 %v4565
      %v4704 = vpop.f32.mrf.mxu0
      %v4705 = vadd.f32 0.0, %v4704
      %v4706 = vpop.f32.mrf.mxu0
      %v4707 = vpop.f32.mrf.mxu0
      %v4708 = vadd.f32 0.0, %v4707
      %v4709 = vpop.f32.mrf.mxu0
      %4710 = vmatprep.mubr.bf16.mxu0 0
      %4711 = vmatmul.mubr.bf16.gmra.mxu0 %v4568
      %v4712 = vpop.f32.mrf.mxu0
      %v4713 = vadd.f32 0.0, %v4712
      %v4714 = vpop.f32.mrf.mxu0
      %v4715 = vpop.f32.mrf.mxu0
      %v4716 = vadd.f32 0.0, %v4715
      %v4717 = vpop.f32.mrf.mxu0
      %4718 = vmatprep.mubr.bf16.mxu0 0
      %4719 = vmatmul.mubr.bf16.gmra.mxu0 %v4571
      %v4720 = vpop.f32.mrf.mxu0
      %v4721 = vadd.f32 0.0, %v4720
      %v4722 = vpop.f32.mrf.mxu0
      %v4723 = vpop.f32.mrf.mxu0
      %v4724 = vadd.f32 0.0, %v4723
      %v4725 = vpop.f32.mrf.mxu0
      %4726 = vmatprep.mubr.bf16.mxu0 0
      %4727 = vmatmul.mubr.bf16.gmra.mxu0 %v4574
      %v4728 = vpop.f32.mrf.mxu0
      %v4729 = vadd.f32 0.0, %v4728
      %v4730 = vpop.f32.mrf.mxu0
      %v4731 = vpop.f32.mrf.mxu0
      %v4732 = vadd.f32 0.0, %v4731
      %v4733 = vpop.f32.mrf.mxu0
      %4734 = vmatprep.mubr.bf16.mxu0 0
      %4735 = vmatmul.mubr.bf16.gmra.mxu0 %v4577
      %v4736 = vpop.f32.mrf.mxu0
      %v4737 = vadd.f32 0.0, %v4736
      %v4738 = vpop.f32.mrf.mxu0
      %v4739 = vpop.f32.mrf.mxu0
      %v4740 = vadd.f32 0.0, %v4739
      %v4741 = vpop.f32.mrf.mxu0
      %4742 = vdwg.mxu0
      %v4743 = vadd.f32 %v4273, %v4617
      %v4744 = vadd.f32 %v4274, %v4620
      %v4745 = vadd.f32 %v4275, %v4625
      %v4746 = vadd.f32 %v4276, %v4628
      %v4747 = vadd.f32 %v4277, %v4633
      %v4748 = vadd.f32 %v4278, %v4636
      %v4749 = vadd.f32 %v4279, %v4641
      %v4750 = vadd.f32 %v4280, %v4644
      %v4751 = vadd.f32 %v4281, %v4649
      %v4752 = vadd.f32 %v4282, %v4652
      %v4753 = vadd.f32 %v4283, %v4657
      %v4754 = vadd.f32 %v4284, %v4660
      %v4755 = vadd.f32 %v4285, %v4665
      %v4756 = vadd.f32 %v4286, %v4668
      %v4757 = vadd.f32 %v4287, %v4673
      %v4758 = vadd.f32 %v4288, %v4676
      %v4759 = vadd.f32 %v4289, %v4681
      %v4760 = vadd.f32 %v4290, %v4684
      %v4761 = vadd.f32 %v4291, %v4689
      %v4762 = vadd.f32 %v4292, %v4692
      %v4763 = vadd.f32 %v4293, %v4697
      %v4764 = vadd.f32 %v4294, %v4700
      %v4765 = vadd.f32 %v4295, %v4705
      %v4766 = vadd.f32 %v4296, %v4708
      %v4767 = vadd.f32 %v4297, %v4713
      %v4768 = vadd.f32 %v4298, %v4716
      %v4769 = vadd.f32 %v4299, %v4721
      %v4770 = vadd.f32 %v4300, %v4724
      %v4771 = vadd.f32 %v4301, %v4729
      %v4772 = vadd.f32 %v4302, %v4732
      %v4773 = vadd.f32 %v4303, %v4737
      %v4774 = vadd.f32 %v4304, %v4740
      %p4775 = scmp.eq.s32.totalorder %s20, 0
      // Predicated region
      $region29: #{norm_act_conv_transpose.2} parent=27 // pred_check
        %p4776 = pneg %p4775
      $region30: #{norm_act_conv_transpose.2} parent=27 // pred_check_branch
        %4778 = sbr.rel (%p4776) target = $region32
      $region31: #{norm_act_conv_transpose.2} parent=27 // pred_region
        %vm4779 = vcmask 58368
        %4780 = vst.msk [vmem:[%s204] sm:$0x3] %vm4779, 0.0
      $region32: #{norm_act_conv_transpose.2} parent=27 // pred_fallthru
        _
      %vm4781 = vcmask 64512
      %v4782 = vsel %vm4781, %v4743, 0.0
      %v4783 = vsel %vm4781, %v4744, 0.0
      %v4784 = vadd.f32 %v4782, %v4783
      %v4785 = vsel %vm4781, %v4745, 0.0
      %v4786 = vadd.f32 %v4784, %v4785
      %v4787 = vsel %vm4781, %v4746, 0.0
      %v4788 = vadd.f32 %v4786, %v4787
      %v4789 = vsel %vm4781, %v4747, 0.0
      %v4790 = vadd.f32 %v4788, %v4789
      %v4791 = vsel %vm4781, %v4748, 0.0
      %v4792 = vadd.f32 %v4790, %v4791
      %v4793 = vsel %vm4781, %v4749, 0.0
      %v4794 = vadd.f32 %v4792, %v4793
      %v4795 = vsel %vm4781, %v4750, 0.0
      %v4796 = vadd.f32 %v4794, %v4795
      %v4797 = vsel %vm4781, %v4751, 0.0
      %v4798 = vadd.f32 %v4796, %v4797
      %v4799 = vsel %vm4781, %v4752, 0.0
      %v4800 = vadd.f32 %v4798, %v4799
      %v4801 = vsel %vm4781, %v4753, 0.0
      %v4802 = vadd.f32 %v4800, %v4801
      %v4803 = vsel %vm4781, %v4754, 0.0
      %v4804 = vadd.f32 %v4802, %v4803
      %v4805 = vsel %vm4781, %v4755, 0.0
      %v4806 = vadd.f32 %v4804, %v4805
      %v4807 = vsel %vm4781, %v4756, 0.0
      %v4808 = vadd.f32 %v4806, %v4807
      %v4809 = vsel %vm4781, %v4757, 0.0
      %v4810 = vadd.f32 %v4808, %v4809
      %v4811 = vsel %vm4781, %v4758, 0.0
      %v4812 = vadd.f32 %v4810, %v4811
      %v4813 = vsel %vm4781, %v4759, 0.0
      %v4814 = vadd.f32 %v4812, %v4813
      %v4815 = vsel %vm4781, %v4760, 0.0
      %v4816 = vadd.f32 %v4814, %v4815
      %v4817 = vsel %vm4781, %v4761, 0.0
      %v4818 = vadd.f32 %v4816, %v4817
      %v4819 = vsel %vm4781, %v4762, 0.0
      %v4820 = vadd.f32 %v4818, %v4819
      %v4821 = vsel %vm4781, %v4763, 0.0
      %v4822 = vadd.f32 %v4820, %v4821
      %v4823 = vsel %vm4781, %v4764, 0.0
      %v4824 = vadd.f32 %v4822, %v4823
      %v4825 = vsel %vm4781, %v4765, 0.0
      %v4826 = vadd.f32 %v4824, %v4825
      %v4827 = vsel %vm4781, %v4766, 0.0
      %v4828 = vadd.f32 %v4826, %v4827
      %v4829 = vsel %vm4781, %v4767, 0.0
      %v4830 = vadd.f32 %v4828, %v4829
      %v4831 = vsel %vm4781, %v4768, 0.0
      %v4832 = vadd.f32 %v4830, %v4831
      %v4833 = vsel %vm4781, %v4769, 0.0
      %v4834 = vadd.f32 %v4832, %v4833
      %v4835 = vsel %vm4781, %v4770, 0.0
      %v4836 = vadd.f32 %v4834, %v4835
      %v4837 = vsel %vm4781, %v4771, 0.0
      %v4838 = vadd.f32 %v4836, %v4837
      %v4839 = vsel %vm4781, %v4772, 0.0
      %v4840 = vadd.f32 %v4838, %v4839
      %v4841 = vsel %vm4781, %v4773, 0.0
      %v4842 = vadd.f32 %v4840, %v4841
      %v4843 = vsel %vm4781, %v4774, 0.0
      %v4844 = vadd.f32 %v4842, %v4843
      %v4845 = vrot.slane %v4844, 4
      %v4846 = vadd.f32 %v4844, %v4845
      %v4847 = vrot.slane %v4846, 2
      %v4848 = vadd.f32 %v4846, %v4847
      %v4849 = vrot.slane %v4848, 1
      %v4850 = vadd.f32 %v4848, %v4849
      %v4851 = vmul.f32 %v4743, %v4743
      %v4852 = vmul.f32 %v4744, %v4744
      %v4853 = vmul.f32 %v4745, %v4745
      %v4854 = vmul.f32 %v4746, %v4746
      %v4855 = vmul.f32 %v4747, %v4747
      %v4856 = vmul.f32 %v4748, %v4748
      %v4857 = vmul.f32 %v4749, %v4749
      %v4858 = vmul.f32 %v4750, %v4750
      %v4859 = vmul.f32 %v4751, %v4751
      %v4860 = vmul.f32 %v4752, %v4752
      %v4861 = vmul.f32 %v4753, %v4753
      %v4862 = vmul.f32 %v4754, %v4754
      %v4863 = vmul.f32 %v4755, %v4755
      %v4864 = vmul.f32 %v4756, %v4756
      %v4865 = vmul.f32 %v4757, %v4757
      %v4866 = vmul.f32 %v4758, %v4758
      %v4867 = vmul.f32 %v4759, %v4759
      %v4868 = vmul.f32 %v4760, %v4760
      %v4869 = vmul.f32 %v4761, %v4761
      %v4870 = vmul.f32 %v4762, %v4762
      %v4871 = vmul.f32 %v4763, %v4763
      %v4872 = vmul.f32 %v4764, %v4764
      %v4873 = vmul.f32 %v4765, %v4765
      %v4874 = vmul.f32 %v4766, %v4766
      %v4875 = vmul.f32 %v4767, %v4767
      %v4876 = vmul.f32 %v4768, %v4768
      %v4877 = vmul.f32 %v4769, %v4769
      %v4878 = vmul.f32 %v4770, %v4770
      %v4879 = vmul.f32 %v4771, %v4771
      %v4880 = vmul.f32 %v4772, %v4772
      %v4881 = vmul.f32 %v4773, %v4773
      %v4882 = vmul.f32 %v4774, %v4774
      %v4883 = vsel %vm4781, %v4851, 0.0
      %v4884 = vsel %vm4781, %v4852, 0.0
      %v4885 = vadd.f32 %v4883, %v4884
      %v4886 = vsel %vm4781, %v4853, 0.0
      %v4887 = vadd.f32 %v4885, %v4886
      %v4888 = vsel %vm4781, %v4854, 0.0
      %v4889 = vadd.f32 %v4887, %v4888
      %v4890 = vsel %vm4781, %v4855, 0.0
      %v4891 = vadd.f32 %v4889, %v4890
      %v4892 = vsel %vm4781, %v4856, 0.0
      %v4893 = vadd.f32 %v4891, %v4892
      %v4894 = vsel %vm4781, %v4857, 0.0
      %v4895 = vadd.f32 %v4893, %v4894
      %v4896 = vsel %vm4781, %v4858, 0.0
      %v4897 = vadd.f32 %v4895, %v4896
      %v4898 = vsel %vm4781, %v4859, 0.0
      %v4899 = vadd.f32 %v4897, %v4898
      %v4900 = vsel %vm4781, %v4860, 0.0
      %v4901 = vadd.f32 %v4899, %v4900
      %v4902 = vsel %vm4781, %v4861, 0.0
      %v4903 = vadd.f32 %v4901, %v4902
      %v4904 = vsel %vm4781, %v4862, 0.0
      %v4905 = vadd.f32 %v4903, %v4904
      %v4906 = vsel %vm4781, %v4863, 0.0
      %v4907 = vadd.f32 %v4905, %v4906
      %v4908 = vsel %vm4781, %v4864, 0.0
      %v4909 = vadd.f32 %v4907, %v4908
      %v4910 = vsel %vm4781, %v4865, 0.0
      %v4911 = vadd.f32 %v4909, %v4910
      %v4912 = vsel %vm4781, %v4866, 0.0
      %v4913 = vadd.f32 %v4911, %v4912
      %v4914 = vsel %vm4781, %v4867, 0.0
      %v4915 = vadd.f32 %v4913, %v4914
      %v4916 = vsel %vm4781, %v4868, 0.0
      %v4917 = vadd.f32 %v4915, %v4916
      %v4918 = vsel %vm4781, %v4869, 0.0
      %v4919 = vadd.f32 %v4917, %v4918
      %v4920 = vsel %vm4781, %v4870, 0.0
      %v4921 = vadd.f32 %v4919, %v4920
      %v4922 = vsel %vm4781, %v4871, 0.0
      %v4923 = vadd.f32 %v4921, %v4922
      %v4924 = vsel %vm4781, %v4872, 0.0
      %v4925 = vadd.f32 %v4923, %v4924
      %v4926 = vsel %vm4781, %v4873, 0.0
      %v4927 = vadd.f32 %v4925, %v4926
      %v4928 = vsel %vm4781, %v4874, 0.0
      %v4929 = vadd.f32 %v4927, %v4928
      %v4930 = vsel %vm4781, %v4875, 0.0
      %v4931 = vadd.f32 %v4929, %v4930
      %v4932 = vsel %vm4781, %v4876, 0.0
      %v4933 = vadd.f32 %v4931, %v4932
      %v4934 = vsel %vm4781, %v4877, 0.0
      %v4935 = vadd.f32 %v4933, %v4934
      %v4936 = vsel %vm4781, %v4878, 0.0
      %v4937 = vadd.f32 %v4935, %v4936
      %v4938 = vsel %vm4781, %v4879, 0.0
      %v4939 = vadd.f32 %v4937, %v4938
      %v4940 = vsel %vm4781, %v4880, 0.0
      %v4941 = vadd.f32 %v4939, %v4940
      %v4942 = vsel %vm4781, %v4881, 0.0
      %v4943 = vadd.f32 %v4941, %v4942
      %v4944 = vsel %vm4781, %v4882, 0.0
      %v4945 = vadd.f32 %v4943, %v4944
      %v4946 = vrot.slane %v4945, 4
      %v4947 = vadd.f32 %v4945, %v4946
      %v4948 = vrot.slane %v4947, 2
      %v4949 = vadd.f32 %v4947, %v4948
      %v4950 = vrot.slane %v4949, 1
      %v4951 = vadd.f32 %v4949, %v4950
      %v4952 = vld [vmem:[%s204] sm:$0x3]
      %vm4953 = vcmask 1040384
      %v4954 = vsel %vm4953, %v4850, %v4951
      %v4955 = vadd.f32 %v4952, %v4954
      %vm4956 = vcmask 58368
      %4957 = vst.msk [vmem:[%s204] sm:$0x3] %vm4956, %v4955
      %4958 = vxpose.xlu0.b32.start [1/16] %v4743, 128
      %4959 = vxpose.xlu0.b32.cont [2/16] %v4744, 128
      %4960 = vxpose.xlu0.b32.cont [3/16] %v4745, 128
      %4961 = vxpose.xlu0.b32.cont [4/16] %v4746, 128
      %4962 = vxpose.xlu0.b32.cont [5/16] %v4747, 128
      %4963 = vxpose.xlu0.b32.cont [6/16] %v4748, 128
      %4964 = vxpose.xlu0.b32.cont [7/16] %v4749, 128
      %4965 = vxpose.xlu0.b32.cont [8/16] %v4750, 128
      %4966 = vxpose.xlu0.b32.cont [9/16] %v4751, 128
      %4967 = vxpose.xlu0.b32.cont [10/16] %v4752, 128
      %4968 = vxpose.xlu0.b32.cont [11/16] %v4753, 128
      %4969 = vxpose.xlu0.b32.cont [12/16] %v4754, 128
      %4970 = vxpose.xlu0.b32.cont [13/16] %v4755, 128
      %4971 = vxpose.xlu0.b32.cont [14/16] %v4756, 128
      %4972 = vxpose.xlu0.b32.cont [15/16] %v4757, 128
      %4973 = vxpose.xlu0.b32.end [16/16] %v4758, 128
      %v4974 = vpop.trf.xlu0
      %v4975 = vpop.trf.xlu0
      %v4976 = vpop.trf.xlu0
      %v4977 = vpop.trf.xlu0
      %v4978 = vpop.trf.xlu0
      %v4979 = vpop.trf.xlu0
      %v4980 = vpop.trf.xlu0
      %v4981 = vpop.trf.xlu0
      %v4982 = vpop.trf.xlu0
      %v4983 = vpop.trf.xlu0
      %v4984 = vpop.trf.xlu0
      %v4985 = vpop.trf.xlu0
      %v4986 = vpop.trf.xlu0
      %v4987 = vpop.trf.xlu0
      %v4988 = vpop.trf.xlu0
      %v4989 = vpop.trf.xlu0
      %4990 = vxpose.xlu0.b32.start [1/16] %v4759, 128
      %4991 = vxpose.xlu0.b32.cont [2/16] %v4760, 128
      %4992 = vxpose.xlu0.b32.cont [3/16] %v4761, 128
      %4993 = vxpose.xlu0.b32.cont [4/16] %v4762, 128
      %4994 = vxpose.xlu0.b32.cont [5/16] %v4763, 128
      %4995 = vxpose.xlu0.b32.cont [6/16] %v4764, 128
      %4996 = vxpose.xlu0.b32.cont [7/16] %v4765, 128
      %4997 = vxpose.xlu0.b32.cont [8/16] %v4766, 128
      %4998 = vxpose.xlu0.b32.cont [9/16] %v4767, 128
      %4999 = vxpose.xlu0.b32.cont [10/16] %v4768, 128
      %5000 = vxpose.xlu0.b32.cont [11/16] %v4769, 128
      %5001 = vxpose.xlu0.b32.cont [12/16] %v4770, 128
      %5002 = vxpose.xlu0.b32.cont [13/16] %v4771, 128
      %5003 = vxpose.xlu0.b32.cont [14/16] %v4772, 128
      %5004 = vxpose.xlu0.b32.cont [15/16] %v4773, 128
      %5005 = vxpose.xlu0.b32.end [16/16] %v4774, 128
      %v5006 = vpop.trf.xlu0
      %v5007 = vpop.trf.xlu0
      %v5008 = vpop.trf.xlu0
      %v5009 = vpop.trf.xlu0
      %v5010 = vpop.trf.xlu0
      %v5011 = vpop.trf.xlu0
      %v5012 = vpop.trf.xlu0
      %v5013 = vpop.trf.xlu0
      %v5014 = vpop.trf.xlu0
      %v5015 = vpop.trf.xlu0
      %v5016 = vpop.trf.xlu0
      %v5017 = vpop.trf.xlu0
      %v5018 = vpop.trf.xlu0
      %v5019 = vpop.trf.xlu0
      %v5020 = vpop.trf.xlu0
      %v5021 = vpop.trf.xlu0
      %v5022 = vpack.c.bf16 %v4974, %v4974
      %v5023 = vpack.c.bf16 %v5006, %v5006
      %v5026 = vunpack.c.l.b16 %v5022
      %v5027 = vunpack.c.l.b16 %v5023
      %v5028 = vpack.c.b16 %v5027, %v5026
      %5030 = vst [vmem:[%s199] sm:$0xff] %v5028
      %s5031 = smul.u32 2, %s20
      %p5032 = scmp.lt.s32.totalorder %s19, 1
      %s5033 = scalar_select %p5032, %s19, 1
      %p5034 = scmp.lt.s32.totalorder %s5031, 1
      %s5035 = scalar_select %p5034, %s5031, 1
      %s5036 = smul.addr %s5033, 2
      %s5037 = sadd.s32 %s5035, %s5036
      %s5038 = smul.addr %s5037, 4
      %s5039 = scalar_lea.vmem %s2, %s5038
      %p5040 = scmp.lt.s32.totalorder %s19, 1
      %s5041 = scalar_select %p5040, %s19, 1
      %s5042 = smul.addr %s5041, 2
      %s5043 = scalar_lea.vmem %s3, %s5042
      // Predicated region
      $region33: #{norm_act_conv_transpose.2} parent=27 // pred_check
        %p5044 = pneg %p94
      $region34: #{norm_act_conv_transpose.2} parent=27 // pred_check_branch
        %5046 = sbr.rel (%p5044) target = $region36
      $region35: #{norm_act_conv_transpose.2} parent=27 // pred_region
        %s5047 = smul.u32 2, %s20
      $region36: #{norm_act_conv_transpose.2} parent=27 // pred_fallthru
        _
      // Predicated region
      $region37: #{norm_act_conv_transpose.2} parent=27 // pred_check
        %p5048 = pneg %p120
      $region38: #{norm_act_conv_transpose.2} parent=27 // pred_check_branch
        %5050 = sbr.rel (%p5048) target = $region40
      $region39: #{norm_act_conv_transpose.2} parent=27 // pred_region
        _
      $region40: #{norm_act_conv_transpose.2} parent=27 // pred_fallthru
        _
    $region28: #{norm_act_conv_transpose.2} parent=5 // pred_fallthru
      _
    %p5051 = scmp.le.s32.totalorder 2, %s10
    // Predicated region
    $region41: #{norm_act_conv_transpose.2} parent=5 // pred_check
      %p5052 = pneg %p5051
    $region42: #{norm_act_conv_transpose.2} parent=5 // pred_check_branch
      %5054 = sbr.rel (%p5052) target = $region44
    $region43: #{norm_act_conv_transpose.2} parent=5 // pred_region
      %s5055 = ssub.s32 %s10, 2
      // Predicated region
      $region45: #{norm_act_conv_transpose.2} parent=43 // pred_check
        %p5056 = pneg %p100
      $region46: #{norm_act_conv_transpose.2} parent=43 // pred_check_branch
        %5058 = sbr.rel (%p5056) target = $region48
      $region47: #{norm_act_conv_transpose.2} parent=43 // pred_region
        %s5059 = smul.u32 2, %s22
        %p5060 = scmp.lt.s32.totalorder %s21, 1
        %s5061 = scalar_select %p5060, %s21, 1
        %p5062 = scmp.lt.s32.totalorder %s5059, 1
        %s5063 = scalar_select %p5062, %s5059, 1
        %s5064 = smul.addr %s5061, 2
        %s5065 = sadd.s32 %s5063, %s5064
        %s5066 = smul.addr %s5065, 4
        %s5067 = scalar_lea.vmem %s2, %s5066
      $region48: #{norm_act_conv_transpose.2} parent=43 // pred_fallthru
        _
      // Predicated region
      $region49: #{norm_act_conv_transpose.2} parent=43 // pred_check
        %p5068 = pneg %p126
      $region50: #{norm_act_conv_transpose.2} parent=43 // pred_check_branch
        %5070 = sbr.rel (%p5068) target = $region52
      $region51: #{norm_act_conv_transpose.2} parent=43 // pred_region
        %p5071 = scmp.lt.s32.totalorder %s21, 1
        %s5072 = scalar_select %p5071, %s21, 1
        %s5073 = smul.addr %s5072, 2
        %s5074 = scalar_lea.vmem %s3, %s5073
      $region52: #{norm_act_conv_transpose.2} parent=43 // pred_fallthru
        _
    $region44: #{norm_act_conv_transpose.2} parent=5 // pred_fallthru
      _
  $region6: #{norm_act_conv_transpose.2} parent=0 // loop_footer
    %s14 = sadd.s32 1, %s10
  $region7: #{norm_act_conv_transpose.2} parent=0 // loop_footer_branch
    %9 = sbr.rel target = $region3
  $region8: #{norm_act_conv_transpose.2} parent=0 // loop_exit
    _

</llo_original>
